<compile_context>
chip_gen: v6e
topology: v6e:2x2x1
jax: 0.10.0
libtpu: 0.0.40
codegen_flags: <defaults>
</compile_context>

<pallas_src>
import functools

import jax
import jax.numpy as jnp
from jax.experimental import pallas as pl
from jax.experimental.pallas import tpu as pltpu

LEAKY_SLOPE = 0.01                 # F.leaky_relu default negative_slope
BN_EPS = 1e-5
TM_MAX = 1024                      # max row (M) tile, budget permitting
VMEM_LIMIT = 32 * 1024 * 1024      # explicit scoped-VMEM limit (all gens OK)
WS_BUDGET = 20 * 1024 * 1024       # per-call double-buffered working-set cap


def _pad_to(x, m):
    return ((x + m - 1) // m) * m


def _lane_pack_factor(K, cout):
    """Rows packed per output row so the stored lane dim reaches 128."""
    if cout >= 128 or 128 % cout != 0:
        return 1
    g = 128 // cout
    # keep the block-diagonal weight copy small
    while g > 1 and (g * K) * (g * cout) * 2 > (4 << 20):
        g //= 2
    return g


def _row_tiling(M, K, cout, g, out_bytes=2):
    """Largest row tile (multiple of 8*g) fitting the VMEM budget, >=2 blocks."""
    base = 8 * g
    tm_cap = TM_MAX
    if M >= 2 * base:                       # feed both v7x TensorCores
        tm_cap = min(tm_cap, _pad_to(-(-M // 2), base))
    tm = min(tm_cap, _pad_to(M, base))

    def ws(t):                              # double-buffered A + W + out
        return (2 * t * K * 2) + (2 * (g * K) * (g * cout) * 2) \
            + (2 * t * cout * out_bytes)

    while tm > base and ws(tm) > WS_BUDGET:
        tm = _pad_to(tm // 2, base)
    Mp = _pad_to(M, tm)
    return tm, Mp


def _block_diag(w, g):
    """[K, C] -> block-diagonal [g*K, g*C] (lane-dense packed GEMM weight)."""
    if g == 1:
        return w
    K, c = w.shape
    out = jnp.zeros((g * K, g * c), w.dtype)
    for q in range(g):
        out = out.at[q * K:(q + 1) * K, q * c:(q + 1) * c].set(w)
    return out


def _apply_act(y, act):
    if act == "leaky":
        return jnp.where(y >= 0, y, LEAKY_SLOPE * y)
    if act == "sigmoid":
        return 1.0 / (1.0 + jnp.exp(-y))
    return y


# ----------------------------- Pallas kernels ------------------------------

def _conv_act_kernel(a_ref, b_ref, o_ref, *, act):
    """Fused conv-matmul + activation epilogue (layers without BatchNorm)."""
    y = jnp.dot(a_ref[...], b_ref[...], preferred_element_type=jnp.float32)
    o_ref[...] = _apply_act(y, act).astype(o_ref.dtype)


def _conv_stats_kernel(a_ref, b_ref, o_ref, stats_ref):
    """Conv-matmul + per-block per-channel sum / sum-of-squares partials.

    Stats are reduced from the f32 MXU accumulator before the bf16 cast, and
    written as two direct row stores (no concatenate in the epilogue).
    """
    y = jnp.dot(a_ref[...], b_ref[...], preferred_element_type=jnp.float32)
    stats_ref[:, 0:1, :] = jnp.sum(y, axis=0, keepdims=True)[None]
    stats_ref[:, 1:2, :] = jnp.sum(y * y, axis=0, keepdims=True)[None]
    o_ref[...] = y.astype(o_ref.dtype)


def _affine_leaky_kernel(x_ref, scale_ref, shift_ref, o_ref):
    """y = leaky_relu(x * scale + shift) in the packed-channel layout."""
    y = x_ref[...].astype(jnp.float32) * scale_ref[...] + shift_ref[...]
    o_ref[...] = jnp.where(y >= 0, y, LEAKY_SLOPE * y).astype(o_ref.dtype)


def _head_kernel(a_ref, w_ref, o_ref):
    """Final 4x4 valid conv (C_out=1): MXU dot against lane-padded weight + sigmoid."""
    z = jnp.dot(a_ref[...], w_ref[...], preferred_element_type=jnp.float32)
    o_ref[...] = 1.0 / (1.0 + jnp.exp(-z))


# ------------------------------- glue (JAX) --------------------------------

def im2col(x_nhwc, kh, kw, stride, pad):
    N, H, W, C = x_nhwc.shape
    xp = jnp.pad(x_nhwc, ((0, 0), (pad, pad), (pad, pad), (0, 0)))
    Ho = (H + 2 * pad - kh) // stride + 1
    Wo = (W + 2 * pad - kw) // stride + 1
    cols = []
    for i in range(kh):
        for j in range(kw):
            cols.append(xp[:, i:i + stride * Ho:stride,
                           j:j + stride * Wo:stride, :])
    p = jnp.stack(cols, axis=3)                    # [N, Ho, Wo, kh*kw, C]
    return p.reshape(N * Ho * Wo, kh * kw * C), N, Ho, Wo


def conv_block(x_nhwc, wmat, kh, kw, stride, pad, act="leaky", bn=None):
    """One Conv(+BN)+activation layer. x_nhwc: bf16; wmat: bf16 [K, C_out]."""
    K, cout = wmat.shape
    patches, N, Ho, Wo = im2col(x_nhwc, kh, kw, stride, pad)   # bf16 [M, K]
    M = patches.shape[0]

    g = _lane_pack_factor(K, cout)                  # lane-density packing
    tm, Mp = _row_tiling(M, K, cout, g)
    if Mp != M:
        patches = jnp.pad(patches, ((0, Mp - M), (0, 0)))
    nblk = Mp // tm
    rows, Kp, Cp = tm // g, g * K, g * cout

    a = patches.reshape(Mp // g, Kp)                # free row-major reinterp
    w = _block_diag(wmat, g)                        # bf16 [g*K, g*cout]
    params = pltpu.CompilerParams(dimension_semantics=("parallel",),
                                  vmem_limit_bytes=VMEM_LIMIT)

    if bn is None:
        y = pl.pallas_call(
            functools.partial(_conv_act_kernel, act=act),
            out_shape=jax.ShapeDtypeStruct((Mp // g, Cp), jnp.bfloat16),
            grid=(nblk,),
            in_specs=[pl.BlockSpec((rows, Kp), lambda i: (i, 0)),
                      pl.BlockSpec((Kp, Cp), lambda i: (0, 0))],
            out_specs=pl.BlockSpec((rows, Cp), lambda i: (i, 0)),
            compiler_params=params,
        )(a, w)
    else:
        gamma, beta = bn
        # Pass 1: matmul + per-block BN partial stats (bf16 intermediate,
        # zero-padded rows contribute 0 to the sums).
        y, stats = pl.pallas_call(
            _conv_stats_kernel,
            out_shape=(jax.ShapeDtypeStruct((Mp // g, Cp), jnp.bfloat16),
                       jax.ShapeDtypeStruct((nblk, 2, Cp), jnp.float32)),
            grid=(nblk,),
            in_specs=[pl.BlockSpec((rows, Kp), lambda i: (i, 0)),
                      pl.BlockSpec((Kp, Cp), lambda i: (0, 0))],
            out_specs=(pl.BlockSpec((rows, Cp), lambda i: (i, 0)),
                       pl.BlockSpec((1, 2, Cp), lambda i: (i, 0, 0))),
            compiler_params=params,
        )(a, w)

        # Tiny wrapper-side reduction over blocks and pack groups.
        tot = jnp.sum(stats.reshape(nblk, 2, g, cout), axis=(0, 2))  # [2, C]
        mean = tot[0] / M
        # NOTE: E[y^2]-E[y]^2 in f32; fine at DCGAN scales (mean ~ 0).
        var = tot[1] / M - mean * mean              # biased variance (PyTorch)
        scale = gamma / jnp.sqrt(var + BN_EPS)
        shift = beta - mean * scale
        scale_p = jnp.tile(scale.reshape(1, cout), (1, g)).astype(jnp.float32)
        shift_p = jnp.tile(shift.reshape(1, cout), (1, g)).astype(jnp.float32)

        # Pass 2: normalize + leaky_relu in the packed layout, bf16 output.
        y = pl.pallas_call(
            _affine_leaky_kernel,
            out_shape=jax.ShapeDtypeStruct((Mp // g, Cp), jnp.bfloat16),
            grid=(nblk,),
            in_specs=[pl.BlockSpec((rows, Cp), lambda i: (i, 0)),
                      pl.BlockSpec((1, Cp), lambda i: (0, 0)),
                      pl.BlockSpec((1, Cp), lambda i: (0, 0))],
            out_specs=pl.BlockSpec((rows, Cp), lambda i: (i, 0)),
            compiler_params=params,
        )(y, scale_p, shift_p)

    y = y.reshape(Mp, cout)[:M]                     # free unpack + row slice
    return y.reshape(N, Ho, Wo, cout)


def final_conv_sigmoid(x_nhwc, wmat):
    """conv5: 4x4 valid conv over the full 4x4 map, C_out=1, + sigmoid.

    The kernel covers the whole spatial extent, so this is a per-sample dot
    product: flatten [N,4,4,C] -> [N, 16*C] (matching the (kh,kw,cin) weight
    packing) and run one small MXU matmul against the lane-padded [K,128]
    weight (column 0 is the real filter, the rest are zeros).
    """
    N, H, W, C = x_nhwc.shape
    K = H * W * C
    assert wmat.shape[0] == K, "conv5 expects a 4x4 feature map (64x64 input)"
    lanes = wmat.shape[1]
    a = x_nhwc.reshape(N, K)                        # bf16 [N, K]
    out = pl.pallas_call(
        _head_kernel,
        out_shape=jax.ShapeDtypeStruct((N, lanes), jnp.float32),
        in_specs=[pl.BlockSpec((N, K), lambda: (0, 0)),
                  pl.BlockSpec((K, lanes), lambda: (0, 0))],
        out_specs=pl.BlockSpec((N, lanes), lambda: (0, 0)),
        compiler_params=pltpu.CompilerParams(vmem_limit_bytes=VMEM_LIMIT),
    )(a, wmat)
    return out[:, :1].reshape(N, 1, 1, 1)


# ------------------------- weight packing (one-time) ------------------------

def pack_conv_weight(w_pt):
    """PyTorch [C_out, C_in, kh, kw] -> bf16 [kh*kw*C_in, C_out] (C_in fastest)."""
    cout, cin, kh, kw = w_pt.shape
    return (jnp.transpose(w_pt, (2, 3, 1, 0))
            .reshape(kh * kw * cin, cout).astype(jnp.bfloat16))


def pack_params(params):
    packed = {k: v.astype(jnp.float32) for k, v in params.items()
              if not k.startswith("w")}
    for k in ("w1", "w2", "w3", "w4"):
        packed[k] = pack_conv_weight(params[k])
    w5 = pack_conv_weight(params["w5"])             # [K, 1]
    packed["w5"] = jnp.pad(w5, ((0, 0), (0, 128 - w5.shape[1])))  # lane-dense
    return packed


# --------------------------------- forward ----------------------------------

@jax.jit
def discriminator_forward(x_nchw, packed):
    x = jnp.transpose(x_nchw, (0, 2, 3, 1)).astype(jnp.bfloat16)   # NHWC bf16
    x = conv_block(x, packed["w1"], 4, 4, 2, 1, "leaky")
    x = conv_block(x, packed["w2"], 4, 4, 2, 1, "leaky", (packed["g2"], packed["b2"]))
    x = conv_block(x, packed["w3"], 4, 4, 2, 1, "leaky", (packed["g3"], packed["b3"]))
    x = conv_block(x, packed["w4"], 4, 4, 2, 1, "leaky", (packed["g4"], packed["b4"]))
    x = final_conv_sigmoid(x, packed["w5"])
    return jnp.transpose(x, (0, 3, 1, 2)).astype(jnp.float32)      # NCHW [N,1,1,1]


# --------------------------- pure-JAX f32 reference --------------------------

def ref_forward(x_nchw, params):
    def conv(x, w, stride, pad):
        return jax.lax.conv_general_dilated(
            x, w, (stride, stride), [(pad, pad), (pad, pad)],
            dimension_numbers=("NCHW", "OIHW", "NCHW"))

    def bn(x, g, b):
        mean = x.mean(axis=(0, 2, 3), keepdims=True)
        var = x.var(axis=(0, 2, 3), keepdims=True)
        return ((x - mean) / jnp.sqrt(var + BN_EPS)
                * g.reshape(1, -1, 1, 1) + b.reshape(1, -1, 1, 1))

    lrelu = lambda v: jnp.where(v >= 0, v, LEAKY_SLOPE * v)
    x = lrelu(conv(x_nchw, params["w1"], 2, 1))
    x = lrelu(bn(conv(x, params["w2"], 2, 1), params["g2"], params["b2"]))
    x = lrelu(bn(conv(x, params["w3"], 2, 1), params["g3"], params["b3"]))
    x = lrelu(bn(conv(x, params["w4"], 2, 1), params["g4"], params["b4"]))
    x = jax.nn.sigmoid(conv(x, params["w5"], 1, 0))
    return x


# ---------------------------------- main ------------------------------------

def init_params(key, ndf, nc):
    # DCGAN-style init: conv ~ N(0, 0.02), BN gamma ~ N(1, 0.02), beta = 0.
    ks = jax.random.split(key, 8)
    return {
        "w1": 0.02 * jax.random.normal(ks[0], (ndf, nc, 4, 4), jnp.float32),
        "w2": 0.02 * jax.random.normal(ks[1], (ndf * 2, ndf, 4, 4), jnp.float32),
        "w3": 0.02 * jax.random.normal(ks[2], (ndf * 4, ndf * 2, 4, 4), jnp.float32),
        "w4": 0.02 * jax.random.normal(ks[3], (ndf * 8, ndf * 4, 4, 4), jnp.float32),
        "w5": 0.02 * jax.random.normal(ks[4], (1, ndf * 8, 4, 4), jnp.float32),
        "g2": 1.0 + 0.02 * jax.random.normal(ks[5], (ndf * 2,), jnp.float32),
        "g3": 1.0 + 0.02 * jax.random.normal(ks[6], (ndf * 4,), jnp.float32),
        "g4": 1.0 + 0.02 * jax.random.normal(ks[7], (ndf * 8,), jnp.float32),
        "b2": jnp.zeros((ndf * 2,), jnp.float32),
        "b3": jnp.zeros((ndf * 4,), jnp.float32),
        "b4": jnp.zeros((ndf * 8,), jnp.float32),
    }


if __name__ == "__main__":
    ndf, nc = 16, 3            # small feature count; spatial must be 64 for conv5
    N, H, W = 2, 64, 64
    key = jax.random.PRNGKey(0)
    kx, kp = jax.random.split(key)
    x = jax.random.normal(kx, (N, nc, H, W), jnp.float32)
    params = init_params(kp, ndf, nc)
    packed = pack_params(params)     # one-time repack + bf16 cast, outside jit

    out = discriminator_forward(x, packed)
    out = jax.block_until_ready(out)
    assert out.shape == (N, 1, 1, 1), out.shape

    ref = jax.block_until_ready(ref_forward(x, params))
    # bf16 matmul operands + bf16 intermediates (f32 accum) vs pure-f32 reference.
    assert jnp.allclose(out, ref, atol=4e-2, rtol=4e-2), (
        float(jnp.max(jnp.abs(out - ref))))

    print("KERNEL_OK")
</pallas_src>

<mosaic_0001>
module attributes {stable_mosaic.version = 11 : i64} {
  func.func @_conv_act_kernel(%arg0: i32, %arg1: memref<128x384xbf16, #tpu.memory_space<vmem>>, %arg2: memref<384x128xbf16, #tpu.memory_space<vmem>>, %arg3: memref<128x128xbf16, #tpu.memory_space<vmem>>) attributes {dimension_semantics = [#tpu.dimension_semantics<parallel>], iteration_bounds = array<i64: 2>, scalar_prefetch = 0 : i64, scratch_operands = 0 : i64, tpu.core_type = #tpu.core_type<tc>, window_params = [{transform_indices = @transform_0, window_bounds = array<i64: 128, 384>}, {pipeline_mode = #tpu.pipeline_mode<synchronous>, transform_indices = @transform_1, window_bounds = array<i64: 384, 128>}, {transform_indices = @transform_2, window_bounds = array<i64: 128, 128>}]} {
    %c0 = arith.constant 0 : index
    %c0_0 = arith.constant 0 : index
    %0 = vector.load %arg1[%c0, %c0_0] : memref<128x384xbf16, #tpu.memory_space<vmem>>, vector<128x384xbf16>
    %c0_1 = arith.constant 0 : index
    %c0_2 = arith.constant 0 : index
    %1 = vector.load %arg2[%c0_1, %c0_2] : memref<384x128xbf16, #tpu.memory_space<vmem>>, vector<384x128xbf16>
    %cst = arith.constant dense<0.000000e+00> : vector<128x128xf32>
    %2 = tpu.matmul %0, %1, %cst {dimension_numbers = #tpu.dot_dimension_numbers<[1], [0], [0], [1], [0, 0, 1, 1], [], []>} : vector<128x384xbf16>, vector<384x128xbf16>, vector<128x128xf32> -> vector<128x128xf32>
    %cst_3 = arith.constant 0.000000e+00 : f32
    %3 = vector.broadcast %cst_3 : f32 to vector<128x128xf32>
    %4 = arith.cmpf oge, %2, %3 : vector<128x128xf32>
    %cst_4 = arith.constant 0.00999999977 : f32
    %5 = vector.broadcast %cst_4 : f32 to vector<128x128xf32>
    %6 = arith.mulf %5, %2 : vector<128x128xf32>
    %7 = arith.select %4, %2, %6 : vector<128x128xi1>, vector<128x128xf32>
    %8 = arith.truncf %7 : vector<128x128xf32> to vector<128x128xbf16>
    %c0_5 = arith.constant 0 : index
    %c0_6 = arith.constant 0 : index
    %9 = vector.load %arg3[%c0_5, %c0_6] : memref<128x128xbf16, #tpu.memory_space<vmem>>, vector<128x128xbf16>
    tpu.vector_store %arg3[%c0_5, %c0_6], %8 {strides = array<i32>} : memref<128x128xbf16, #tpu.memory_space<vmem>>, vector<128x128xbf16>,
    return
  }
  func.func @transform_0(%arg0: i32) -> (i32, i32) {
    %c0_i32 = arith.constant 0 : i32
    %c0_i32_0 = arith.constant 0 : i32
    return %arg0, %c0_i32 : i32, i32
  }
  func.func @transform_1(%arg0: i32) -> (i32, i32) {
    %c0_i32 = arith.constant 0 : i32
    %c0_i32_0 = arith.constant 0 : i32
    %c0_i32_1 = arith.constant 0 : i32
    return %c0_i32, %c0_i32_0 : i32, i32
  }
  func.func @transform_2(%arg0: i32) -> (i32, i32) {
    %c0_i32 = arith.constant 0 : i32
    %c0_i32_0 = arith.constant 0 : i32
    return %arg0, %c0_i32 : i32, i32
  }
}

module attributes {stable_mosaic.version = 11 : i64} {
  func.func @_conv_stats_kernel(%arg0: i32, %arg1: memref<64x1024xbf16, #tpu.memory_space<vmem>>, %arg2: memref<1024x128xbf16, #tpu.memory_space<vmem>>, %arg3: memref<64x128xbf16, #tpu.memory_space<vmem>>, %arg4: memref<1x2x128xf32, #tpu.memory_space<vmem>>) attributes {dimension_semantics = [#tpu.dimension_semantics<parallel>], iteration_bounds = array<i64: 2>, scalar_prefetch = 0 : i64, scratch_operands = 0 : i64, tpu.core_type = #tpu.core_type<tc>, window_params = [{transform_indices = @transform_0, window_bounds = array<i64: 64, 1024>}, {pipeline_mode = #tpu.pipeline_mode<synchronous>, transform_indices = @transform_1, window_bounds = array<i64: 1024, 128>}, {transform_indices = @transform_2, window_bounds = array<i64: 64, 128>}, {transform_indices = @transform_3, window_bounds = array<i64: 1, 2, 128>}]} {
    %c0 = arith.constant 0 : index
    %c0_0 = arith.constant 0 : index
    %0 = vector.load %arg1[%c0, %c0_0] : memref<64x1024xbf16, #tpu.memory_space<vmem>>, vector<64x1024xbf16>
    %c0_1 = arith.constant 0 : index
    %c0_2 = arith.constant 0 : index
    %1 = vector.load %arg2[%c0_1, %c0_2] : memref<1024x128xbf16, #tpu.memory_space<vmem>>, vector<1024x128xbf16>
    %cst = arith.constant dense<0.000000e+00> : vector<64x128xf32>
    %2 = tpu.matmul %0, %1, %cst {dimension_numbers = #tpu.dot_dimension_numbers<[1], [0], [0], [1], [0, 0, 1, 1], [], []>} : vector<64x1024xbf16>, vector<1024x128xbf16>, vector<64x128xf32> -> vector<64x128xf32>
    %cst_3 = arith.constant dense<0.000000e+00> : vector<128xf32>
    %3 = vector.multi_reduction <add>, %2, %cst_3 [0] : vector<64x128xf32> to vector<128xf32>
    %4 = vector.shape_cast %3 : vector<128xf32> to vector<1x128xf32>
    %5 = vector.shape_cast %4 : vector<1x128xf32> to vector<1x1x128xf32>
    %c0_4 = arith.constant 0 : index
    %c0_5 = arith.constant 0 : index
    %c0_6 = arith.constant 0 : index
    %6 = vector.load %arg4[%c0_4, %c0_5, %c0_6] : memref<1x2x128xf32, #tpu.memory_space<vmem>>, vector<1x1x128xf32>
    tpu.vector_store %arg4[%c0_4, %c0_5, %c0_6], %5 {strides = array<i32>} : memref<1x2x128xf32, #tpu.memory_space<vmem>>, vector<1x1x128xf32>,
    %7 = arith.mulf %2, %2 : vector<64x128xf32>
    %cst_7 = arith.constant dense<0.000000e+00> : vector<128xf32>
    %8 = vector.multi_reduction <add>, %7, %cst_7 [0] : vector<64x128xf32> to vector<128xf32>
    %9 = vector.shape_cast %8 : vector<128xf32> to vector<1x128xf32>
    %10 = vector.shape_cast %9 : vector<1x128xf32> to vector<1x1x128xf32>
    %c0_8 = arith.constant 0 : index
    %c1 = arith.constant 1 : index
    %c0_9 = arith.constant 0 : index
    %11 = vector.load %arg4[%c0_8, %c1, %c0_9] : memref<1x2x128xf32, #tpu.memory_space<vmem>>, vector<1x1x128xf32>
    tpu.vector_store %arg4[%c0_8, %c1, %c0_9], %10 {strides = array<i32>} : memref<1x2x128xf32, #tpu.memory_space<vmem>>, vector<1x1x128xf32>,
    %12 = arith.truncf %2 : vector<64x128xf32> to vector<64x128xbf16>
    %c0_10 = arith.constant 0 : index
    %c0_11 = arith.constant 0 : index
    %13 = vector.load %arg3[%c0_10, %c0_11] : memref<64x128xbf16, #tpu.memory_space<vmem>>, vector<64x128xbf16>
    tpu.vector_store %arg3[%c0_10, %c0_11], %12 {strides = array<i32>} : memref<64x128xbf16, #tpu.memory_space<vmem>>, vector<64x128xbf16>,
    return
  }
  func.func @transform_0(%arg0: i32) -> (i32, i32) {
    %c0_i32 = arith.constant 0 : i32
    %c0_i32_0 = arith.constant 0 : i32
    return %arg0, %c0_i32 : i32, i32
  }
  func.func @transform_1(%arg0: i32) -> (i32, i32) {
    %c0_i32 = arith.constant 0 : i32
    %c0_i32_0 = arith.constant 0 : i32
    %c0_i32_1 = arith.constant 0 : i32
    return %c0_i32, %c0_i32_0 : i32, i32
  }
  func.func @transform_2(%arg0: i32) -> (i32, i32) {
    %c0_i32 = arith.constant 0 : i32
    %c0_i32_0 = arith.constant 0 : i32
    return %arg0, %c0_i32 : i32, i32
  }
  func.func @transform_3(%arg0: i32) -> (i32, i32, i32) {
    %c0_i32 = arith.constant 0 : i32
    %c0_i32_0 = arith.constant 0 : i32
    %c0_i32_1 = arith.constant 0 : i32
    return %arg0, %c0_i32, %c0_i32_0 : i32, i32, i32
  }
}

module attributes {stable_mosaic.version = 11 : i64} {
  func.func @_affine_leaky_kernel(%arg0: i32, %arg1: memref<64x128xbf16, #tpu.memory_space<vmem>>, %arg2: memref<1x128xf32, #tpu.memory_space<vmem>>, %arg3: memref<1x128xf32, #tpu.memory_space<vmem>>, %arg4: memref<64x128xbf16, #tpu.memory_space<vmem>>) attributes {dimension_semantics = [#tpu.dimension_semantics<parallel>], iteration_bounds = array<i64: 2>, scalar_prefetch = 0 : i64, scratch_operands = 0 : i64, tpu.core_type = #tpu.core_type<tc>, window_params = [{transform_indices = @transform_0, window_bounds = array<i64: 64, 128>}, {pipeline_mode = #tpu.pipeline_mode<synchronous>, transform_indices = @transform_1, window_bounds = array<i64: 1, 128>}, {pipeline_mode = #tpu.pipeline_mode<synchronous>, transform_indices = @transform_2, window_bounds = array<i64: 1, 128>}, {transform_indices = @transform_3, window_bounds = array<i64: 64, 128>}]} {
    %c0 = arith.constant 0 : index
    %c0_0 = arith.constant 0 : index
    %0 = vector.load %arg1[%c0, %c0_0] : memref<64x128xbf16, #tpu.memory_space<vmem>>, vector<64x128xbf16>
    %1 = arith.extf %0 : vector<64x128xbf16> to vector<64x128xf32>
    %c0_1 = arith.constant 0 : index
    %c0_2 = arith.constant 0 : index
    %2 = vector.load %arg2[%c0_1, %c0_2] : memref<1x128xf32, #tpu.memory_space<vmem>>, vector<1x128xf32>
    %3 = vector.broadcast %2 : vector<1x128xf32> to vector<64x128xf32>
    %4 = arith.mulf %1, %3 : vector<64x128xf32>
    %c0_3 = arith.constant 0 : index
    %c0_4 = arith.constant 0 : index
    %5 = vector.load %arg3[%c0_3, %c0_4] : memref<1x128xf32, #tpu.memory_space<vmem>>, vector<1x128xf32>
    %6 = vector.broadcast %5 : vector<1x128xf32> to vector<64x128xf32>
    %7 = arith.addf %4, %6 : vector<64x128xf32>
    %cst = arith.constant 0.000000e+00 : f32
    %8 = vector.broadcast %cst : f32 to vector<64x128xf32>
    %9 = arith.cmpf oge, %7, %8 : vector<64x128xf32>
    %cst_5 = arith.constant 0.00999999977 : f32
    %10 = vector.broadcast %cst_5 : f32 to vector<64x128xf32>
    %11 = arith.mulf %10, %7 : vector<64x128xf32>
    %12 = arith.select %9, %7, %11 : vector<64x128xi1>, vector<64x128xf32>
    %13 = arith.truncf %12 : vector<64x128xf32> to vector<64x128xbf16>
    %c0_6 = arith.constant 0 : index
    %c0_7 = arith.constant 0 : index
    %14 = vector.load %arg4[%c0_6, %c0_7] : memref<64x128xbf16, #tpu.memory_space<vmem>>, vector<64x128xbf16>
    tpu.vector_store %arg4[%c0_6, %c0_7], %13 {strides = array<i32>} : memref<64x128xbf16, #tpu.memory_space<vmem>>, vector<64x128xbf16>,
    return
  }
  func.func @transform_0(%arg0: i32) -> (i32, i32) {
    %c0_i32 = arith.constant 0 : i32
    %c0_i32_0 = arith.constant 0 : i32
    return %arg0, %c0_i32 : i32, i32
  }
  func.func @transform_1(%arg0: i32) -> (i32, i32) {
    %c0_i32 = arith.constant 0 : i32
    %c0_i32_0 = arith.constant 0 : i32
    %c0_i32_1 = arith.constant 0 : i32
    return %c0_i32, %c0_i32_0 : i32, i32
  }
  func.func @transform_2(%arg0: i32) -> (i32, i32) {
    %c0_i32 = arith.constant 0 : i32
    %c0_i32_0 = arith.constant 0 : i32
    %c0_i32_1 = arith.constant 0 : i32
    return %c0_i32, %c0_i32_0 : i32, i32
  }
  func.func @transform_3(%arg0: i32) -> (i32, i32) {
    %c0_i32 = arith.constant 0 : i32
    %c0_i32_0 = arith.constant 0 : i32
    return %arg0, %c0_i32 : i32, i32
  }
}

module attributes {stable_mosaic.version = 11 : i64} {
  func.func @_conv_stats_kernel(%arg0: i32, %arg1: memref<32x1024xbf16, #tpu.memory_space<vmem>>, %arg2: memref<1024x128xbf16, #tpu.memory_space<vmem>>, %arg3: memref<32x128xbf16, #tpu.memory_space<vmem>>, %arg4: memref<1x2x128xf32, #tpu.memory_space<vmem>>) attributes {dimension_semantics = [#tpu.dimension_semantics<parallel>], iteration_bounds = array<i64: 2>, scalar_prefetch = 0 : i64, scratch_operands = 0 : i64, tpu.core_type = #tpu.core_type<tc>, window_params = [{transform_indices = @transform_0, window_bounds = array<i64: 32, 1024>}, {pipeline_mode = #tpu.pipeline_mode<synchronous>, transform_indices = @transform_1, window_bounds = array<i64: 1024, 128>}, {transform_indices = @transform_2, window_bounds = array<i64: 32, 128>}, {transform_indices = @transform_3, window_bounds = array<i64: 1, 2, 128>}]} {
    %c0 = arith.constant 0 : index
    %c0_0 = arith.constant 0 : index
    %0 = vector.load %arg1[%c0, %c0_0] : memref<32x1024xbf16, #tpu.memory_space<vmem>>, vector<32x1024xbf16>
    %c0_1 = arith.constant 0 : index
    %c0_2 = arith.constant 0 : index
    %1 = vector.load %arg2[%c0_1, %c0_2] : memref<1024x128xbf16, #tpu.memory_space<vmem>>, vector<1024x128xbf16>
    %cst = arith.constant dense<0.000000e+00> : vector<32x128xf32>
    %2 = tpu.matmul %0, %1, %cst {dimension_numbers = #tpu.dot_dimension_numbers<[1], [0], [0], [1], [0, 0, 1, 1], [], []>} : vector<32x1024xbf16>, vector<1024x128xbf16>, vector<32x128xf32> -> vector<32x128xf32>
    %cst_3 = arith.constant dense<0.000000e+00> : vector<128xf32>
    %3 = vector.multi_reduction <add>, %2, %cst_3 [0] : vector<32x128xf32> to vector<128xf32>
    %4 = vector.shape_cast %3 : vector<128xf32> to vector<1x128xf32>
    %5 = vector.shape_cast %4 : vector<1x128xf32> to vector<1x1x128xf32>
    %c0_4 = arith.constant 0 : index
    %c0_5 = arith.constant 0 : index
    %c0_6 = arith.constant 0 : index
    %6 = vector.load %arg4[%c0_4, %c0_5, %c0_6] : memref<1x2x128xf32, #tpu.memory_space<vmem>>, vector<1x1x128xf32>
    tpu.vector_store %arg4[%c0_4, %c0_5, %c0_6], %5 {strides = array<i32>} : memref<1x2x128xf32, #tpu.memory_space<vmem>>, vector<1x1x128xf32>,
    %7 = arith.mulf %2, %2 : vector<32x128xf32>
    %cst_7 = arith.constant dense<0.000000e+00> : vector<128xf32>
    %8 = vector.multi_reduction <add>, %7, %cst_7 [0] : vector<32x128xf32> to vector<128xf32>
    %9 = vector.shape_cast %8 : vector<128xf32> to vector<1x128xf32>
    %10 = vector.shape_cast %9 : vector<1x128xf32> to vector<1x1x128xf32>
    %c0_8 = arith.constant 0 : index
    %c1 = arith.constant 1 : index
    %c0_9 = arith.constant 0 : index
    %11 = vector.load %arg4[%c0_8, %c1, %c0_9] : memref<1x2x128xf32, #tpu.memory_space<vmem>>, vector<1x1x128xf32>
    tpu.vector_store %arg4[%c0_8, %c1, %c0_9], %10 {strides = array<i32>} : memref<1x2x128xf32, #tpu.memory_space<vmem>>, vector<1x1x128xf32>,
    %12 = arith.truncf %2 : vector<32x128xf32> to vector<32x128xbf16>
    %c0_10 = arith.constant 0 : index
    %c0_11 = arith.constant 0 : index
    %13 = vector.load %arg3[%c0_10, %c0_11] : memref<32x128xbf16, #tpu.memory_space<vmem>>, vector<32x128xbf16>
    tpu.vector_store %arg3[%c0_10, %c0_11], %12 {strides = array<i32>} : memref<32x128xbf16, #tpu.memory_space<vmem>>, vector<32x128xbf16>,
    return
  }
  func.func @transform_0(%arg0: i32) -> (i32, i32) {
    %c0_i32 = arith.constant 0 : i32
    %c0_i32_0 = arith.constant 0 : i32
    return %arg0, %c0_i32 : i32, i32
  }
  func.func @transform_1(%arg0: i32) -> (i32, i32) {
    %c0_i32 = arith.constant 0 : i32
    %c0_i32_0 = arith.constant 0 : i32
    %c0_i32_1 = arith.constant 0 : i32
    return %c0_i32, %c0_i32_0 : i32, i32
  }
  func.func @transform_2(%arg0: i32) -> (i32, i32) {
    %c0_i32 = arith.constant 0 : i32
    %c0_i32_0 = arith.constant 0 : i32
    return %arg0, %c0_i32 : i32, i32
  }
  func.func @transform_3(%arg0: i32) -> (i32, i32, i32) {
    %c0_i32 = arith.constant 0 : i32
    %c0_i32_0 = arith.constant 0 : i32
    %c0_i32_1 = arith.constant 0 : i32
    return %arg0, %c0_i32, %c0_i32_0 : i32, i32, i32
  }
}

module attributes {stable_mosaic.version = 11 : i64} {
  func.func @_affine_leaky_kernel(%arg0: i32, %arg1: memref<32x128xbf16, #tpu.memory_space<vmem>>, %arg2: memref<1x128xf32, #tpu.memory_space<vmem>>, %arg3: memref<1x128xf32, #tpu.memory_space<vmem>>, %arg4: memref<32x128xbf16, #tpu.memory_space<vmem>>) attributes {dimension_semantics = [#tpu.dimension_semantics<parallel>], iteration_bounds = array<i64: 2>, scalar_prefetch = 0 : i64, scratch_operands = 0 : i64, tpu.core_type = #tpu.core_type<tc>, window_params = [{transform_indices = @transform_0, window_bounds = array<i64: 32, 128>}, {pipeline_mode = #tpu.pipeline_mode<synchronous>, transform_indices = @transform_1, window_bounds = array<i64: 1, 128>}, {pipeline_mode = #tpu.pipeline_mode<synchronous>, transform_indices = @transform_2, window_bounds = array<i64: 1, 128>}, {transform_indices = @transform_3, window_bounds = array<i64: 32, 128>}]} {
    %c0 = arith.constant 0 : index
    %c0_0 = arith.constant 0 : index
    %0 = vector.load %arg1[%c0, %c0_0] : memref<32x128xbf16, #tpu.memory_space<vmem>>, vector<32x128xbf16>
    %1 = arith.extf %0 : vector<32x128xbf16> to vector<32x128xf32>
    %c0_1 = arith.constant 0 : index
    %c0_2 = arith.constant 0 : index
    %2 = vector.load %arg2[%c0_1, %c0_2] : memref<1x128xf32, #tpu.memory_space<vmem>>, vector<1x128xf32>
    %3 = vector.broadcast %2 : vector<1x128xf32> to vector<32x128xf32>
    %4 = arith.mulf %1, %3 : vector<32x128xf32>
    %c0_3 = arith.constant 0 : index
    %c0_4 = arith.constant 0 : index
    %5 = vector.load %arg3[%c0_3, %c0_4] : memref<1x128xf32, #tpu.memory_space<vmem>>, vector<1x128xf32>
    %6 = vector.broadcast %5 : vector<1x128xf32> to vector<32x128xf32>
    %7 = arith.addf %4, %6 : vector<32x128xf32>
    %cst = arith.constant 0.000000e+00 : f32
    %8 = vector.broadcast %cst : f32 to vector<32x128xf32>
    %9 = arith.cmpf oge, %7, %8 : vector<32x128xf32>
    %cst_5 = arith.constant 0.00999999977 : f32
    %10 = vector.broadcast %cst_5 : f32 to vector<32x128xf32>
    %11 = arith.mulf %10, %7 : vector<32x128xf32>
    %12 = arith.select %9, %7, %11 : vector<32x128xi1>, vector<32x128xf32>
    %13 = arith.truncf %12 : vector<32x128xf32> to vector<32x128xbf16>
    %c0_6 = arith.constant 0 : index
    %c0_7 = arith.constant 0 : index
    %14 = vector.load %arg4[%c0_6, %c0_7] : memref<32x128xbf16, #tpu.memory_space<vmem>>, vector<32x128xbf16>
    tpu.vector_store %arg4[%c0_6, %c0_7], %13 {strides = array<i32>} : memref<32x128xbf16, #tpu.memory_space<vmem>>, vector<32x128xbf16>,
    return
  }
  func.func @transform_0(%arg0: i32) -> (i32, i32) {
    %c0_i32 = arith.constant 0 : i32
    %c0_i32_0 = arith.constant 0 : i32
    return %arg0, %c0_i32 : i32, i32
  }
  func.func @transform_1(%arg0: i32) -> (i32, i32) {
    %c0_i32 = arith.constant 0 : i32
    %c0_i32_0 = arith.constant 0 : i32
    %c0_i32_1 = arith.constant 0 : i32
    return %c0_i32, %c0_i32_0 : i32, i32
  }
  func.func @transform_2(%arg0: i32) -> (i32, i32) {
    %c0_i32 = arith.constant 0 : i32
    %c0_i32_0 = arith.constant 0 : i32
    %c0_i32_1 = arith.constant 0 : i32
    return %c0_i32, %c0_i32_0 : i32, i32
  }
  func.func @transform_3(%arg0: i32) -> (i32, i32) {
    %c0_i32 = arith.constant 0 : i32
    %c0_i32_0 = arith.constant 0 : i32
    return %arg0, %c0_i32 : i32, i32
  }
}

module attributes {stable_mosaic.version = 11 : i64} {
  func.func @_conv_stats_kernel(%arg0: i32, %arg1: memref<16x1024xbf16, #tpu.memory_space<vmem>>, %arg2: memref<1024x128xbf16, #tpu.memory_space<vmem>>, %arg3: memref<16x128xbf16, #tpu.memory_space<vmem>>, %arg4: memref<1x2x128xf32, #tpu.memory_space<vmem>>) attributes {dimension_semantics = [#tpu.dimension_semantics<parallel>], iteration_bounds = array<i64: 2>, scalar_prefetch = 0 : i64, scratch_operands = 0 : i64, tpu.core_type = #tpu.core_type<tc>, window_params = [{transform_indices = @transform_0, window_bounds = array<i64: 16, 1024>}, {pipeline_mode = #tpu.pipeline_mode<synchronous>, transform_indices = @transform_1, window_bounds = array<i64: 1024, 128>}, {transform_indices = @transform_2, window_bounds = array<i64: 16, 128>}, {transform_indices = @transform_3, window_bounds = array<i64: 1, 2, 128>}]} {
    %c0 = arith.constant 0 : index
    %c0_0 = arith.constant 0 : index
    %0 = vector.load %arg1[%c0, %c0_0] : memref<16x1024xbf16, #tpu.memory_space<vmem>>, vector<16x1024xbf16>
    %c0_1 = arith.constant 0 : index
    %c0_2 = arith.constant 0 : index
    %1 = vector.load %arg2[%c0_1, %c0_2] : memref<1024x128xbf16, #tpu.memory_space<vmem>>, vector<1024x128xbf16>
    %cst = arith.constant dense<0.000000e+00> : vector<16x128xf32>
    %2 = tpu.matmul %0, %1, %cst {dimension_numbers = #tpu.dot_dimension_numbers<[1], [0], [0], [1], [0, 0, 1, 1], [], []>} : vector<16x1024xbf16>, vector<1024x128xbf16>, vector<16x128xf32> -> vector<16x128xf32>
    %cst_3 = arith.constant dense<0.000000e+00> : vector<128xf32>
    %3 = vector.multi_reduction <add>, %2, %cst_3 [0] : vector<16x128xf32> to vector<128xf32>
    %4 = vector.shape_cast %3 : vector<128xf32> to vector<1x128xf32>
    %5 = vector.shape_cast %4 : vector<1x128xf32> to vector<1x1x128xf32>
    %c0_4 = arith.constant 0 : index
    %c0_5 = arith.constant 0 : index
    %c0_6 = arith.constant 0 : index
    %6 = vector.load %arg4[%c0_4, %c0_5, %c0_6] : memref<1x2x128xf32, #tpu.memory_space<vmem>>, vector<1x1x128xf32>
    tpu.vector_store %arg4[%c0_4, %c0_5, %c0_6], %5 {strides = array<i32>} : memref<1x2x128xf32, #tpu.memory_space<vmem>>, vector<1x1x128xf32>,
    %7 = arith.mulf %2, %2 : vector<16x128xf32>
    %cst_7 = arith.constant dense<0.000000e+00> : vector<128xf32>
    %8 = vector.multi_reduction <add>, %7, %cst_7 [0] : vector<16x128xf32> to vector<128xf32>
    %9 = vector.shape_cast %8 : vector<128xf32> to vector<1x128xf32>
    %10 = vector.shape_cast %9 : vector<1x128xf32> to vector<1x1x128xf32>
    %c0_8 = arith.constant 0 : index
    %c1 = arith.constant 1 : index
    %c0_9 = arith.constant 0 : index
    %11 = vector.load %arg4[%c0_8, %c1, %c0_9] : memref<1x2x128xf32, #tpu.memory_space<vmem>>, vector<1x1x128xf32>
    tpu.vector_store %arg4[%c0_8, %c1, %c0_9], %10 {strides = array<i32>} : memref<1x2x128xf32, #tpu.memory_space<vmem>>, vector<1x1x128xf32>,
    %12 = arith.truncf %2 : vector<16x128xf32> to vector<16x128xbf16>
    %c0_10 = arith.constant 0 : index
    %c0_11 = arith.constant 0 : index
    %13 = vector.load %arg3[%c0_10, %c0_11] : memref<16x128xbf16, #tpu.memory_space<vmem>>, vector<16x128xbf16>
    tpu.vector_store %arg3[%c0_10, %c0_11], %12 {strides = array<i32>} : memref<16x128xbf16, #tpu.memory_space<vmem>>, vector<16x128xbf16>,
    return
  }
  func.func @transform_0(%arg0: i32) -> (i32, i32) {
    %c0_i32 = arith.constant 0 : i32
    %c0_i32_0 = arith.constant 0 : i32
    return %arg0, %c0_i32 : i32, i32
  }
  func.func @transform_1(%arg0: i32) -> (i32, i32) {
    %c0_i32 = arith.constant 0 : i32
    %c0_i32_0 = arith.constant 0 : i32
    %c0_i32_1 = arith.constant 0 : i32
    return %c0_i32, %c0_i32_0 : i32, i32
  }
  func.func @transform_2(%arg0: i32) -> (i32, i32) {
    %c0_i32 = arith.constant 0 : i32
    %c0_i32_0 = arith.constant 0 : i32
    return %arg0, %c0_i32 : i32, i32
  }
  func.func @transform_3(%arg0: i32) -> (i32, i32, i32) {
    %c0_i32 = arith.constant 0 : i32
    %c0_i32_0 = arith.constant 0 : i32
    %c0_i32_1 = arith.constant 0 : i32
    return %arg0, %c0_i32, %c0_i32_0 : i32, i32, i32
  }
}

module attributes {stable_mosaic.version = 11 : i64} {
  func.func @_affine_leaky_kernel(%arg0: i32, %arg1: memref<16x128xbf16, #tpu.memory_space<vmem>>, %arg2: memref<1x128xf32, #tpu.memory_space<vmem>>, %arg3: memref<1x128xf32, #tpu.memory_space<vmem>>, %arg4: memref<16x128xbf16, #tpu.memory_space<vmem>>) attributes {dimension_semantics = [#tpu.dimension_semantics<parallel>], iteration_bounds = array<i64: 2>, scalar_prefetch = 0 : i64, scratch_operands = 0 : i64, tpu.core_type = #tpu.core_type<tc>, window_params = [{transform_indices = @transform_0, window_bounds = array<i64: 16, 128>}, {pipeline_mode = #tpu.pipeline_mode<synchronous>, transform_indices = @transform_1, window_bounds = array<i64: 1, 128>}, {pipeline_mode = #tpu.pipeline_mode<synchronous>, transform_indices = @transform_2, window_bounds = array<i64: 1, 128>}, {transform_indices = @transform_3, window_bounds = array<i64: 16, 128>}]} {
    %c0 = arith.constant 0 : index
    %c0_0 = arith.constant 0 : index
    %0 = vector.load %arg1[%c0, %c0_0] : memref<16x128xbf16, #tpu.memory_space<vmem>>, vector<16x128xbf16>
    %1 = arith.extf %0 : vector<16x128xbf16> to vector<16x128xf32>
    %c0_1 = arith.constant 0 : index
    %c0_2 = arith.constant 0 : index
    %2 = vector.load %arg2[%c0_1, %c0_2] : memref<1x128xf32, #tpu.memory_space<vmem>>, vector<1x128xf32>
    %3 = vector.broadcast %2 : vector<1x128xf32> to vector<16x128xf32>
    %4 = arith.mulf %1, %3 : vector<16x128xf32>
    %c0_3 = arith.constant 0 : index
    %c0_4 = arith.constant 0 : index
    %5 = vector.load %arg3[%c0_3, %c0_4] : memref<1x128xf32, #tpu.memory_space<vmem>>, vector<1x128xf32>
    %6 = vector.broadcast %5 : vector<1x128xf32> to vector<16x128xf32>
    %7 = arith.addf %4, %6 : vector<16x128xf32>
    %cst = arith.constant 0.000000e+00 : f32
    %8 = vector.broadcast %cst : f32 to vector<16x128xf32>
    %9 = arith.cmpf oge, %7, %8 : vector<16x128xf32>
    %cst_5 = arith.constant 0.00999999977 : f32
    %10 = vector.broadcast %cst_5 : f32 to vector<16x128xf32>
    %11 = arith.mulf %10, %7 : vector<16x128xf32>
    %12 = arith.select %9, %7, %11 : vector<16x128xi1>, vector<16x128xf32>
    %13 = arith.truncf %12 : vector<16x128xf32> to vector<16x128xbf16>
    %c0_6 = arith.constant 0 : index
    %c0_7 = arith.constant 0 : index
    %14 = vector.load %arg4[%c0_6, %c0_7] : memref<16x128xbf16, #tpu.memory_space<vmem>>, vector<16x128xbf16>
    tpu.vector_store %arg4[%c0_6, %c0_7], %13 {strides = array<i32>} : memref<16x128xbf16, #tpu.memory_space<vmem>>, vector<16x128xbf16>,
    return
  }
  func.func @transform_0(%arg0: i32) -> (i32, i32) {
    %c0_i32 = arith.constant 0 : i32
    %c0_i32_0 = arith.constant 0 : i32
    return %arg0, %c0_i32 : i32, i32
  }
  func.func @transform_1(%arg0: i32) -> (i32, i32) {
    %c0_i32 = arith.constant 0 : i32
    %c0_i32_0 = arith.constant 0 : i32
    %c0_i32_1 = arith.constant 0 : i32
    return %c0_i32, %c0_i32_0 : i32, i32
  }
  func.func @transform_2(%arg0: i32) -> (i32, i32) {
    %c0_i32 = arith.constant 0 : i32
    %c0_i32_0 = arith.constant 0 : i32
    %c0_i32_1 = arith.constant 0 : i32
    return %c0_i32, %c0_i32_0 : i32, i32
  }
  func.func @transform_3(%arg0: i32) -> (i32, i32) {
    %c0_i32 = arith.constant 0 : i32
    %c0_i32_0 = arith.constant 0 : i32
    return %arg0, %c0_i32 : i32, i32
  }
}

module attributes {stable_mosaic.version = 11 : i64} {
  func.func @_head_kernel(%arg0: memref<2x2048xbf16, #tpu.memory_space<vmem>>, %arg1: memref<2048x128xbf16, #tpu.memory_space<vmem>>, %arg2: memref<2x128xf32, #tpu.memory_space<vmem>>) attributes {dimension_semantics = [], scalar_prefetch = 0 : i64, scratch_operands = 0 : i64, tpu.core_type = #tpu.core_type<tc>} {
    %c0 = arith.constant 0 : index
    %c0_0 = arith.constant 0 : index
    %0 = vector.load %arg0[%c0, %c0_0] : memref<2x2048xbf16, #tpu.memory_space<vmem>>, vector<2x2048xbf16>
    %c0_1 = arith.constant 0 : index
    %c0_2 = arith.constant 0 : index
    %1 = vector.load %arg1[%c0_1, %c0_2] : memref<2048x128xbf16, #tpu.memory_space<vmem>>, vector<2048x128xbf16>
    %cst = arith.constant dense<0.000000e+00> : vector<2x128xf32>
    %2 = tpu.matmul %0, %1, %cst {dimension_numbers = #tpu.dot_dimension_numbers<[1], [0], [0], [1], [0, 0, 1, 1], [], []>} : vector<2x2048xbf16>, vector<2048x128xbf16>, vector<2x128xf32> -> vector<2x128xf32>
    %cst_3 = arith.constant 0.000000e+00 : f32
    %3 = vector.broadcast %cst_3 : f32 to vector<2x128xf32>
    %4 = arith.subf %3, %2 : vector<2x128xf32>
    %5 = math.exp %4 : vector<2x128xf32>
    %cst_4 = arith.constant 1.000000e+00 : f32
    %6 = vector.broadcast %cst_4 : f32 to vector<2x128xf32>
    %7 = arith.addf %6, %5 : vector<2x128xf32>
    %cst_5 = arith.constant 1.000000e+00 : f32
    %8 = vector.broadcast %cst_5 : f32 to vector<2x128xf32>
    %9 = arith.divf %8, %7 : vector<2x128xf32>
    %c0_6 = arith.constant 0 : index
    %c0_7 = arith.constant 0 : index
    %10 = vector.load %arg2[%c0_6, %c0_7] : memref<2x128xf32, #tpu.memory_space<vmem>>, vector<2x128xf32>
    tpu.vector_store %arg2[%c0_6, %c0_7], %9 {strides = array<i32>} : memref<2x128xf32, #tpu.memory_space<vmem>>, vector<2x128xf32>,
    return
  }
}

</mosaic_0001>

<llo_original>
// kernel: discriminator_forward.8
$region0: #{discriminator_forward.8}
  #allocation0 [shape = 'u32[]', space=smem, size = 0x4, offset = 0x4, fixed_abs, tag = 'smem constant byte address 0x4 - core index']
  #allocation1 [shape = 'u32[144,128]{1,0:T(1,128)}', space=vmem, size = 0x12000, scoped, tag = 'internal scratch']
  %s0 = inlined_call_operand.vmem [shape: bf16[256,384], index: 0, kind: input, shape index: {}]
  %s1 = inlined_call_operand.vmem [shape: bf16[384,128], index: 1, kind: input, shape index: {}]
  %s2 = inlined_call_operand.vmem [shape: bf16[256,128], index: 2, kind: output, shape index: {}]
  %s3 = sld [smem:[#allocation0]]
  $region41: #{discriminator_forward.8} parent=0
    _
  %s5 = ssub.s32 1, %s3
  %s6 = scalar_select 0, %s5, %s3
  loop: start=0, step=1, limit=4
  $region2: #{discriminator_forward.8} parent=0 // loop_pre_header
    _
  $region3: #{discriminator_forward.8} parent=0 // loop_header
    %s8 = sphi 0, %s12
    %p9 = scmp.ge.s32.totalorder %s8, 4
    %s18 = sphi 0, %s20
    %s21 = sphi 0, %s18
    %s22 = sphi 0, %s21
    %s38 = sphi 0, %s22
    %s42 = sphi 0, %s42
    %s44 = sphi 0, %s42
    %s45 = sphi 0, %s44
    %s59 = sphi 0, %s45
    %s65 = sphi 0, %s67
    %s68 = sphi 0, %s65
    %s69 = sphi 0, %s68
    %s85 = sphi 0, %s69
  $region4: #{discriminator_forward.8} parent=0 // loop_header_branch
    %11 = sbr.rel (%p9) target = $region8
  $region5: #{discriminator_forward.8} parent=0 // loop_body
    %s13 = ssub.s32 %s8, 1
    %s14 = ssub.s32 %s8, 2
    %s15 = sadd.s32 %s8, 1
    %s16 = ssub.s32 %s8, %s15
    %p17 = scmp.eq.s32.totalorder %s16, 0
    %s19 = sadd.s32 %s18, 1
    %s20 = scalar_select %p17, %s18, %s19
    %p23 = pneg %p17
    %p24 = scmp.eq.s32.totalorder %s8, 1
    %p25 = por %p23, %p24
    %p26 = scmp.ne.s32.totalorder %s18, %s21
    %p27 = scmp.eq.s32.totalorder %s8, 0
    %p28 = por %p26, %p27
    %p29 = scmp.ne.s32.totalorder %s18, %s21
    %p30 = scmp.eq.s32.totalorder %s13, 1
    %p31 = por %p29, %p30
    %p32 = scmp.ne.s32.totalorder %s21, %s22
    %p33 = scmp.eq.s32.totalorder %s13, 0
    %p34 = por %p32, %p33
    %p35 = scmp.ne.s32.totalorder %s21, %s22
    %p36 = scmp.eq.s32.totalorder %s14, 1
    %p37 = por %p35, %p36
    %p39 = scmp.ne.s32.totalorder %s22, %s38
    %p40 = scmp.eq.s32.totalorder %s14, 0
    %p41 = por %p39, %p40
    %s43 = sadd.s32 %s42, 1
    %p46 = scmp.eq.s32.totalorder %s8, 1
    %p47 = scmp.ne.s32.totalorder %s42, %s44
    %p48 = scmp.eq.s32.totalorder %s8, 0
    %p49 = por %p47, %p48
    %p50 = scmp.ne.s32.totalorder %s42, %s44
    %p51 = scmp.eq.s32.totalorder %s13, 1
    %p52 = por %p50, %p51
    %p53 = scmp.ne.s32.totalorder %s44, %s45
    %p54 = scmp.eq.s32.totalorder %s13, 0
    %p55 = por %p53, %p54
    %p56 = scmp.ne.s32.totalorder %s44, %s45
    %p57 = scmp.eq.s32.totalorder %s14, 1
    %p58 = por %p56, %p57
    %p60 = scmp.ne.s32.totalorder %s45, %s59
    %p61 = scmp.eq.s32.totalorder %s14, 0
    %p62 = por %p60, %p61
    %s63 = ssub.s32 %s8, %s15
    %p64 = scmp.eq.s32.totalorder %s63, 0
    %s66 = sadd.s32 %s65, 1
    %s67 = scalar_select %p64, %s65, %s66
    %p70 = pneg %p64
    %p71 = scmp.eq.s32.totalorder %s8, 1
    %p72 = por %p70, %p71
    %p73 = scmp.ne.s32.totalorder %s65, %s68
    %p74 = scmp.eq.s32.totalorder %s8, 0
    %p75 = por %p73, %p74
    %p76 = scmp.ne.s32.totalorder %s65, %s68
    %p77 = scmp.eq.s32.totalorder %s13, 1
    %p78 = por %p76, %p77
    %p79 = scmp.ne.s32.totalorder %s68, %s69
    %p80 = scmp.eq.s32.totalorder %s13, 0
    %p81 = por %p79, %p80
    %p82 = scmp.ne.s32.totalorder %s68, %s69
    %p83 = scmp.eq.s32.totalorder %s14, 1
    %p84 = por %p82, %p83
    %p86 = scmp.ne.s32.totalorder %s69, %s85
    %p87 = scmp.eq.s32.totalorder %s14, 0
    %p88 = por %p86, %p87
    %p89 = scmp.le.s32.totalorder 1, %s8
    %p90 = scmp.lt.s32.totalorder %s8, 3
    %p91 = pnand %p89, %p90
    %p92 = pneg %p91
    // Predicated region
    $region9: #{discriminator_forward.8} parent=5 // pred_check
      _
    $region10: #{discriminator_forward.8} parent=5 // pred_check_branch
      %94 = sbr.rel (%p91) target = $region12
    $region11: #{discriminator_forward.8} parent=5 // pred_region
      %s95 = ssub.s32 %s8, 1
      // Predicated region
      $region13: #{discriminator_forward.8} parent=11 // pred_check
        %p96 = pneg %p55
      $region14: #{discriminator_forward.8} parent=11 // pred_check_branch
        %98 = sbr.rel (%p96) target = $region16
      $region15: #{discriminator_forward.8} parent=11 // pred_region
        _
      $region16: #{discriminator_forward.8} parent=11 // pred_fallthru
        _
    $region12: #{discriminator_forward.8} parent=5 // pred_fallthru
      _
    %p99 = scmp.lt.s32.totalorder %s8, 2
    // Predicated region
    $region17: #{discriminator_forward.8} parent=5 // pred_check
      %p100 = pneg %p99
    $region18: #{discriminator_forward.8} parent=5 // pred_check_branch
      %102 = sbr.rel (%p100) target = $region20
    $region19: #{discriminator_forward.8} parent=5 // pred_region
      // Predicated region
      $region21: #{discriminator_forward.8} parent=19 // pred_check
        %p103 = pneg %p28
      $region22: #{discriminator_forward.8} parent=19 // pred_check_branch
        %105 = sbr.rel (%p103) target = $region24
      $region23: #{discriminator_forward.8} parent=19 // pred_region
        %s106 = smul.u32 16, %s8
        %p107 = scmp.lt.s32.totalorder %s106, 31
        %s108 = scalar_select %p107, %s106, 31
        %s109 = smul.addr %s108, 3
        %s110 = smul.addr %s109, 4
        %s111 = scalar_lea.vmem %s0, %s110
        %s112 = smul.u32 16, %s8
      $region24: #{discriminator_forward.8} parent=19 // pred_fallthru
        _
    $region20: #{discriminator_forward.8} parent=5 // pred_fallthru
      _
    %p113 = scmp.le.s32.totalorder 1, %s8
    %p114 = scmp.lt.s32.totalorder %s8, 3
    %p115 = pnand %p113, %p114
    %p116 = pneg %p115
    // Predicated region
    $region25: #{discriminator_forward.8} parent=5 // pred_check
      _
    $region26: #{discriminator_forward.8} parent=5 // pred_check_branch
      %118 = sbr.rel (%p115) target = $region28
    $region27: #{discriminator_forward.8} parent=5 // pred_region
      %s119 = ssub.s32 %s8, 1
      %s120 = smul.u32 16, %s13
      %p121 = scmp.lt.s32.totalorder %s120, 31
      %s122 = scalar_select %p121, %s120, 31
      %s123 = smul.addr %s122, 3
      %s124 = smul.addr %s123, 4
      %s125 = scalar_lea.vmem %s0, %s124
      %p126 = pneg %p34
      %p127 = pneg %p31
      %p128 = pneg %p55
      %p129 = pneg %p52
      %p130 = pneg %p81
      %p131 = pneg %p78
      %s132 = smul.u32 16, %s13
      %p133 = scmp.lt.s32.totalorder %s132, 31
      %s134 = scalar_select %p133, %s132, 31
      %s135 = smul.addr %s134, 4
      %s136 = scalar_lea.vmem %s2, %s135
      %s137 = smul.u32 16, %s13
      %p138 = scmp.lt.s32.totalorder %s137, 31
      %s139 = scalar_select %p138, %s137, 31
      %s140 = smul.addr %s139, 3
      %s141 = smul.addr %s140, 4
      %s142 = scalar_lea.vmem %s0, %s141
      %s143 = smul.u32 16, %s13
      %s144 = smul.u32 16, %s13
      %p145 = scmp.lt.s32.totalorder %s144, 31
      %s146 = scalar_select %p145, %s144, 31
      %s147 = smul.addr %s146, 4
      %s148 = scalar_lea.vmem %s2, %s147
      %s149 = smul.u32 16, %s13
      %v151 = vld [vmem:[%s142] sm:$0xff]
      %v152 = vld [vmem:[%s142 + $0x8] sm:$0xf]
      %v153 = vld [vmem:[%s142 + $0xc] sm:$0xff]
      %v154 = vld [vmem:[%s142 + $0x14] sm:$0xf]
      %v155 = vld [vmem:[%s142 + $0x18] sm:$0xff]
      %v156 = vld [vmem:[%s142 + $0x20] sm:$0xf]
      %v157 = vld [vmem:[%s142 + $0x24] sm:$0xff]
      %v158 = vld [vmem:[%s142 + $0x2c] sm:$0xf]
      %v159 = vld [vmem:[%s142 + $0x30] sm:$0xff]
      %v160 = vld [vmem:[%s142 + $0x38] sm:$0xf]
      %v161 = vld [vmem:[%s142 + $0x3c] sm:$0xff]
      %v162 = vld [vmem:[%s142 + $0x44] sm:$0xf]
      %v163 = vld [vmem:[%s142 + $0x48] sm:$0xff]
      %v164 = vld [vmem:[%s142 + $0x50] sm:$0xf]
      %v165 = vld [vmem:[%s142 + $0x54] sm:$0xff]
      %v166 = vld [vmem:[%s142 + $0x5c] sm:$0xf]
      %v167 = vld [vmem:[%s142 + $0x60] sm:$0xff]
      %v168 = vld [vmem:[%s142 + $0x68] sm:$0xf]
      %v169 = vld [vmem:[%s142 + $0x6c] sm:$0xff]
      %v170 = vld [vmem:[%s142 + $0x74] sm:$0xf]
      %v171 = vld [vmem:[%s142 + $0x78] sm:$0xff]
      %v172 = vld [vmem:[%s142 + $0x80] sm:$0xf]
      %v173 = vld [vmem:[%s142 + $0x84] sm:$0xff]
      %v174 = vld [vmem:[%s142 + $0x8c] sm:$0xf]
      %v175 = vld [vmem:[%s142 + $0x90] sm:$0xff]
      %v176 = vld [vmem:[%s142 + $0x98] sm:$0xf]
      %v177 = vld [vmem:[%s142 + $0x9c] sm:$0xff]
      %v178 = vld [vmem:[%s142 + $0xa4] sm:$0xf]
      %v179 = vld [vmem:[%s142 + $0xa8] sm:$0xff]
      %v180 = vld [vmem:[%s142 + $0xb0] sm:$0xf]
      %v181 = vld [vmem:[%s142 + $0xb4] sm:$0xff]
      %v182 = vld [vmem:[%s142 + $0xbc] sm:$0xf]
      %v183 = vld [vmem:[%s1] sm:$0xf]
      %v184 = vld [vmem:[%s1 + $0x4] sm:$0xf]
      %v185 = vld [vmem:[%s1 + $0x8] sm:$0xf]
      %v186 = vld [vmem:[%s1 + $0xc] sm:$0xf]
      %v187 = vld [vmem:[%s1 + $0x10] sm:$0xf]
      %v188 = vld [vmem:[%s1 + $0x14] sm:$0xf]
      %v189 = vld [vmem:[%s1 + $0x18] sm:$0xf]
      %v190 = vld [vmem:[%s1 + $0x1c] sm:$0xf]
      %v191 = vld [vmem:[%s1 + $0x20] sm:$0xf]
      %v192 = vld [vmem:[%s1 + $0x24] sm:$0xf]
      %v193 = vld [vmem:[%s1 + $0x28] sm:$0xf]
      %v194 = vld [vmem:[%s1 + $0x2c] sm:$0xf]
      %v195 = vld [vmem:[%s1 + $0x30] sm:$0xf]
      %v196 = vld [vmem:[%s1 + $0x34] sm:$0xf]
      %v197 = vld [vmem:[%s1 + $0x38] sm:$0xf]
      %v198 = vld [vmem:[%s1 + $0x3c] sm:$0xf]
      %v199 = vld [vmem:[%s1 + $0x40] sm:$0xf]
      %v200 = vld [vmem:[%s1 + $0x44] sm:$0xf]
      %v201 = vld [vmem:[%s1 + $0x48] sm:$0xf]
      %v202 = vld [vmem:[%s1 + $0x4c] sm:$0xf]
      %v203 = vld [vmem:[%s1 + $0x50] sm:$0xf]
      %v204 = vld [vmem:[%s1 + $0x54] sm:$0xf]
      %v205 = vld [vmem:[%s1 + $0x58] sm:$0xf]
      %v206 = vld [vmem:[%s1 + $0x5c] sm:$0xf]
      %v207 = vld [vmem:[%s1 + $0x60] sm:$0xf]
      %v208 = vld [vmem:[%s1 + $0x64] sm:$0xf]
      %v209 = vld [vmem:[%s1 + $0x68] sm:$0xf]
      %v210 = vld [vmem:[%s1 + $0x6c] sm:$0xf]
      %v211 = vld [vmem:[%s1 + $0x70] sm:$0xf]
      %v212 = vld [vmem:[%s1 + $0x74] sm:$0xf]
      %v213 = vld [vmem:[%s1 + $0x78] sm:$0xf]
      %v214 = vld [vmem:[%s1 + $0x7c] sm:$0xf]
      %v215 = vld [vmem:[%s1 + $0x80] sm:$0xf]
      %v216 = vld [vmem:[%s1 + $0x84] sm:$0xf]
      %v217 = vld [vmem:[%s1 + $0x88] sm:$0xf]
      %v218 = vld [vmem:[%s1 + $0x8c] sm:$0xf]
      %v219 = vld [vmem:[%s1 + $0x90] sm:$0xf]
      %v220 = vld [vmem:[%s1 + $0x94] sm:$0xf]
      %v221 = vld [vmem:[%s1 + $0x98] sm:$0xf]
      %v222 = vld [vmem:[%s1 + $0x9c] sm:$0xf]
      %v223 = vld [vmem:[%s1 + $0xa0] sm:$0xf]
      %v224 = vld [vmem:[%s1 + $0xa4] sm:$0xf]
      %v225 = vld [vmem:[%s1 + $0xa8] sm:$0xf]
      %v226 = vld [vmem:[%s1 + $0xac] sm:$0xf]
      %v227 = vld [vmem:[%s1 + $0xb0] sm:$0xf]
      %v228 = vld [vmem:[%s1 + $0xb4] sm:$0xf]
      %v229 = vld [vmem:[%s1 + $0xb8] sm:$0xf]
      %v230 = vld [vmem:[%s1 + $0xbc] sm:$0xf]
      %v263 = vunpack.c.l.b16 %v151
      %v264 = vunpack.c.h.b16 %v151
      %v265 = vunpack.c.l.b16 %v152
      %v266 = vunpack.c.l.b16 %v153
      %v267 = vunpack.c.h.b16 %v153
      %v268 = vunpack.c.l.b16 %v154
      %v269 = vunpack.c.l.b16 %v155
      %v270 = vunpack.c.h.b16 %v155
      %v271 = vunpack.c.l.b16 %v156
      %v272 = vunpack.c.l.b16 %v157
      %v273 = vunpack.c.h.b16 %v157
      %v274 = vunpack.c.l.b16 %v158
      %v275 = vunpack.c.l.b16 %v159
      %v276 = vunpack.c.h.b16 %v159
      %v277 = vunpack.c.l.b16 %v160
      %v278 = vunpack.c.l.b16 %v161
      %v279 = vunpack.c.h.b16 %v161
      %v280 = vunpack.c.l.b16 %v162
      %v281 = vunpack.c.l.b16 %v163
      %v282 = vunpack.c.h.b16 %v163
      %v283 = vunpack.c.l.b16 %v164
      %v284 = vunpack.c.l.b16 %v165
      %v285 = vunpack.c.h.b16 %v165
      %v286 = vunpack.c.l.b16 %v166
      %v287 = vunpack.c.l.b16 %v167
      %v288 = vunpack.c.h.b16 %v167
      %v289 = vunpack.c.l.b16 %v168
      %v290 = vunpack.c.l.b16 %v169
      %v291 = vunpack.c.h.b16 %v169
      %v292 = vunpack.c.l.b16 %v170
      %v293 = vunpack.c.l.b16 %v171
      %v294 = vunpack.c.h.b16 %v171
      %v295 = vunpack.c.l.b16 %v172
      %v296 = vunpack.c.l.b16 %v173
      %v297 = vunpack.c.h.b16 %v173
      %v298 = vunpack.c.l.b16 %v174
      %v299 = vunpack.c.l.b16 %v175
      %v300 = vunpack.c.h.b16 %v175
      %v301 = vunpack.c.l.b16 %v176
      %v302 = vunpack.c.l.b16 %v177
      %v303 = vunpack.c.h.b16 %v177
      %v304 = vunpack.c.l.b16 %v178
      %v305 = vunpack.c.l.b16 %v179
      %v306 = vunpack.c.h.b16 %v179
      %v307 = vunpack.c.l.b16 %v180
      %v308 = vunpack.c.l.b16 %v181
      %v309 = vunpack.c.h.b16 %v181
      %v310 = vunpack.c.l.b16 %v182
      %v311 = vpack.c.b16 %v266, %v263
      %v312 = vpack.c.b16 %v267, %v264
      %v313 = vpack.c.b16 %v268, %v265
      %v314 = vpack.c.b16 %v272, %v269
      %v315 = vpack.c.b16 %v273, %v270
      %v316 = vpack.c.b16 %v274, %v271
      %v317 = vpack.c.b16 %v278, %v275
      %v318 = vpack.c.b16 %v279, %v276
      %v319 = vpack.c.b16 %v280, %v277
      %v320 = vpack.c.b16 %v284, %v281
      %v321 = vpack.c.b16 %v285, %v282
      %v322 = vpack.c.b16 %v286, %v283
      %v323 = vpack.c.b16 %v290, %v287
      %v324 = vpack.c.b16 %v291, %v288
      %v325 = vpack.c.b16 %v292, %v289
      %v326 = vpack.c.b16 %v296, %v293
      %v327 = vpack.c.b16 %v297, %v294
      %v328 = vpack.c.b16 %v298, %v295
      %v329 = vpack.c.b16 %v302, %v299
      %v330 = vpack.c.b16 %v303, %v300
      %v331 = vpack.c.b16 %v304, %v301
      %v332 = vpack.c.b16 %v308, %v305
      %v333 = vpack.c.b16 %v309, %v306
      %v334 = vpack.c.b16 %v310, %v307
      %v407 = vunpack.c.l.b16 %v183
      %v408 = vunpack.c.l.b16 %v184
      %v409 = vunpack.c.l.b16 %v185
      %v410 = vunpack.c.l.b16 %v186
      %v411 = vunpack.c.l.b16 %v187
      %v412 = vunpack.c.l.b16 %v188
      %v413 = vunpack.c.l.b16 %v189
      %v414 = vunpack.c.l.b16 %v190
      %v415 = vunpack.c.l.b16 %v191
      %v416 = vunpack.c.l.b16 %v192
      %v417 = vunpack.c.l.b16 %v193
      %v418 = vunpack.c.l.b16 %v194
      %v419 = vunpack.c.l.b16 %v195
      %v420 = vunpack.c.l.b16 %v196
      %v421 = vunpack.c.l.b16 %v197
      %v422 = vunpack.c.l.b16 %v198
      %v423 = vunpack.c.l.b16 %v199
      %v424 = vunpack.c.l.b16 %v200
      %v425 = vunpack.c.l.b16 %v201
      %v426 = vunpack.c.l.b16 %v202
      %v427 = vunpack.c.l.b16 %v203
      %v428 = vunpack.c.l.b16 %v204
      %v429 = vunpack.c.l.b16 %v205
      %v430 = vunpack.c.l.b16 %v206
      %v431 = vunpack.c.l.b16 %v207
      %v432 = vunpack.c.l.b16 %v208
      %v433 = vunpack.c.l.b16 %v209
      %v434 = vunpack.c.l.b16 %v210
      %v435 = vunpack.c.l.b16 %v211
      %v436 = vunpack.c.l.b16 %v212
      %v437 = vunpack.c.l.b16 %v213
      %v438 = vunpack.c.l.b16 %v214
      %v439 = vunpack.c.l.b16 %v215
      %v440 = vunpack.c.l.b16 %v216
      %v441 = vunpack.c.l.b16 %v217
      %v442 = vunpack.c.l.b16 %v218
      %v443 = vunpack.c.l.b16 %v219
      %v444 = vunpack.c.l.b16 %v220
      %v445 = vunpack.c.l.b16 %v221
      %v446 = vunpack.c.l.b16 %v222
      %v447 = vunpack.c.l.b16 %v223
      %v448 = vunpack.c.l.b16 %v224
      %v449 = vunpack.c.l.b16 %v225
      %v450 = vunpack.c.l.b16 %v226
      %v451 = vunpack.c.l.b16 %v227
      %v452 = vunpack.c.l.b16 %v228
      %v453 = vunpack.c.l.b16 %v229
      %v454 = vunpack.c.l.b16 %v230
      %v455 = vpack.c.b16 %v408, %v407
      %v456 = vpack.c.b16 %v410, %v409
      %v457 = vpack.c.b16 %v412, %v411
      %v458 = vpack.c.b16 %v414, %v413
      %v459 = vpack.c.b16 %v416, %v415
      %v460 = vpack.c.b16 %v418, %v417
      %v461 = vpack.c.b16 %v420, %v419
      %v462 = vpack.c.b16 %v422, %v421
      %v463 = vpack.c.b16 %v424, %v423
      %v464 = vpack.c.b16 %v426, %v425
      %v465 = vpack.c.b16 %v428, %v427
      %v466 = vpack.c.b16 %v430, %v429
      %v467 = vpack.c.b16 %v432, %v431
      %v468 = vpack.c.b16 %v434, %v433
      %v469 = vpack.c.b16 %v436, %v435
      %v470 = vpack.c.b16 %v438, %v437
      %v471 = vpack.c.b16 %v440, %v439
      %v472 = vpack.c.b16 %v442, %v441
      %v473 = vpack.c.b16 %v444, %v443
      %v474 = vpack.c.b16 %v446, %v445
      %v475 = vpack.c.b16 %v448, %v447
      %v476 = vpack.c.b16 %v450, %v449
      %v477 = vpack.c.b16 %v452, %v451
      %v478 = vpack.c.b16 %v454, %v453
      %503 = vmatprep.subr.bf16.mxu0 0
      %504 = vmatpush1.bf16.msra.mxu0 %v462
      %505 = vmatprep.subr.bf16.mxu0 0
      %506 = vmatpush1.bf16.msra.mxu0 %v461
      %507 = vmatprep.subr.bf16.mxu0 0
      %508 = vmatpush1.bf16.msra.mxu0 %v460
      %509 = vmatprep.subr.bf16.mxu0 0
      %510 = vmatpush1.bf16.msra.mxu0 %v459
      %511 = vmatprep.subr.bf16.mxu0 0
      %512 = vmatpush1.bf16.msra.mxu0 %v458
      %513 = vmatprep.subr.bf16.mxu0 0
      %514 = vmatpush1.bf16.msra.mxu0 %v457
      %515 = vmatprep.subr.bf16.mxu0 0
      %516 = vmatpush1.bf16.msra.mxu0 %v456
      %517 = vmatprep.subr.bf16.mxu0 0
      %518 = vmatpush1.bf16.msra.mxu0 %v455
      %519 = vmatprep.subr.bf16.mxu0 0
      %520 = vmatpush2.bf16.msra.mxu0 %v470
      %521 = vmatprep.subr.bf16.mxu0 0
      %522 = vmatpush2.bf16.msra.mxu0 %v469
      %523 = vmatprep.subr.bf16.mxu0 0
      %524 = vmatpush2.bf16.msra.mxu0 %v468
      %525 = vmatprep.subr.bf16.mxu0 0
      %526 = vmatpush2.bf16.msra.mxu0 %v467
      %527 = vmatprep.subr.bf16.mxu0 0
      %528 = vmatpush2.bf16.msra.mxu0 %v466
      %529 = vmatprep.subr.bf16.mxu0 0
      %530 = vmatpush2.bf16.msra.mxu0 %v465
      %531 = vmatprep.subr.bf16.mxu0 0
      %532 = vmatpush2.bf16.msra.mxu0 %v464
      %533 = vmatprep.subr.bf16.mxu0 0
      %534 = vmatpush2.bf16.msra.mxu0 %v463
      %535 = vmatprep.mubr.bf16.mxu0 %v312
      %536 = vmatmul.mubr.bf16.gmra.mxu0 %v311
      %v537 = vpop.f32.mrf.mxu0
      %v538 = vadd.f32 0.0, %v537
      %v539 = vpop.f32.mrf.mxu0
      %v540 = vpop.f32.mrf.mxu0
      %v541 = vadd.f32 0.0, %v540
      %v542 = vpop.f32.mrf.mxu0
      %543 = vmatprep.mubr.bf16.mxu0 %v315
      %544 = vmatmul.mubr.bf16.gmra.mxu0 %v314
      %v545 = vpop.f32.mrf.mxu0
      %v546 = vadd.f32 0.0, %v545
      %v547 = vpop.f32.mrf.mxu0
      %v548 = vpop.f32.mrf.mxu0
      %v549 = vadd.f32 0.0, %v548
      %v550 = vpop.f32.mrf.mxu0
      %551 = vmatprep.mubr.bf16.mxu0 %v318
      %552 = vmatmul.mubr.bf16.gmra.mxu0 %v317
      %v553 = vpop.f32.mrf.mxu0
      %v554 = vadd.f32 0.0, %v553
      %v555 = vpop.f32.mrf.mxu0
      %v556 = vpop.f32.mrf.mxu0
      %v557 = vadd.f32 0.0, %v556
      %v558 = vpop.f32.mrf.mxu0
      %559 = vmatprep.mubr.bf16.mxu0 %v321
      %560 = vmatmul.mubr.bf16.gmra.mxu0 %v320
      %v561 = vpop.f32.mrf.mxu0
      %v562 = vadd.f32 0.0, %v561
      %v563 = vpop.f32.mrf.mxu0
      %v564 = vpop.f32.mrf.mxu0
      %v565 = vadd.f32 0.0, %v564
      %v566 = vpop.f32.mrf.mxu0
      %567 = vmatprep.mubr.bf16.mxu0 %v324
      %568 = vmatmul.mubr.bf16.gmra.mxu0 %v323
      %v569 = vpop.f32.mrf.mxu0
      %v570 = vadd.f32 0.0, %v569
      %v571 = vpop.f32.mrf.mxu0
      %v572 = vpop.f32.mrf.mxu0
      %v573 = vadd.f32 0.0, %v572
      %v574 = vpop.f32.mrf.mxu0
      %575 = vmatprep.mubr.bf16.mxu0 %v327
      %576 = vmatmul.mubr.bf16.gmra.mxu0 %v326
      %v577 = vpop.f32.mrf.mxu0
      %v578 = vadd.f32 0.0, %v577
      %v579 = vpop.f32.mrf.mxu0
      %v580 = vpop.f32.mrf.mxu0
      %v581 = vadd.f32 0.0, %v580
      %v582 = vpop.f32.mrf.mxu0
      %583 = vmatprep.mubr.bf16.mxu0 %v330
      %584 = vmatmul.mubr.bf16.gmra.mxu0 %v329
      %v585 = vpop.f32.mrf.mxu0
      %v586 = vadd.f32 0.0, %v585
      %v587 = vpop.f32.mrf.mxu0
      %v588 = vpop.f32.mrf.mxu0
      %v589 = vadd.f32 0.0, %v588
      %v590 = vpop.f32.mrf.mxu0
      %591 = vmatprep.mubr.bf16.mxu0 %v333
      %592 = vmatmul.mubr.bf16.gmra.mxu0 %v332
      %v593 = vpop.f32.mrf.mxu0
      %v594 = vadd.f32 0.0, %v593
      %v595 = vpop.f32.mrf.mxu0
      %v596 = vpop.f32.mrf.mxu0
      %v597 = vadd.f32 0.0, %v596
      %v598 = vpop.f32.mrf.mxu0
      %599 = vdwg.mxu0
      %600 = vmatprep.subr.bf16.mxu0 0
      %601 = vmatpush1.bf16.msra.mxu0 %v478
      %602 = vmatprep.subr.bf16.mxu0 0
      %603 = vmatpush1.bf16.msra.mxu0 %v477
      %604 = vmatprep.subr.bf16.mxu0 0
      %605 = vmatpush1.bf16.msra.mxu0 %v476
      %606 = vmatprep.subr.bf16.mxu0 0
      %607 = vmatpush1.bf16.msra.mxu0 %v475
      %608 = vmatprep.subr.bf16.mxu0 0
      %609 = vmatpush1.bf16.msra.mxu0 %v474
      %610 = vmatprep.subr.bf16.mxu0 0
      %611 = vmatpush1.bf16.msra.mxu0 %v473
      %612 = vmatprep.subr.bf16.mxu0 0
      %613 = vmatpush1.bf16.msra.mxu0 %v472
      %614 = vmatprep.subr.bf16.mxu0 0
      %615 = vmatpush1.bf16.msra.mxu0 %v471
      %616 = vmatprep.subr.bf16.mxu0 0
      %617 = vmatpush2.bf16.msra.mxu0 0
      %618 = vmatprep.subr.bf16.mxu0 0
      %619 = vmatpush2.bf16.msra.mxu0 0
      %620 = vmatprep.subr.bf16.mxu0 0
      %621 = vmatpush2.bf16.msra.mxu0 0
      %622 = vmatprep.subr.bf16.mxu0 0
      %623 = vmatpush2.bf16.msra.mxu0 0
      %624 = vmatprep.subr.bf16.mxu0 0
      %625 = vmatpush2.bf16.msra.mxu0 0
      %626 = vmatprep.subr.bf16.mxu0 0
      %627 = vmatpush2.bf16.msra.mxu0 0
      %628 = vmatprep.subr.bf16.mxu0 0
      %629 = vmatpush2.bf16.msra.mxu0 0
      %630 = vmatprep.subr.bf16.mxu0 0
      %631 = vmatpush2.bf16.msra.mxu0 0
      %632 = vmatprep.mubr.bf16.mxu0 0
      %633 = vmatmul.mubr.bf16.gmra.mxu0 %v313
      %v634 = vpop.f32.mrf.mxu0
      %v635 = vadd.f32 %v538, %v634
      %v636 = vpop.f32.mrf.mxu0
      %v637 = vpop.f32.mrf.mxu0
      %v638 = vadd.f32 %v541, %v637
      %v639 = vpop.f32.mrf.mxu0
      %640 = vmatprep.mubr.bf16.mxu0 0
      %641 = vmatmul.mubr.bf16.gmra.mxu0 %v316
      %v642 = vpop.f32.mrf.mxu0
      %v643 = vadd.f32 %v546, %v642
      %v644 = vpop.f32.mrf.mxu0
      %v645 = vpop.f32.mrf.mxu0
      %v646 = vadd.f32 %v549, %v645
      %v647 = vpop.f32.mrf.mxu0
      %648 = vmatprep.mubr.bf16.mxu0 0
      %649 = vmatmul.mubr.bf16.gmra.mxu0 %v319
      %v650 = vpop.f32.mrf.mxu0
      %v651 = vadd.f32 %v554, %v650
      %v652 = vpop.f32.mrf.mxu0
      %v653 = vpop.f32.mrf.mxu0
      %v654 = vadd.f32 %v557, %v653
      %v655 = vpop.f32.mrf.mxu0
      %656 = vmatprep.mubr.bf16.mxu0 0
      %657 = vmatmul.mubr.bf16.gmra.mxu0 %v322
      %v658 = vpop.f32.mrf.mxu0
      %v659 = vadd.f32 %v562, %v658
      %v660 = vpop.f32.mrf.mxu0
      %v661 = vpop.f32.mrf.mxu0
      %v662 = vadd.f32 %v565, %v661
      %v663 = vpop.f32.mrf.mxu0
      %664 = vmatprep.mubr.bf16.mxu0 0
      %665 = vmatmul.mubr.bf16.gmra.mxu0 %v325
      %v666 = vpop.f32.mrf.mxu0
      %v667 = vadd.f32 %v570, %v666
      %v668 = vpop.f32.mrf.mxu0
      %v669 = vpop.f32.mrf.mxu0
      %v670 = vadd.f32 %v573, %v669
      %v671 = vpop.f32.mrf.mxu0
      %672 = vmatprep.mubr.bf16.mxu0 0
      %673 = vmatmul.mubr.bf16.gmra.mxu0 %v328
      %v674 = vpop.f32.mrf.mxu0
      %v675 = vadd.f32 %v578, %v674
      %v676 = vpop.f32.mrf.mxu0
      %v677 = vpop.f32.mrf.mxu0
      %v678 = vadd.f32 %v581, %v677
      %v679 = vpop.f32.mrf.mxu0
      %680 = vmatprep.mubr.bf16.mxu0 0
      %681 = vmatmul.mubr.bf16.gmra.mxu0 %v331
      %v682 = vpop.f32.mrf.mxu0
      %v683 = vadd.f32 %v586, %v682
      %v684 = vpop.f32.mrf.mxu0
      %v685 = vpop.f32.mrf.mxu0
      %v686 = vadd.f32 %v589, %v685
      %v687 = vpop.f32.mrf.mxu0
      %688 = vmatprep.mubr.bf16.mxu0 0
      %689 = vmatmul.mubr.bf16.gmra.mxu0 %v334
      %v690 = vpop.f32.mrf.mxu0
      %v691 = vadd.f32 %v594, %v690
      %v692 = vpop.f32.mrf.mxu0
      %v693 = vpop.f32.mrf.mxu0
      %v694 = vadd.f32 %v597, %v693
      %v695 = vpop.f32.mrf.mxu0
      %696 = vdwg.mxu0
      %vm697 = vcmp.ge.f32.partialorder %v635, 0.0
      %vm698 = vcmp.ge.f32.partialorder %v638, 0.0
      %vm699 = vcmp.ge.f32.partialorder %v643, 0.0
      %vm700 = vcmp.ge.f32.partialorder %v646, 0.0
      %vm701 = vcmp.ge.f32.partialorder %v651, 0.0
      %vm702 = vcmp.ge.f32.partialorder %v654, 0.0
      %vm703 = vcmp.ge.f32.partialorder %v659, 0.0
      %vm704 = vcmp.ge.f32.partialorder %v662, 0.0
      %vm705 = vcmp.ge.f32.partialorder %v667, 0.0
      %vm706 = vcmp.ge.f32.partialorder %v670, 0.0
      %vm707 = vcmp.ge.f32.partialorder %v675, 0.0
      %vm708 = vcmp.ge.f32.partialorder %v678, 0.0
      %vm709 = vcmp.ge.f32.partialorder %v683, 0.0
      %vm710 = vcmp.ge.f32.partialorder %v686, 0.0
      %vm711 = vcmp.ge.f32.partialorder %v691, 0.0
      %vm712 = vcmp.ge.f32.partialorder %v694, 0.0
      %v713 = vmul.f32 %v635, 0.01
      %v714 = vmul.f32 %v638, 0.01
      %v715 = vmul.f32 %v643, 0.01
      %v716 = vmul.f32 %v646, 0.01
      %v717 = vmul.f32 %v651, 0.01
      %v718 = vmul.f32 %v654, 0.01
      %v719 = vmul.f32 %v659, 0.01
      %v720 = vmul.f32 %v662, 0.01
      %v721 = vmul.f32 %v667, 0.01
      %v722 = vmul.f32 %v670, 0.01
      %v723 = vmul.f32 %v675, 0.01
      %v724 = vmul.f32 %v678, 0.01
      %v725 = vmul.f32 %v683, 0.01
      %v726 = vmul.f32 %v686, 0.01
      %v727 = vmul.f32 %v691, 0.01
      %v728 = vmul.f32 %v694, 0.01
      %v729 = vsel %vm697, %v635, %v713
      %v730 = vsel %vm698, %v638, %v714
      %v731 = vsel %vm699, %v643, %v715
      %v732 = vsel %vm700, %v646, %v716
      %v733 = vsel %vm701, %v651, %v717
      %v734 = vsel %vm702, %v654, %v718
      %v735 = vsel %vm703, %v659, %v719
      %v736 = vsel %vm704, %v662, %v720
      %v737 = vsel %vm705, %v667, %v721
      %v738 = vsel %vm706, %v670, %v722
      %v739 = vsel %vm707, %v675, %v723
      %v740 = vsel %vm708, %v678, %v724
      %v741 = vsel %vm709, %v683, %v725
      %v742 = vsel %vm710, %v686, %v726
      %v743 = vsel %vm711, %v691, %v727
      %v744 = vsel %vm712, %v694, %v728
      %v745 = vpack.c.bf16 %v730, %v729
      %v746 = vpack.c.bf16 %v732, %v731
      %v747 = vpack.c.bf16 %v734, %v733
      %v748 = vpack.c.bf16 %v736, %v735
      %v749 = vpack.c.bf16 %v738, %v737
      %v750 = vpack.c.bf16 %v740, %v739
      %v751 = vpack.c.bf16 %v742, %v741
      %v752 = vpack.c.bf16 %v744, %v743
      %v761 = vunpack.c.l.b16 %v745
      %v762 = vunpack.c.h.b16 %v745
      %v763 = vunpack.c.l.b16 %v746
      %v764 = vunpack.c.h.b16 %v746
      %v765 = vunpack.c.l.b16 %v747
      %v766 = vunpack.c.h.b16 %v747
      %v767 = vunpack.c.l.b16 %v748
      %v768 = vunpack.c.h.b16 %v748
      %v769 = vunpack.c.l.b16 %v749
      %v770 = vunpack.c.h.b16 %v749
      %v771 = vunpack.c.l.b16 %v750
      %v772 = vunpack.c.h.b16 %v750
      %v773 = vunpack.c.l.b16 %v751
      %v774 = vunpack.c.h.b16 %v751
      %v775 = vunpack.c.l.b16 %v752
      %v776 = vunpack.c.h.b16 %v752
      %v777 = vpack.c.b16 %v761, %v761
      %v778 = vpack.c.b16 %v762, %v762
      %v779 = vpack.c.b16 %v763, %v763
      %v780 = vpack.c.b16 %v764, %v764
      %v781 = vpack.c.b16 %v765, %v765
      %v782 = vpack.c.b16 %v766, %v766
      %v783 = vpack.c.b16 %v767, %v767
      %v784 = vpack.c.b16 %v768, %v768
      %v785 = vpack.c.b16 %v769, %v769
      %v786 = vpack.c.b16 %v770, %v770
      %v787 = vpack.c.b16 %v771, %v771
      %v788 = vpack.c.b16 %v772, %v772
      %v789 = vpack.c.b16 %v773, %v773
      %v790 = vpack.c.b16 %v774, %v774
      %v791 = vpack.c.b16 %v775, %v775
      %v792 = vpack.c.b16 %v776, %v776
      %809 = vst [vmem:[%s148] sm:$0xf] %v777
      %810 = vst [vmem:[%s148 + $0x4] sm:$0xf] %v778
      %811 = vst [vmem:[%s148 + $0x8] sm:$0xf] %v779
      %812 = vst [vmem:[%s148 + $0xc] sm:$0xf] %v780
      %813 = vst [vmem:[%s148 + $0x10] sm:$0xf] %v781
      %814 = vst [vmem:[%s148 + $0x14] sm:$0xf] %v782
      %815 = vst [vmem:[%s148 + $0x18] sm:$0xf] %v783
      %816 = vst [vmem:[%s148 + $0x1c] sm:$0xf] %v784
      %817 = vst [vmem:[%s148 + $0x20] sm:$0xf] %v785
      %818 = vst [vmem:[%s148 + $0x24] sm:$0xf] %v786
      %819 = vst [vmem:[%s148 + $0x28] sm:$0xf] %v787
      %820 = vst [vmem:[%s148 + $0x2c] sm:$0xf] %v788
      %821 = vst [vmem:[%s148 + $0x30] sm:$0xf] %v789
      %822 = vst [vmem:[%s148 + $0x34] sm:$0xf] %v790
      %823 = vst [vmem:[%s148 + $0x38] sm:$0xf] %v791
      %824 = vst [vmem:[%s148 + $0x3c] sm:$0xf] %v792
      %s825 = smul.u32 16, %s13
      %p826 = scmp.lt.s32.totalorder %s825, 31
      %s827 = scalar_select %p826, %s825, 31
      %s828 = smul.addr %s827, 4
      %s829 = scalar_lea.vmem %s2, %s828
      // Predicated region
      $region29: #{discriminator_forward.8} parent=27 // pred_check
        %p830 = pneg %p78
      $region30: #{discriminator_forward.8} parent=27 // pred_check_branch
        %832 = sbr.rel (%p830) target = $region32
      $region31: #{discriminator_forward.8} parent=27 // pred_region
        %s833 = smul.u32 16, %s13
      $region32: #{discriminator_forward.8} parent=27 // pred_fallthru
        _
    $region28: #{discriminator_forward.8} parent=5 // pred_fallthru
      _
    %p834 = scmp.le.s32.totalorder 2, %s8
    // Predicated region
    $region33: #{discriminator_forward.8} parent=5 // pred_check
      %p835 = pneg %p834
    $region34: #{discriminator_forward.8} parent=5 // pred_check_branch
      %837 = sbr.rel (%p835) target = $region36
    $region35: #{discriminator_forward.8} parent=5 // pred_region
      %s838 = ssub.s32 %s8, 2
      // Predicated region
      $region37: #{discriminator_forward.8} parent=35 // pred_check
        %p839 = pneg %p84
      $region38: #{discriminator_forward.8} parent=35 // pred_check_branch
        %841 = sbr.rel (%p839) target = $region40
      $region39: #{discriminator_forward.8} parent=35 // pred_region
        %s842 = smul.u32 16, %s14
        %p843 = scmp.lt.s32.totalorder %s842, 31
        %s844 = scalar_select %p843, %s842, 31
        %s845 = smul.addr %s844, 4
        %s846 = scalar_lea.vmem %s2, %s845
      $region40: #{discriminator_forward.8} parent=35 // pred_fallthru
        _
    $region36: #{discriminator_forward.8} parent=5 // pred_fallthru
      _
  $region6: #{discriminator_forward.8} parent=0 // loop_footer
    %s12 = sadd.s32 1, %s8
  $region7: #{discriminator_forward.8} parent=0 // loop_footer_branch
    %7 = sbr.rel target = $region3
  $region8: #{discriminator_forward.8} parent=0 // loop_exit
    _

// kernel: discriminator_forward.9
$region0: #{discriminator_forward.9}
  #allocation0 [shape = 'u32[]', space=smem, size = 0x4, offset = 0x4, fixed_abs, tag = 'smem constant byte address 0x4 - core index']
  #allocation1 [shape = 'u32[144,128]{1,0:T(1,128)}', space=vmem, size = 0x12000, scoped, tag = 'internal scratch']
  %s0 = inlined_call_operand.vmem [shape: bf16[128,1024], index: 0, kind: input, shape index: {}]
  %s1 = inlined_call_operand.vmem [shape: bf16[1024,128], index: 1, kind: input, shape index: {}]
  %s2 = inlined_call_operand.vmem [shape: bf16[128,128], index: 2, kind: output, shape index: {0}]
  %s3 = inlined_call_operand.vmem [shape: f32[2,2,128], index: 3, kind: output, shape index: {1}]
  %4 = xla_tuple %s2, %s3
  %s5 = sld [smem:[#allocation0]]
  $region49: #{discriminator_forward.9} parent=0
    _
  %s7 = ssub.s32 1, %s5
  %s8 = scalar_select 0, %s7, %s5
  loop: start=0, step=1, limit=4
  $region2: #{discriminator_forward.9} parent=0 // loop_pre_header
    _
  $region3: #{discriminator_forward.9} parent=0 // loop_header
    %s10 = sphi 0, %s14
    %p11 = scmp.ge.s32.totalorder %s10, 4
    %s20 = sphi 0, %s22
    %s23 = sphi 0, %s20
    %s24 = sphi 0, %s23
    %s40 = sphi 0, %s24
    %s44 = sphi 0, %s44
    %s46 = sphi 0, %s44
    %s47 = sphi 0, %s46
    %s61 = sphi 0, %s47
    %s67 = sphi 0, %s69
    %s70 = sphi 0, %s67
    %s71 = sphi 0, %s70
    %s87 = sphi 0, %s71
    %s93 = sphi 0, %s95
    %s96 = sphi 0, %s93
    %s97 = sphi 0, %s96
    %s113 = sphi 0, %s97
  $region4: #{discriminator_forward.9} parent=0 // loop_header_branch
    %13 = sbr.rel (%p11) target = $region8
  $region5: #{discriminator_forward.9} parent=0 // loop_body
    %s15 = ssub.s32 %s10, 1
    %s16 = ssub.s32 %s10, 2
    %s17 = sadd.s32 %s10, 1
    %s18 = ssub.s32 %s10, %s17
    %p19 = scmp.eq.s32.totalorder %s18, 0
    %s21 = sadd.s32 %s20, 1
    %s22 = scalar_select %p19, %s20, %s21
    %p25 = pneg %p19
    %p26 = scmp.eq.s32.totalorder %s10, 1
    %p27 = por %p25, %p26
    %p28 = scmp.ne.s32.totalorder %s20, %s23
    %p29 = scmp.eq.s32.totalorder %s10, 0
    %p30 = por %p28, %p29
    %p31 = scmp.ne.s32.totalorder %s20, %s23
    %p32 = scmp.eq.s32.totalorder %s15, 1
    %p33 = por %p31, %p32
    %p34 = scmp.ne.s32.totalorder %s23, %s24
    %p35 = scmp.eq.s32.totalorder %s15, 0
    %p36 = por %p34, %p35
    %p37 = scmp.ne.s32.totalorder %s23, %s24
    %p38 = scmp.eq.s32.totalorder %s16, 1
    %p39 = por %p37, %p38
    %p41 = scmp.ne.s32.totalorder %s24, %s40
    %p42 = scmp.eq.s32.totalorder %s16, 0
    %p43 = por %p41, %p42
    %s45 = sadd.s32 %s44, 1
    %p48 = scmp.eq.s32.totalorder %s10, 1
    %p49 = scmp.ne.s32.totalorder %s44, %s46
    %p50 = scmp.eq.s32.totalorder %s10, 0
    %p51 = por %p49, %p50
    %p52 = scmp.ne.s32.totalorder %s44, %s46
    %p53 = scmp.eq.s32.totalorder %s15, 1
    %p54 = por %p52, %p53
    %p55 = scmp.ne.s32.totalorder %s46, %s47
    %p56 = scmp.eq.s32.totalorder %s15, 0
    %p57 = por %p55, %p56
    %p58 = scmp.ne.s32.totalorder %s46, %s47
    %p59 = scmp.eq.s32.totalorder %s16, 1
    %p60 = por %p58, %p59
    %p62 = scmp.ne.s32.totalorder %s47, %s61
    %p63 = scmp.eq.s32.totalorder %s16, 0
    %p64 = por %p62, %p63
    %s65 = ssub.s32 %s10, %s17
    %p66 = scmp.eq.s32.totalorder %s65, 0
    %s68 = sadd.s32 %s67, 1
    %s69 = scalar_select %p66, %s67, %s68
    %p72 = pneg %p66
    %p73 = scmp.eq.s32.totalorder %s10, 1
    %p74 = por %p72, %p73
    %p75 = scmp.ne.s32.totalorder %s67, %s70
    %p76 = scmp.eq.s32.totalorder %s10, 0
    %p77 = por %p75, %p76
    %p78 = scmp.ne.s32.totalorder %s67, %s70
    %p79 = scmp.eq.s32.totalorder %s15, 1
    %p80 = por %p78, %p79
    %p81 = scmp.ne.s32.totalorder %s70, %s71
    %p82 = scmp.eq.s32.totalorder %s15, 0
    %p83 = por %p81, %p82
    %p84 = scmp.ne.s32.totalorder %s70, %s71
    %p85 = scmp.eq.s32.totalorder %s16, 1
    %p86 = por %p84, %p85
    %p88 = scmp.ne.s32.totalorder %s71, %s87
    %p89 = scmp.eq.s32.totalorder %s16, 0
    %p90 = por %p88, %p89
    %s91 = ssub.s32 %s10, %s17
    %p92 = scmp.eq.s32.totalorder %s91, 0
    %s94 = sadd.s32 %s93, 1
    %s95 = scalar_select %p92, %s93, %s94
    %p98 = pneg %p92
    %p99 = scmp.eq.s32.totalorder %s10, 1
    %p100 = por %p98, %p99
    %p101 = scmp.ne.s32.totalorder %s93, %s96
    %p102 = scmp.eq.s32.totalorder %s10, 0
    %p103 = por %p101, %p102
    %p104 = scmp.ne.s32.totalorder %s93, %s96
    %p105 = scmp.eq.s32.totalorder %s15, 1
    %p106 = por %p104, %p105
    %p107 = scmp.ne.s32.totalorder %s96, %s97
    %p108 = scmp.eq.s32.totalorder %s15, 0
    %p109 = por %p107, %p108
    %p110 = scmp.ne.s32.totalorder %s96, %s97
    %p111 = scmp.eq.s32.totalorder %s16, 1
    %p112 = por %p110, %p111
    %p114 = scmp.ne.s32.totalorder %s97, %s113
    %p115 = scmp.eq.s32.totalorder %s16, 0
    %p116 = por %p114, %p115
    %p117 = scmp.le.s32.totalorder 1, %s10
    %p118 = scmp.lt.s32.totalorder %s10, 3
    %p119 = pnand %p117, %p118
    %p120 = pneg %p119
    // Predicated region
    $region9: #{discriminator_forward.9} parent=5 // pred_check
      _
    $region10: #{discriminator_forward.9} parent=5 // pred_check_branch
      %122 = sbr.rel (%p119) target = $region12
    $region11: #{discriminator_forward.9} parent=5 // pred_region
      %s123 = ssub.s32 %s10, 1
      // Predicated region
      $region13: #{discriminator_forward.9} parent=11 // pred_check
        %p124 = pneg %p57
      $region14: #{discriminator_forward.9} parent=11 // pred_check_branch
        %126 = sbr.rel (%p124) target = $region16
      $region15: #{discriminator_forward.9} parent=11 // pred_region
        _
      $region16: #{discriminator_forward.9} parent=11 // pred_fallthru
        _
    $region12: #{discriminator_forward.9} parent=5 // pred_fallthru
      _
    %p127 = scmp.lt.s32.totalorder %s10, 2
    // Predicated region
    $region17: #{discriminator_forward.9} parent=5 // pred_check
      %p128 = pneg %p127
    $region18: #{discriminator_forward.9} parent=5 // pred_check_branch
      %130 = sbr.rel (%p128) target = $region20
    $region19: #{discriminator_forward.9} parent=5 // pred_region
      // Predicated region
      $region21: #{discriminator_forward.9} parent=19 // pred_check
        %p131 = pneg %p30
      $region22: #{discriminator_forward.9} parent=19 // pred_check_branch
        %133 = sbr.rel (%p131) target = $region24
      $region23: #{discriminator_forward.9} parent=19 // pred_region
        %s134 = smul.u32 8, %s10
        %p135 = scmp.lt.s32.totalorder %s134, 15
        %s136 = scalar_select %p135, %s134, 15
        %s137 = smul.addr %s136, 8
        %s138 = smul.addr %s137, 4
        %s139 = scalar_lea.vmem %s0, %s138
        %s140 = smul.u32 8, %s10
      $region24: #{discriminator_forward.9} parent=19 // pred_fallthru
        _
    $region20: #{discriminator_forward.9} parent=5 // pred_fallthru
      _
    %p141 = scmp.le.s32.totalorder 1, %s10
    %p142 = scmp.lt.s32.totalorder %s10, 3
    %p143 = pnand %p141, %p142
    %p144 = pneg %p143
    // Predicated region
    $region25: #{discriminator_forward.9} parent=5 // pred_check
      _
    $region26: #{discriminator_forward.9} parent=5 // pred_check_branch
      %146 = sbr.rel (%p143) target = $region28
    $region27: #{discriminator_forward.9} parent=5 // pred_region
      %s147 = ssub.s32 %s10, 1
      %s148 = smul.u32 8, %s15
      %p149 = scmp.lt.s32.totalorder %s148, 15
      %s150 = scalar_select %p149, %s148, 15
      %s151 = smul.addr %s150, 8
      %s152 = smul.addr %s151, 4
      %s153 = scalar_lea.vmem %s0, %s152
      %p154 = pneg %p36
      %p155 = pneg %p33
      %p156 = pneg %p57
      %p157 = pneg %p54
      %p158 = pneg %p83
      %p159 = pneg %p80
      %s160 = smul.u32 8, %s15
      %p161 = scmp.lt.s32.totalorder %s160, 15
      %s162 = scalar_select %p161, %s160, 15
      %s163 = smul.addr %s162, 4
      %s164 = scalar_lea.vmem %s2, %s163
      %p165 = pneg %p109
      %p166 = pneg %p106
      %p167 = scmp.lt.s32.totalorder %s15, 1
      %s168 = scalar_select %p167, %s15, 1
      %s169 = smul.addr %s168, 2
      %s170 = scalar_lea.vmem %s3, %s169
      %s171 = smul.u32 8, %s15
      %p172 = scmp.lt.s32.totalorder %s171, 15
      %s173 = scalar_select %p172, %s171, 15
      %s174 = smul.addr %s173, 8
      %s175 = smul.addr %s174, 4
      %s176 = scalar_lea.vmem %s0, %s175
      %s177 = smul.u32 8, %s15
      %s178 = smul.u32 8, %s15
      %p179 = scmp.lt.s32.totalorder %s178, 15
      %s180 = scalar_select %p179, %s178, 15
      %s181 = smul.addr %s180, 4
      %s182 = scalar_lea.vmem %s2, %s181
      %s183 = smul.u32 8, %s15
      %p184 = scmp.lt.s32.totalorder %s15, 1
      %s185 = scalar_select %p184, %s15, 1
      %s186 = smul.addr %s185, 2
      %s187 = scalar_lea.vmem %s3, %s186
      %v189 = vld [vmem:[%s176] sm:$0xff]
      %v190 = vld [vmem:[%s176 + $0x8] sm:$0xff]
      %v191 = vld [vmem:[%s176 + $0x10] sm:$0xff]
      %v192 = vld [vmem:[%s176 + $0x18] sm:$0xff]
      %v193 = vld [vmem:[%s176 + $0x20] sm:$0xff]
      %v194 = vld [vmem:[%s176 + $0x28] sm:$0xff]
      %v195 = vld [vmem:[%s176 + $0x30] sm:$0xff]
      %v196 = vld [vmem:[%s176 + $0x38] sm:$0xff]
      %v197 = vld [vmem:[%s176 + $0x40] sm:$0xff]
      %v198 = vld [vmem:[%s176 + $0x48] sm:$0xff]
      %v199 = vld [vmem:[%s176 + $0x50] sm:$0xff]
      %v200 = vld [vmem:[%s176 + $0x58] sm:$0xff]
      %v201 = vld [vmem:[%s176 + $0x60] sm:$0xff]
      %v202 = vld [vmem:[%s176 + $0x68] sm:$0xff]
      %v203 = vld [vmem:[%s176 + $0x70] sm:$0xff]
      %v204 = vld [vmem:[%s176 + $0x78] sm:$0xff]
      %v205 = vld [vmem:[%s176 + $0x80] sm:$0xff]
      %v206 = vld [vmem:[%s176 + $0x88] sm:$0xff]
      %v207 = vld [vmem:[%s176 + $0x90] sm:$0xff]
      %v208 = vld [vmem:[%s176 + $0x98] sm:$0xff]
      %v209 = vld [vmem:[%s176 + $0xa0] sm:$0xff]
      %v210 = vld [vmem:[%s176 + $0xa8] sm:$0xff]
      %v211 = vld [vmem:[%s176 + $0xb0] sm:$0xff]
      %v212 = vld [vmem:[%s176 + $0xb8] sm:$0xff]
      %v213 = vld [vmem:[%s176 + $0xc0] sm:$0xff]
      %v214 = vld [vmem:[%s176 + $0xc8] sm:$0xff]
      %v215 = vld [vmem:[%s176 + $0xd0] sm:$0xff]
      %v216 = vld [vmem:[%s176 + $0xd8] sm:$0xff]
      %v217 = vld [vmem:[%s176 + $0xe0] sm:$0xff]
      %v218 = vld [vmem:[%s176 + $0xe8] sm:$0xff]
      %v219 = vld [vmem:[%s176 + $0xf0] sm:$0xff]
      %v220 = vld [vmem:[%s176 + $0xf8] sm:$0xff]
      %v221 = vld [vmem:[%s1] sm:$0xf]
      %v222 = vld [vmem:[%s1 + $0x4] sm:$0xf]
      %v223 = vld [vmem:[%s1 + $0x8] sm:$0xf]
      %v224 = vld [vmem:[%s1 + $0xc] sm:$0xf]
      %v225 = vld [vmem:[%s1 + $0x10] sm:$0xf]
      %v226 = vld [vmem:[%s1 + $0x14] sm:$0xf]
      %v227 = vld [vmem:[%s1 + $0x18] sm:$0xf]
      %v228 = vld [vmem:[%s1 + $0x1c] sm:$0xf]
      %v229 = vld [vmem:[%s1 + $0x20] sm:$0xf]
      %v230 = vld [vmem:[%s1 + $0x24] sm:$0xf]
      %v231 = vld [vmem:[%s1 + $0x28] sm:$0xf]
      %v232 = vld [vmem:[%s1 + $0x2c] sm:$0xf]
      %v233 = vld [vmem:[%s1 + $0x30] sm:$0xf]
      %v234 = vld [vmem:[%s1 + $0x34] sm:$0xf]
      %v235 = vld [vmem:[%s1 + $0x38] sm:$0xf]
      %v236 = vld [vmem:[%s1 + $0x3c] sm:$0xf]
      %v237 = vld [vmem:[%s1 + $0x40] sm:$0xf]
      %v238 = vld [vmem:[%s1 + $0x44] sm:$0xf]
      %v239 = vld [vmem:[%s1 + $0x48] sm:$0xf]
      %v240 = vld [vmem:[%s1 + $0x4c] sm:$0xf]
      %v241 = vld [vmem:[%s1 + $0x50] sm:$0xf]
      %v242 = vld [vmem:[%s1 + $0x54] sm:$0xf]
      %v243 = vld [vmem:[%s1 + $0x58] sm:$0xf]
      %v244 = vld [vmem:[%s1 + $0x5c] sm:$0xf]
      %v245 = vld [vmem:[%s1 + $0x60] sm:$0xf]
      %v246 = vld [vmem:[%s1 + $0x64] sm:$0xf]
      %v247 = vld [vmem:[%s1 + $0x68] sm:$0xf]
      %v248 = vld [vmem:[%s1 + $0x6c] sm:$0xf]
      %v249 = vld [vmem:[%s1 + $0x70] sm:$0xf]
      %v250 = vld [vmem:[%s1 + $0x74] sm:$0xf]
      %v251 = vld [vmem:[%s1 + $0x78] sm:$0xf]
      %v252 = vld [vmem:[%s1 + $0x7c] sm:$0xf]
      %v253 = vld [vmem:[%s1 + $0x80] sm:$0xf]
      %v254 = vld [vmem:[%s1 + $0x84] sm:$0xf]
      %v255 = vld [vmem:[%s1 + $0x88] sm:$0xf]
      %v256 = vld [vmem:[%s1 + $0x8c] sm:$0xf]
      %v257 = vld [vmem:[%s1 + $0x90] sm:$0xf]
      %v258 = vld [vmem:[%s1 + $0x94] sm:$0xf]
      %v259 = vld [vmem:[%s1 + $0x98] sm:$0xf]
      %v260 = vld [vmem:[%s1 + $0x9c] sm:$0xf]
      %v261 = vld [vmem:[%s1 + $0xa0] sm:$0xf]
      %v262 = vld [vmem:[%s1 + $0xa4] sm:$0xf]
      %v263 = vld [vmem:[%s1 + $0xa8] sm:$0xf]
      %v264 = vld [vmem:[%s1 + $0xac] sm:$0xf]
      %v265 = vld [vmem:[%s1 + $0xb0] sm:$0xf]
      %v266 = vld [vmem:[%s1 + $0xb4] sm:$0xf]
      %v267 = vld [vmem:[%s1 + $0xb8] sm:$0xf]
      %v268 = vld [vmem:[%s1 + $0xbc] sm:$0xf]
      %v269 = vld [vmem:[%s1 + $0xc0] sm:$0xf]
      %v270 = vld [vmem:[%s1 + $0xc4] sm:$0xf]
      %v271 = vld [vmem:[%s1 + $0xc8] sm:$0xf]
      %v272 = vld [vmem:[%s1 + $0xcc] sm:$0xf]
      %v273 = vld [vmem:[%s1 + $0xd0] sm:$0xf]
      %v274 = vld [vmem:[%s1 + $0xd4] sm:$0xf]
      %v275 = vld [vmem:[%s1 + $0xd8] sm:$0xf]
      %v276 = vld [vmem:[%s1 + $0xdc] sm:$0xf]
      %v277 = vld [vmem:[%s1 + $0xe0] sm:$0xf]
      %v278 = vld [vmem:[%s1 + $0xe4] sm:$0xf]
      %v279 = vld [vmem:[%s1 + $0xe8] sm:$0xf]
      %v280 = vld [vmem:[%s1 + $0xec] sm:$0xf]
      %v281 = vld [vmem:[%s1 + $0xf0] sm:$0xf]
      %v282 = vld [vmem:[%s1 + $0xf4] sm:$0xf]
      %v283 = vld [vmem:[%s1 + $0xf8] sm:$0xf]
      %v284 = vld [vmem:[%s1 + $0xfc] sm:$0xf]
      %v285 = vld [vmem:[%s1 + $0x100] sm:$0xf]
      %v286 = vld [vmem:[%s1 + $0x104] sm:$0xf]
      %v287 = vld [vmem:[%s1 + $0x108] sm:$0xf]
      %v288 = vld [vmem:[%s1 + $0x10c] sm:$0xf]
      %v289 = vld [vmem:[%s1 + $0x110] sm:$0xf]
      %v290 = vld [vmem:[%s1 + $0x114] sm:$0xf]
      %v291 = vld [vmem:[%s1 + $0x118] sm:$0xf]
      %v292 = vld [vmem:[%s1 + $0x11c] sm:$0xf]
      %v293 = vld [vmem:[%s1 + $0x120] sm:$0xf]
      %v294 = vld [vmem:[%s1 + $0x124] sm:$0xf]
      %v295 = vld [vmem:[%s1 + $0x128] sm:$0xf]
      %v296 = vld [vmem:[%s1 + $0x12c] sm:$0xf]
      %v297 = vld [vmem:[%s1 + $0x130] sm:$0xf]
      %v298 = vld [vmem:[%s1 + $0x134] sm:$0xf]
      %v299 = vld [vmem:[%s1 + $0x138] sm:$0xf]
      %v300 = vld [vmem:[%s1 + $0x13c] sm:$0xf]
      %v301 = vld [vmem:[%s1 + $0x140] sm:$0xf]
      %v302 = vld [vmem:[%s1 + $0x144] sm:$0xf]
      %v303 = vld [vmem:[%s1 + $0x148] sm:$0xf]
      %v304 = vld [vmem:[%s1 + $0x14c] sm:$0xf]
      %v305 = vld [vmem:[%s1 + $0x150] sm:$0xf]
      %v306 = vld [vmem:[%s1 + $0x154] sm:$0xf]
      %v307 = vld [vmem:[%s1 + $0x158] sm:$0xf]
      %v308 = vld [vmem:[%s1 + $0x15c] sm:$0xf]
      %v309 = vld [vmem:[%s1 + $0x160] sm:$0xf]
      %v310 = vld [vmem:[%s1 + $0x164] sm:$0xf]
      %v311 = vld [vmem:[%s1 + $0x168] sm:$0xf]
      %v312 = vld [vmem:[%s1 + $0x16c] sm:$0xf]
      %v313 = vld [vmem:[%s1 + $0x170] sm:$0xf]
      %v314 = vld [vmem:[%s1 + $0x174] sm:$0xf]
      %v315 = vld [vmem:[%s1 + $0x178] sm:$0xf]
      %v316 = vld [vmem:[%s1 + $0x17c] sm:$0xf]
      %v317 = vld [vmem:[%s1 + $0x180] sm:$0xf]
      %v318 = vld [vmem:[%s1 + $0x184] sm:$0xf]
      %v319 = vld [vmem:[%s1 + $0x188] sm:$0xf]
      %v320 = vld [vmem:[%s1 + $0x18c] sm:$0xf]
      %v321 = vld [vmem:[%s1 + $0x190] sm:$0xf]
      %v322 = vld [vmem:[%s1 + $0x194] sm:$0xf]
      %v323 = vld [vmem:[%s1 + $0x198] sm:$0xf]
      %v324 = vld [vmem:[%s1 + $0x19c] sm:$0xf]
      %v325 = vld [vmem:[%s1 + $0x1a0] sm:$0xf]
      %v326 = vld [vmem:[%s1 + $0x1a4] sm:$0xf]
      %v327 = vld [vmem:[%s1 + $0x1a8] sm:$0xf]
      %v328 = vld [vmem:[%s1 + $0x1ac] sm:$0xf]
      %v329 = vld [vmem:[%s1 + $0x1b0] sm:$0xf]
      %v330 = vld [vmem:[%s1 + $0x1b4] sm:$0xf]
      %v331 = vld [vmem:[%s1 + $0x1b8] sm:$0xf]
      %v332 = vld [vmem:[%s1 + $0x1bc] sm:$0xf]
      %v333 = vld [vmem:[%s1 + $0x1c0] sm:$0xf]
      %v334 = vld [vmem:[%s1 + $0x1c4] sm:$0xf]
      %v335 = vld [vmem:[%s1 + $0x1c8] sm:$0xf]
      %v336 = vld [vmem:[%s1 + $0x1cc] sm:$0xf]
      %v337 = vld [vmem:[%s1 + $0x1d0] sm:$0xf]
      %v338 = vld [vmem:[%s1 + $0x1d4] sm:$0xf]
      %v339 = vld [vmem:[%s1 + $0x1d8] sm:$0xf]
      %v340 = vld [vmem:[%s1 + $0x1dc] sm:$0xf]
      %v341 = vld [vmem:[%s1 + $0x1e0] sm:$0xf]
      %v342 = vld [vmem:[%s1 + $0x1e4] sm:$0xf]
      %v343 = vld [vmem:[%s1 + $0x1e8] sm:$0xf]
      %v344 = vld [vmem:[%s1 + $0x1ec] sm:$0xf]
      %v345 = vld [vmem:[%s1 + $0x1f0] sm:$0xf]
      %v346 = vld [vmem:[%s1 + $0x1f4] sm:$0xf]
      %v347 = vld [vmem:[%s1 + $0x1f8] sm:$0xf]
      %v348 = vld [vmem:[%s1 + $0x1fc] sm:$0xf]
      %v381 = vunpack.c.l.b16 %v189
      %v382 = vunpack.c.h.b16 %v189
      %v383 = vunpack.c.l.b16 %v190
      %v384 = vunpack.c.h.b16 %v190
      %v385 = vunpack.c.l.b16 %v191
      %v386 = vunpack.c.h.b16 %v191
      %v387 = vunpack.c.l.b16 %v192
      %v388 = vunpack.c.h.b16 %v192
      %v389 = vunpack.c.l.b16 %v193
      %v390 = vunpack.c.h.b16 %v193
      %v391 = vunpack.c.l.b16 %v194
      %v392 = vunpack.c.h.b16 %v194
      %v393 = vunpack.c.l.b16 %v195
      %v394 = vunpack.c.h.b16 %v195
      %v395 = vunpack.c.l.b16 %v196
      %v396 = vunpack.c.h.b16 %v196
      %v397 = vunpack.c.l.b16 %v197
      %v398 = vunpack.c.h.b16 %v197
      %v399 = vunpack.c.l.b16 %v198
      %v400 = vunpack.c.h.b16 %v198
      %v401 = vunpack.c.l.b16 %v199
      %v402 = vunpack.c.h.b16 %v199
      %v403 = vunpack.c.l.b16 %v200
      %v404 = vunpack.c.h.b16 %v200
      %v405 = vunpack.c.l.b16 %v201
      %v406 = vunpack.c.h.b16 %v201
      %v407 = vunpack.c.l.b16 %v202
      %v408 = vunpack.c.h.b16 %v202
      %v409 = vunpack.c.l.b16 %v203
      %v410 = vunpack.c.h.b16 %v203
      %v411 = vunpack.c.l.b16 %v204
      %v412 = vunpack.c.h.b16 %v204
      %v413 = vunpack.c.l.b16 %v205
      %v414 = vunpack.c.h.b16 %v205
      %v415 = vunpack.c.l.b16 %v206
      %v416 = vunpack.c.h.b16 %v206
      %v417 = vunpack.c.l.b16 %v207
      %v418 = vunpack.c.h.b16 %v207
      %v419 = vunpack.c.l.b16 %v208
      %v420 = vunpack.c.h.b16 %v208
      %v421 = vunpack.c.l.b16 %v209
      %v422 = vunpack.c.h.b16 %v209
      %v423 = vunpack.c.l.b16 %v210
      %v424 = vunpack.c.h.b16 %v210
      %v425 = vunpack.c.l.b16 %v211
      %v426 = vunpack.c.h.b16 %v211
      %v427 = vunpack.c.l.b16 %v212
      %v428 = vunpack.c.h.b16 %v212
      %v429 = vunpack.c.l.b16 %v213
      %v430 = vunpack.c.h.b16 %v213
      %v431 = vunpack.c.l.b16 %v214
      %v432 = vunpack.c.h.b16 %v214
      %v433 = vunpack.c.l.b16 %v215
      %v434 = vunpack.c.h.b16 %v215
      %v435 = vunpack.c.l.b16 %v216
      %v436 = vunpack.c.h.b16 %v216
      %v437 = vunpack.c.l.b16 %v217
      %v438 = vunpack.c.h.b16 %v217
      %v439 = vunpack.c.l.b16 %v218
      %v440 = vunpack.c.h.b16 %v218
      %v441 = vunpack.c.l.b16 %v219
      %v442 = vunpack.c.h.b16 %v219
      %v443 = vunpack.c.l.b16 %v220
      %v444 = vunpack.c.h.b16 %v220
      %v445 = vpack.c.b16 %v389, %v381
      %v446 = vpack.c.b16 %v390, %v382
      %v447 = vpack.c.b16 %v391, %v383
      %v448 = vpack.c.b16 %v392, %v384
      %v449 = vpack.c.b16 %v393, %v385
      %v450 = vpack.c.b16 %v394, %v386
      %v451 = vpack.c.b16 %v395, %v387
      %v452 = vpack.c.b16 %v396, %v388
      %v453 = vpack.c.b16 %v405, %v397
      %v454 = vpack.c.b16 %v406, %v398
      %v455 = vpack.c.b16 %v407, %v399
      %v456 = vpack.c.b16 %v408, %v400
      %v457 = vpack.c.b16 %v409, %v401
      %v458 = vpack.c.b16 %v410, %v402
      %v459 = vpack.c.b16 %v411, %v403
      %v460 = vpack.c.b16 %v412, %v404
      %v461 = vpack.c.b16 %v421, %v413
      %v462 = vpack.c.b16 %v422, %v414
      %v463 = vpack.c.b16 %v423, %v415
      %v464 = vpack.c.b16 %v424, %v416
      %v465 = vpack.c.b16 %v425, %v417
      %v466 = vpack.c.b16 %v426, %v418
      %v467 = vpack.c.b16 %v427, %v419
      %v468 = vpack.c.b16 %v428, %v420
      %v469 = vpack.c.b16 %v437, %v429
      %v470 = vpack.c.b16 %v438, %v430
      %v471 = vpack.c.b16 %v439, %v431
      %v472 = vpack.c.b16 %v440, %v432
      %v473 = vpack.c.b16 %v441, %v433
      %v474 = vpack.c.b16 %v442, %v434
      %v475 = vpack.c.b16 %v443, %v435
      %v476 = vpack.c.b16 %v444, %v436
      %v637 = vunpack.c.l.b16 %v221
      %v638 = vunpack.c.l.b16 %v222
      %v639 = vunpack.c.l.b16 %v223
      %v640 = vunpack.c.l.b16 %v224
      %v641 = vunpack.c.l.b16 %v225
      %v642 = vunpack.c.l.b16 %v226
      %v643 = vunpack.c.l.b16 %v227
      %v644 = vunpack.c.l.b16 %v228
      %v645 = vunpack.c.l.b16 %v229
      %v646 = vunpack.c.l.b16 %v230
      %v647 = vunpack.c.l.b16 %v231
      %v648 = vunpack.c.l.b16 %v232
      %v649 = vunpack.c.l.b16 %v233
      %v650 = vunpack.c.l.b16 %v234
      %v651 = vunpack.c.l.b16 %v235
      %v652 = vunpack.c.l.b16 %v236
      %v653 = vunpack.c.l.b16 %v237
      %v654 = vunpack.c.l.b16 %v238
      %v655 = vunpack.c.l.b16 %v239
      %v656 = vunpack.c.l.b16 %v240
      %v657 = vunpack.c.l.b16 %v241
      %v658 = vunpack.c.l.b16 %v242
      %v659 = vunpack.c.l.b16 %v243
      %v660 = vunpack.c.l.b16 %v244
      %v661 = vunpack.c.l.b16 %v245
      %v662 = vunpack.c.l.b16 %v246
      %v663 = vunpack.c.l.b16 %v247
      %v664 = vunpack.c.l.b16 %v248
      %v665 = vunpack.c.l.b16 %v249
      %v666 = vunpack.c.l.b16 %v250
      %v667 = vunpack.c.l.b16 %v251
      %v668 = vunpack.c.l.b16 %v252
      %v669 = vunpack.c.l.b16 %v253
      %v670 = vunpack.c.l.b16 %v254
      %v671 = vunpack.c.l.b16 %v255
      %v672 = vunpack.c.l.b16 %v256
      %v673 = vunpack.c.l.b16 %v257
      %v674 = vunpack.c.l.b16 %v258
      %v675 = vunpack.c.l.b16 %v259
      %v676 = vunpack.c.l.b16 %v260
      %v677 = vunpack.c.l.b16 %v261
      %v678 = vunpack.c.l.b16 %v262
      %v679 = vunpack.c.l.b16 %v263
      %v680 = vunpack.c.l.b16 %v264
      %v681 = vunpack.c.l.b16 %v265
      %v682 = vunpack.c.l.b16 %v266
      %v683 = vunpack.c.l.b16 %v267
      %v684 = vunpack.c.l.b16 %v268
      %v685 = vunpack.c.l.b16 %v269
      %v686 = vunpack.c.l.b16 %v270
      %v687 = vunpack.c.l.b16 %v271
      %v688 = vunpack.c.l.b16 %v272
      %v689 = vunpack.c.l.b16 %v273
      %v690 = vunpack.c.l.b16 %v274
      %v691 = vunpack.c.l.b16 %v275
      %v692 = vunpack.c.l.b16 %v276
      %v693 = vunpack.c.l.b16 %v277
      %v694 = vunpack.c.l.b16 %v278
      %v695 = vunpack.c.l.b16 %v279
      %v696 = vunpack.c.l.b16 %v280
      %v697 = vunpack.c.l.b16 %v281
      %v698 = vunpack.c.l.b16 %v282
      %v699 = vunpack.c.l.b16 %v283
      %v700 = vunpack.c.l.b16 %v284
      %v701 = vunpack.c.l.b16 %v285
      %v702 = vunpack.c.l.b16 %v286
      %v703 = vunpack.c.l.b16 %v287
      %v704 = vunpack.c.l.b16 %v288
      %v705 = vunpack.c.l.b16 %v289
      %v706 = vunpack.c.l.b16 %v290
      %v707 = vunpack.c.l.b16 %v291
      %v708 = vunpack.c.l.b16 %v292
      %v709 = vunpack.c.l.b16 %v293
      %v710 = vunpack.c.l.b16 %v294
      %v711 = vunpack.c.l.b16 %v295
      %v712 = vunpack.c.l.b16 %v296
      %v713 = vunpack.c.l.b16 %v297
      %v714 = vunpack.c.l.b16 %v298
      %v715 = vunpack.c.l.b16 %v299
      %v716 = vunpack.c.l.b16 %v300
      %v717 = vunpack.c.l.b16 %v301
      %v718 = vunpack.c.l.b16 %v302
      %v719 = vunpack.c.l.b16 %v303
      %v720 = vunpack.c.l.b16 %v304
      %v721 = vunpack.c.l.b16 %v305
      %v722 = vunpack.c.l.b16 %v306
      %v723 = vunpack.c.l.b16 %v307
      %v724 = vunpack.c.l.b16 %v308
      %v725 = vunpack.c.l.b16 %v309
      %v726 = vunpack.c.l.b16 %v310
      %v727 = vunpack.c.l.b16 %v311
      %v728 = vunpack.c.l.b16 %v312
      %v729 = vunpack.c.l.b16 %v313
      %v730 = vunpack.c.l.b16 %v314
      %v731 = vunpack.c.l.b16 %v315
      %v732 = vunpack.c.l.b16 %v316
      %v733 = vunpack.c.l.b16 %v317
      %v734 = vunpack.c.l.b16 %v318
      %v735 = vunpack.c.l.b16 %v319
      %v736 = vunpack.c.l.b16 %v320
      %v737 = vunpack.c.l.b16 %v321
      %v738 = vunpack.c.l.b16 %v322
      %v739 = vunpack.c.l.b16 %v323
      %v740 = vunpack.c.l.b16 %v324
      %v741 = vunpack.c.l.b16 %v325
      %v742 = vunpack.c.l.b16 %v326
      %v743 = vunpack.c.l.b16 %v327
      %v744 = vunpack.c.l.b16 %v328
      %v745 = vunpack.c.l.b16 %v329
      %v746 = vunpack.c.l.b16 %v330
      %v747 = vunpack.c.l.b16 %v331
      %v748 = vunpack.c.l.b16 %v332
      %v749 = vunpack.c.l.b16 %v333
      %v750 = vunpack.c.l.b16 %v334
      %v751 = vunpack.c.l.b16 %v335
      %v752 = vunpack.c.l.b16 %v336
      %v753 = vunpack.c.l.b16 %v337
      %v754 = vunpack.c.l.b16 %v338
      %v755 = vunpack.c.l.b16 %v339
      %v756 = vunpack.c.l.b16 %v340
      %v757 = vunpack.c.l.b16 %v341
      %v758 = vunpack.c.l.b16 %v342
      %v759 = vunpack.c.l.b16 %v343
      %v760 = vunpack.c.l.b16 %v344
      %v761 = vunpack.c.l.b16 %v345
      %v762 = vunpack.c.l.b16 %v346
      %v763 = vunpack.c.l.b16 %v347
      %v764 = vunpack.c.l.b16 %v348
      %v765 = vpack.c.b16 %v638, %v637
      %v766 = vpack.c.b16 %v640, %v639
      %v767 = vpack.c.b16 %v642, %v641
      %v768 = vpack.c.b16 %v644, %v643
      %v769 = vpack.c.b16 %v646, %v645
      %v770 = vpack.c.b16 %v648, %v647
      %v771 = vpack.c.b16 %v650, %v649
      %v772 = vpack.c.b16 %v652, %v651
      %v773 = vpack.c.b16 %v654, %v653
      %v774 = vpack.c.b16 %v656, %v655
      %v775 = vpack.c.b16 %v658, %v657
      %v776 = vpack.c.b16 %v660, %v659
      %v777 = vpack.c.b16 %v662, %v661
      %v778 = vpack.c.b16 %v664, %v663
      %v779 = vpack.c.b16 %v666, %v665
      %v780 = vpack.c.b16 %v668, %v667
      %v781 = vpack.c.b16 %v670, %v669
      %v782 = vpack.c.b16 %v672, %v671
      %v783 = vpack.c.b16 %v674, %v673
      %v784 = vpack.c.b16 %v676, %v675
      %v785 = vpack.c.b16 %v678, %v677
      %v786 = vpack.c.b16 %v680, %v679
      %v787 = vpack.c.b16 %v682, %v681
      %v788 = vpack.c.b16 %v684, %v683
      %v789 = vpack.c.b16 %v686, %v685
      %v790 = vpack.c.b16 %v688, %v687
      %v791 = vpack.c.b16 %v690, %v689
      %v792 = vpack.c.b16 %v692, %v691
      %v793 = vpack.c.b16 %v694, %v693
      %v794 = vpack.c.b16 %v696, %v695
      %v795 = vpack.c.b16 %v698, %v697
      %v796 = vpack.c.b16 %v700, %v699
      %v797 = vpack.c.b16 %v702, %v701
      %v798 = vpack.c.b16 %v704, %v703
      %v799 = vpack.c.b16 %v706, %v705
      %v800 = vpack.c.b16 %v708, %v707
      %v801 = vpack.c.b16 %v710, %v709
      %v802 = vpack.c.b16 %v712, %v711
      %v803 = vpack.c.b16 %v714, %v713
      %v804 = vpack.c.b16 %v716, %v715
      %v805 = vpack.c.b16 %v718, %v717
      %v806 = vpack.c.b16 %v720, %v719
      %v807 = vpack.c.b16 %v722, %v721
      %v808 = vpack.c.b16 %v724, %v723
      %v809 = vpack.c.b16 %v726, %v725
      %v810 = vpack.c.b16 %v728, %v727
      %v811 = vpack.c.b16 %v730, %v729
      %v812 = vpack.c.b16 %v732, %v731
      %v813 = vpack.c.b16 %v734, %v733
      %v814 = vpack.c.b16 %v736, %v735
      %v815 = vpack.c.b16 %v738, %v737
      %v816 = vpack.c.b16 %v740, %v739
      %v817 = vpack.c.b16 %v742, %v741
      %v818 = vpack.c.b16 %v744, %v743
      %v819 = vpack.c.b16 %v746, %v745
      %v820 = vpack.c.b16 %v748, %v747
      %v821 = vpack.c.b16 %v750, %v749
      %v822 = vpack.c.b16 %v752, %v751
      %v823 = vpack.c.b16 %v754, %v753
      %v824 = vpack.c.b16 %v756, %v755
      %v825 = vpack.c.b16 %v758, %v757
      %v826 = vpack.c.b16 %v760, %v759
      %v827 = vpack.c.b16 %v762, %v761
      %v828 = vpack.c.b16 %v764, %v763
      %893 = vmatprep.subr.bf16.mxu0 0
      %894 = vmatpush1.bf16.msra.mxu0 %v772
      %895 = vmatprep.subr.bf16.mxu0 0
      %896 = vmatpush1.bf16.msra.mxu0 %v771
      %897 = vmatprep.subr.bf16.mxu0 0
      %898 = vmatpush1.bf16.msra.mxu0 %v770
      %899 = vmatprep.subr.bf16.mxu0 0
      %900 = vmatpush1.bf16.msra.mxu0 %v769
      %901 = vmatprep.subr.bf16.mxu0 0
      %902 = vmatpush1.bf16.msra.mxu0 %v768
      %903 = vmatprep.subr.bf16.mxu0 0
      %904 = vmatpush1.bf16.msra.mxu0 %v767
      %905 = vmatprep.subr.bf16.mxu0 0
      %906 = vmatpush1.bf16.msra.mxu0 %v766
      %907 = vmatprep.subr.bf16.mxu0 0
      %908 = vmatpush1.bf16.msra.mxu0 %v765
      %909 = vmatprep.subr.bf16.mxu0 0
      %910 = vmatpush2.bf16.msra.mxu0 %v780
      %911 = vmatprep.subr.bf16.mxu0 0
      %912 = vmatpush2.bf16.msra.mxu0 %v779
      %913 = vmatprep.subr.bf16.mxu0 0
      %914 = vmatpush2.bf16.msra.mxu0 %v778
      %915 = vmatprep.subr.bf16.mxu0 0
      %916 = vmatpush2.bf16.msra.mxu0 %v777
      %917 = vmatprep.subr.bf16.mxu0 0
      %918 = vmatpush2.bf16.msra.mxu0 %v776
      %919 = vmatprep.subr.bf16.mxu0 0
      %920 = vmatpush2.bf16.msra.mxu0 %v775
      %921 = vmatprep.subr.bf16.mxu0 0
      %922 = vmatpush2.bf16.msra.mxu0 %v774
      %923 = vmatprep.subr.bf16.mxu0 0
      %924 = vmatpush2.bf16.msra.mxu0 %v773
      %925 = vmatprep.mubr.bf16.mxu0 %v446
      %926 = vmatmul.mubr.bf16.gmra.mxu0 %v445
      %v927 = vpop.f32.mrf.mxu0
      %v928 = vadd.f32 0.0, %v927
      %v929 = vpop.f32.mrf.mxu0
      %v930 = vpop.f32.mrf.mxu0
      %v931 = vadd.f32 0.0, %v930
      %v932 = vpop.f32.mrf.mxu0
      %933 = vmatprep.mubr.bf16.mxu0 %v454
      %934 = vmatmul.mubr.bf16.gmra.mxu0 %v453
      %v935 = vpop.f32.mrf.mxu0
      %v936 = vadd.f32 0.0, %v935
      %v937 = vpop.f32.mrf.mxu0
      %v938 = vpop.f32.mrf.mxu0
      %v939 = vadd.f32 0.0, %v938
      %v940 = vpop.f32.mrf.mxu0
      %941 = vmatprep.mubr.bf16.mxu0 %v462
      %942 = vmatmul.mubr.bf16.gmra.mxu0 %v461
      %v943 = vpop.f32.mrf.mxu0
      %v944 = vadd.f32 0.0, %v943
      %v945 = vpop.f32.mrf.mxu0
      %v946 = vpop.f32.mrf.mxu0
      %v947 = vadd.f32 0.0, %v946
      %v948 = vpop.f32.mrf.mxu0
      %949 = vmatprep.mubr.bf16.mxu0 %v470
      %950 = vmatmul.mubr.bf16.gmra.mxu0 %v469
      %v951 = vpop.f32.mrf.mxu0
      %v952 = vadd.f32 0.0, %v951
      %v953 = vpop.f32.mrf.mxu0
      %v954 = vpop.f32.mrf.mxu0
      %v955 = vadd.f32 0.0, %v954
      %v956 = vpop.f32.mrf.mxu0
      %957 = vdwg.mxu0
      %958 = vmatprep.subr.bf16.mxu0 0
      %959 = vmatpush1.bf16.msra.mxu0 %v788
      %960 = vmatprep.subr.bf16.mxu0 0
      %961 = vmatpush1.bf16.msra.mxu0 %v787
      %962 = vmatprep.subr.bf16.mxu0 0
      %963 = vmatpush1.bf16.msra.mxu0 %v786
      %964 = vmatprep.subr.bf16.mxu0 0
      %965 = vmatpush1.bf16.msra.mxu0 %v785
      %966 = vmatprep.subr.bf16.mxu0 0
      %967 = vmatpush1.bf16.msra.mxu0 %v784
      %968 = vmatprep.subr.bf16.mxu0 0
      %969 = vmatpush1.bf16.msra.mxu0 %v783
      %970 = vmatprep.subr.bf16.mxu0 0
      %971 = vmatpush1.bf16.msra.mxu0 %v782
      %972 = vmatprep.subr.bf16.mxu0 0
      %973 = vmatpush1.bf16.msra.mxu0 %v781
      %974 = vmatprep.subr.bf16.mxu0 0
      %975 = vmatpush2.bf16.msra.mxu0 %v796
      %976 = vmatprep.subr.bf16.mxu0 0
      %977 = vmatpush2.bf16.msra.mxu0 %v795
      %978 = vmatprep.subr.bf16.mxu0 0
      %979 = vmatpush2.bf16.msra.mxu0 %v794
      %980 = vmatprep.subr.bf16.mxu0 0
      %981 = vmatpush2.bf16.msra.mxu0 %v793
      %982 = vmatprep.subr.bf16.mxu0 0
      %983 = vmatpush2.bf16.msra.mxu0 %v792
      %984 = vmatprep.subr.bf16.mxu0 0
      %985 = vmatpush2.bf16.msra.mxu0 %v791
      %986 = vmatprep.subr.bf16.mxu0 0
      %987 = vmatpush2.bf16.msra.mxu0 %v790
      %988 = vmatprep.subr.bf16.mxu0 0
      %989 = vmatpush2.bf16.msra.mxu0 %v789
      %990 = vmatprep.mubr.bf16.mxu0 %v448
      %991 = vmatmul.mubr.bf16.gmra.mxu0 %v447
      %v992 = vpop.f32.mrf.mxu0
      %v993 = vadd.f32 %v928, %v992
      %v994 = vpop.f32.mrf.mxu0
      %v995 = vpop.f32.mrf.mxu0
      %v996 = vadd.f32 %v931, %v995
      %v997 = vpop.f32.mrf.mxu0
      %998 = vmatprep.mubr.bf16.mxu0 %v456
      %999 = vmatmul.mubr.bf16.gmra.mxu0 %v455
      %v1000 = vpop.f32.mrf.mxu0
      %v1001 = vadd.f32 %v936, %v1000
      %v1002 = vpop.f32.mrf.mxu0
      %v1003 = vpop.f32.mrf.mxu0
      %v1004 = vadd.f32 %v939, %v1003
      %v1005 = vpop.f32.mrf.mxu0
      %1006 = vmatprep.mubr.bf16.mxu0 %v464
      %1007 = vmatmul.mubr.bf16.gmra.mxu0 %v463
      %v1008 = vpop.f32.mrf.mxu0
      %v1009 = vadd.f32 %v944, %v1008
      %v1010 = vpop.f32.mrf.mxu0
      %v1011 = vpop.f32.mrf.mxu0
      %v1012 = vadd.f32 %v947, %v1011
      %v1013 = vpop.f32.mrf.mxu0
      %1014 = vmatprep.mubr.bf16.mxu0 %v472
      %1015 = vmatmul.mubr.bf16.gmra.mxu0 %v471
      %v1016 = vpop.f32.mrf.mxu0
      %v1017 = vadd.f32 %v952, %v1016
      %v1018 = vpop.f32.mrf.mxu0
      %v1019 = vpop.f32.mrf.mxu0
      %v1020 = vadd.f32 %v955, %v1019
      %v1021 = vpop.f32.mrf.mxu0
      %1022 = vdwg.mxu0
      %1023 = vmatprep.subr.bf16.mxu0 0
      %1024 = vmatpush1.bf16.msra.mxu0 %v804
      %1025 = vmatprep.subr.bf16.mxu0 0
      %1026 = vmatpush1.bf16.msra.mxu0 %v803
      %1027 = vmatprep.subr.bf16.mxu0 0
      %1028 = vmatpush1.bf16.msra.mxu0 %v802
      %1029 = vmatprep.subr.bf16.mxu0 0
      %1030 = vmatpush1.bf16.msra.mxu0 %v801
      %1031 = vmatprep.subr.bf16.mxu0 0
      %1032 = vmatpush1.bf16.msra.mxu0 %v800
      %1033 = vmatprep.subr.bf16.mxu0 0
      %1034 = vmatpush1.bf16.msra.mxu0 %v799
      %1035 = vmatprep.subr.bf16.mxu0 0
      %1036 = vmatpush1.bf16.msra.mxu0 %v798
      %1037 = vmatprep.subr.bf16.mxu0 0
      %1038 = vmatpush1.bf16.msra.mxu0 %v797
      %1039 = vmatprep.subr.bf16.mxu0 0
      %1040 = vmatpush2.bf16.msra.mxu0 %v812
      %1041 = vmatprep.subr.bf16.mxu0 0
      %1042 = vmatpush2.bf16.msra.mxu0 %v811
      %1043 = vmatprep.subr.bf16.mxu0 0
      %1044 = vmatpush2.bf16.msra.mxu0 %v810
      %1045 = vmatprep.subr.bf16.mxu0 0
      %1046 = vmatpush2.bf16.msra.mxu0 %v809
      %1047 = vmatprep.subr.bf16.mxu0 0
      %1048 = vmatpush2.bf16.msra.mxu0 %v808
      %1049 = vmatprep.subr.bf16.mxu0 0
      %1050 = vmatpush2.bf16.msra.mxu0 %v807
      %1051 = vmatprep.subr.bf16.mxu0 0
      %1052 = vmatpush2.bf16.msra.mxu0 %v806
      %1053 = vmatprep.subr.bf16.mxu0 0
      %1054 = vmatpush2.bf16.msra.mxu0 %v805
      %1055 = vmatprep.mubr.bf16.mxu0 %v450
      %1056 = vmatmul.mubr.bf16.gmra.mxu0 %v449
      %v1057 = vpop.f32.mrf.mxu0
      %v1058 = vadd.f32 %v993, %v1057
      %v1059 = vpop.f32.mrf.mxu0
      %v1060 = vpop.f32.mrf.mxu0
      %v1061 = vadd.f32 %v996, %v1060
      %v1062 = vpop.f32.mrf.mxu0
      %1063 = vmatprep.mubr.bf16.mxu0 %v458
      %1064 = vmatmul.mubr.bf16.gmra.mxu0 %v457
      %v1065 = vpop.f32.mrf.mxu0
      %v1066 = vadd.f32 %v1001, %v1065
      %v1067 = vpop.f32.mrf.mxu0
      %v1068 = vpop.f32.mrf.mxu0
      %v1069 = vadd.f32 %v1004, %v1068
      %v1070 = vpop.f32.mrf.mxu0
      %1071 = vmatprep.mubr.bf16.mxu0 %v466
      %1072 = vmatmul.mubr.bf16.gmra.mxu0 %v465
      %v1073 = vpop.f32.mrf.mxu0
      %v1074 = vadd.f32 %v1009, %v1073
      %v1075 = vpop.f32.mrf.mxu0
      %v1076 = vpop.f32.mrf.mxu0
      %v1077 = vadd.f32 %v1012, %v1076
      %v1078 = vpop.f32.mrf.mxu0
      %1079 = vmatprep.mubr.bf16.mxu0 %v474
      %1080 = vmatmul.mubr.bf16.gmra.mxu0 %v473
      %v1081 = vpop.f32.mrf.mxu0
      %v1082 = vadd.f32 %v1017, %v1081
      %v1083 = vpop.f32.mrf.mxu0
      %v1084 = vpop.f32.mrf.mxu0
      %v1085 = vadd.f32 %v1020, %v1084
      %v1086 = vpop.f32.mrf.mxu0
      %1087 = vdwg.mxu0
      %1088 = vmatprep.subr.bf16.mxu0 0
      %1089 = vmatpush1.bf16.msra.mxu0 %v820
      %1090 = vmatprep.subr.bf16.mxu0 0
      %1091 = vmatpush1.bf16.msra.mxu0 %v819
      %1092 = vmatprep.subr.bf16.mxu0 0
      %1093 = vmatpush1.bf16.msra.mxu0 %v818
      %1094 = vmatprep.subr.bf16.mxu0 0
      %1095 = vmatpush1.bf16.msra.mxu0 %v817
      %1096 = vmatprep.subr.bf16.mxu0 0
      %1097 = vmatpush1.bf16.msra.mxu0 %v816
      %1098 = vmatprep.subr.bf16.mxu0 0
      %1099 = vmatpush1.bf16.msra.mxu0 %v815
      %1100 = vmatprep.subr.bf16.mxu0 0
      %1101 = vmatpush1.bf16.msra.mxu0 %v814
      %1102 = vmatprep.subr.bf16.mxu0 0
      %1103 = vmatpush1.bf16.msra.mxu0 %v813
      %1104 = vmatprep.subr.bf16.mxu0 0
      %1105 = vmatpush2.bf16.msra.mxu0 %v828
      %1106 = vmatprep.subr.bf16.mxu0 0
      %1107 = vmatpush2.bf16.msra.mxu0 %v827
      %1108 = vmatprep.subr.bf16.mxu0 0
      %1109 = vmatpush2.bf16.msra.mxu0 %v826
      %1110 = vmatprep.subr.bf16.mxu0 0
      %1111 = vmatpush2.bf16.msra.mxu0 %v825
      %1112 = vmatprep.subr.bf16.mxu0 0
      %1113 = vmatpush2.bf16.msra.mxu0 %v824
      %1114 = vmatprep.subr.bf16.mxu0 0
      %1115 = vmatpush2.bf16.msra.mxu0 %v823
      %1116 = vmatprep.subr.bf16.mxu0 0
      %1117 = vmatpush2.bf16.msra.mxu0 %v822
      %1118 = vmatprep.subr.bf16.mxu0 0
      %1119 = vmatpush2.bf16.msra.mxu0 %v821
      %1120 = vmatprep.mubr.bf16.mxu0 %v452
      %1121 = vmatmul.mubr.bf16.gmra.mxu0 %v451
      %v1122 = vpop.f32.mrf.mxu0
      %v1123 = vadd.f32 %v1058, %v1122
      %v1124 = vpop.f32.mrf.mxu0
      %v1125 = vpop.f32.mrf.mxu0
      %v1126 = vadd.f32 %v1061, %v1125
      %v1127 = vpop.f32.mrf.mxu0
      %1128 = vmatprep.mubr.bf16.mxu0 %v460
      %1129 = vmatmul.mubr.bf16.gmra.mxu0 %v459
      %v1130 = vpop.f32.mrf.mxu0
      %v1131 = vadd.f32 %v1066, %v1130
      %v1132 = vpop.f32.mrf.mxu0
      %v1133 = vpop.f32.mrf.mxu0
      %v1134 = vadd.f32 %v1069, %v1133
      %v1135 = vpop.f32.mrf.mxu0
      %1136 = vmatprep.mubr.bf16.mxu0 %v468
      %1137 = vmatmul.mubr.bf16.gmra.mxu0 %v467
      %v1138 = vpop.f32.mrf.mxu0
      %v1139 = vadd.f32 %v1074, %v1138
      %v1140 = vpop.f32.mrf.mxu0
      %v1141 = vpop.f32.mrf.mxu0
      %v1142 = vadd.f32 %v1077, %v1141
      %v1143 = vpop.f32.mrf.mxu0
      %1144 = vmatprep.mubr.bf16.mxu0 %v476
      %1145 = vmatmul.mubr.bf16.gmra.mxu0 %v475
      %v1146 = vpop.f32.mrf.mxu0
      %v1147 = vadd.f32 %v1082, %v1146
      %v1148 = vpop.f32.mrf.mxu0
      %v1149 = vpop.f32.mrf.mxu0
      %v1150 = vadd.f32 %v1085, %v1149
      %v1151 = vpop.f32.mrf.mxu0
      %1152 = vdwg.mxu0
      %v1153 = vadd.f32 %v1123, %v1126
      %v1154 = vadd.f32 %v1153, %v1131
      %v1155 = vadd.f32 %v1154, %v1134
      %v1156 = vadd.f32 %v1155, %v1139
      %v1157 = vadd.f32 %v1156, %v1142
      %v1158 = vadd.f32 %v1157, %v1147
      %v1159 = vadd.f32 %v1158, %v1150
      %v1160 = vrot.slane %v1159, 4
      %v1161 = vadd.f32 %v1159, %v1160
      %v1162 = vrot.slane %v1161, 2
      %v1163 = vadd.f32 %v1161, %v1162
      %v1164 = vrot.slane %v1163, 1
      %v1165 = vadd.f32 %v1163, %v1164
      %1166 = vst [vmem:[%s187] sm:$0x1] %v1165
      %v1167 = vmul.f32 %v1123, %v1123
      %v1168 = vmul.f32 %v1126, %v1126
      %v1169 = vmul.f32 %v1131, %v1131
      %v1170 = vmul.f32 %v1134, %v1134
      %v1171 = vmul.f32 %v1139, %v1139
      %v1172 = vmul.f32 %v1142, %v1142
      %v1173 = vmul.f32 %v1147, %v1147
      %v1174 = vmul.f32 %v1150, %v1150
      %v1175 = vadd.f32 %v1167, %v1168
      %v1176 = vadd.f32 %v1175, %v1169
      %v1177 = vadd.f32 %v1176, %v1170
      %v1178 = vadd.f32 %v1177, %v1171
      %v1179 = vadd.f32 %v1178, %v1172
      %v1180 = vadd.f32 %v1179, %v1173
      %v1181 = vadd.f32 %v1180, %v1174
      %v1182 = vrot.slane %v1181, 4
      %v1183 = vadd.f32 %v1181, %v1182
      %v1184 = vrot.slane %v1183, 2
      %v1185 = vadd.f32 %v1183, %v1184
      %v1186 = vrot.slane %v1185, 1
      %v1187 = vadd.f32 %v1185, %v1186
      %1188 = vst [vmem:[%s187 + $0x1] sm:$0x1] %v1187
      %v1189 = vpack.c.bf16 %v1126, %v1123
      %v1190 = vpack.c.bf16 %v1134, %v1131
      %v1191 = vpack.c.bf16 %v1142, %v1139
      %v1192 = vpack.c.bf16 %v1150, %v1147
      %v1197 = vunpack.c.l.b16 %v1189
      %v1198 = vunpack.c.h.b16 %v1189
      %v1199 = vunpack.c.l.b16 %v1190
      %v1200 = vunpack.c.h.b16 %v1190
      %v1201 = vunpack.c.l.b16 %v1191
      %v1202 = vunpack.c.h.b16 %v1191
      %v1203 = vunpack.c.l.b16 %v1192
      %v1204 = vunpack.c.h.b16 %v1192
      %v1205 = vpack.c.b16 %v1197, %v1197
      %v1206 = vpack.c.b16 %v1198, %v1198
      %v1207 = vpack.c.b16 %v1199, %v1199
      %v1208 = vpack.c.b16 %v1200, %v1200
      %v1209 = vpack.c.b16 %v1201, %v1201
      %v1210 = vpack.c.b16 %v1202, %v1202
      %v1211 = vpack.c.b16 %v1203, %v1203
      %v1212 = vpack.c.b16 %v1204, %v1204
      %1221 = vst [vmem:[%s182] sm:$0xf] %v1205
      %1222 = vst [vmem:[%s182 + $0x4] sm:$0xf] %v1206
      %1223 = vst [vmem:[%s182 + $0x8] sm:$0xf] %v1207
      %1224 = vst [vmem:[%s182 + $0xc] sm:$0xf] %v1208
      %1225 = vst [vmem:[%s182 + $0x10] sm:$0xf] %v1209
      %1226 = vst [vmem:[%s182 + $0x14] sm:$0xf] %v1210
      %1227 = vst [vmem:[%s182 + $0x18] sm:$0xf] %v1211
      %1228 = vst [vmem:[%s182 + $0x1c] sm:$0xf] %v1212
      %s1229 = smul.u32 8, %s15
      %p1230 = scmp.lt.s32.totalorder %s1229, 15
      %s1231 = scalar_select %p1230, %s1229, 15
      %s1232 = smul.addr %s1231, 4
      %s1233 = scalar_lea.vmem %s2, %s1232
      %p1234 = scmp.lt.s32.totalorder %s15, 1
      %s1235 = scalar_select %p1234, %s15, 1
      %s1236 = smul.addr %s1235, 2
      %s1237 = scalar_lea.vmem %s3, %s1236
      // Predicated region
      $region29: #{discriminator_forward.9} parent=27 // pred_check
        %p1238 = pneg %p80
      $region30: #{discriminator_forward.9} parent=27 // pred_check_branch
        %1240 = sbr.rel (%p1238) target = $region32
      $region31: #{discriminator_forward.9} parent=27 // pred_region
        %s1241 = smul.u32 8, %s15
      $region32: #{discriminator_forward.9} parent=27 // pred_fallthru
        _
      // Predicated region
      $region33: #{discriminator_forward.9} parent=27 // pred_check
        %p1242 = pneg %p106
      $region34: #{discriminator_forward.9} parent=27 // pred_check_branch
        %1244 = sbr.rel (%p1242) target = $region36
      $region35: #{discriminator_forward.9} parent=27 // pred_region
        _
      $region36: #{discriminator_forward.9} parent=27 // pred_fallthru
        _
    $region28: #{discriminator_forward.9} parent=5 // pred_fallthru
      _
    %p1245 = scmp.le.s32.totalorder 2, %s10
    // Predicated region
    $region37: #{discriminator_forward.9} parent=5 // pred_check
      %p1246 = pneg %p1245
    $region38: #{discriminator_forward.9} parent=5 // pred_check_branch
      %1248 = sbr.rel (%p1246) target = $region40
    $region39: #{discriminator_forward.9} parent=5 // pred_region
      %s1249 = ssub.s32 %s10, 2
      // Predicated region
      $region41: #{discriminator_forward.9} parent=39 // pred_check
        %p1250 = pneg %p86
      $region42: #{discriminator_forward.9} parent=39 // pred_check_branch
        %1252 = sbr.rel (%p1250) target = $region44
      $region43: #{discriminator_forward.9} parent=39 // pred_region
        %s1253 = smul.u32 8, %s16
        %p1254 = scmp.lt.s32.totalorder %s1253, 15
        %s1255 = scalar_select %p1254, %s1253, 15
        %s1256 = smul.addr %s1255, 4
        %s1257 = scalar_lea.vmem %s2, %s1256
      $region44: #{discriminator_forward.9} parent=39 // pred_fallthru
        _
      // Predicated region
      $region45: #{discriminator_forward.9} parent=39 // pred_check
        %p1258 = pneg %p112
      $region46: #{discriminator_forward.9} parent=39 // pred_check_branch
        %1260 = sbr.rel (%p1258) target = $region48
      $region47: #{discriminator_forward.9} parent=39 // pred_region
        %p1261 = scmp.lt.s32.totalorder %s16, 1
        %s1262 = scalar_select %p1261, %s16, 1
        %s1263 = smul.addr %s1262, 2
        %s1264 = scalar_lea.vmem %s3, %s1263
      $region48: #{discriminator_forward.9} parent=39 // pred_fallthru
        _
    $region40: #{discriminator_forward.9} parent=5 // pred_fallthru
      _
  $region6: #{discriminator_forward.9} parent=0 // loop_footer
    %s14 = sadd.s32 1, %s10
  $region7: #{discriminator_forward.9} parent=0 // loop_footer_branch
    %9 = sbr.rel target = $region3
  $region8: #{discriminator_forward.9} parent=0 // loop_exit
    _

// kernel: discriminator_forward.10
$region0: #{discriminator_forward.10}
  #allocation0 [shape = 'u32[]', space=smem, size = 0x4, offset = 0x4, fixed_abs, tag = 'smem constant byte address 0x4 - core index']
  #allocation1 [shape = 'u32[144,128]{1,0:T(1,128)}', space=vmem, size = 0x12000, scoped, tag = 'internal scratch']
  %s0 = inlined_call_operand.vmem [shape: bf16[128,128], index: 0, kind: input, shape index: {}]
  %s1 = inlined_call_operand.vmem [shape: f32[1,128], index: 1, kind: input, shape index: {}]
  %s2 = inlined_call_operand.vmem [shape: f32[1,128], index: 2, kind: input, shape index: {}]
  %s3 = inlined_call_operand.vmem [shape: bf16[128,128], index: 3, kind: output, shape index: {}]
  %s4 = sld [smem:[#allocation0]]
  $region45: #{discriminator_forward.10} parent=0
    _
  %s6 = ssub.s32 1, %s4
  %s7 = scalar_select 0, %s6, %s4
  loop: start=0, step=1, limit=4
  $region2: #{discriminator_forward.10} parent=0 // loop_pre_header
    _
  $region3: #{discriminator_forward.10} parent=0 // loop_header
    %s9 = sphi 0, %s13
    %p10 = scmp.ge.s32.totalorder %s9, 4
    %s19 = sphi 0, %s21
    %s22 = sphi 0, %s19
    %s23 = sphi 0, %s22
    %s39 = sphi 0, %s23
    %s43 = sphi 0, %s43
    %s45 = sphi 0, %s43
    %s46 = sphi 0, %s45
    %s60 = sphi 0, %s46
    %s64 = sphi 0, %s64
    %s66 = sphi 0, %s64
    %s67 = sphi 0, %s66
    %s81 = sphi 0, %s67
    %s87 = sphi 0, %s89
    %s90 = sphi 0, %s87
    %s91 = sphi 0, %s90
    %s107 = sphi 0, %s91
  $region4: #{discriminator_forward.10} parent=0 // loop_header_branch
    %12 = sbr.rel (%p10) target = $region8
  $region5: #{discriminator_forward.10} parent=0 // loop_body
    %s14 = ssub.s32 %s9, 1
    %s15 = ssub.s32 %s9, 2
    %s16 = sadd.s32 %s9, 1
    %s17 = ssub.s32 %s9, %s16
    %p18 = scmp.eq.s32.totalorder %s17, 0
    %s20 = sadd.s32 %s19, 1
    %s21 = scalar_select %p18, %s19, %s20
    %p24 = pneg %p18
    %p25 = scmp.eq.s32.totalorder %s9, 1
    %p26 = por %p24, %p25
    %p27 = scmp.ne.s32.totalorder %s19, %s22
    %p28 = scmp.eq.s32.totalorder %s9, 0
    %p29 = por %p27, %p28
    %p30 = scmp.ne.s32.totalorder %s19, %s22
    %p31 = scmp.eq.s32.totalorder %s14, 1
    %p32 = por %p30, %p31
    %p33 = scmp.ne.s32.totalorder %s22, %s23
    %p34 = scmp.eq.s32.totalorder %s14, 0
    %p35 = por %p33, %p34
    %p36 = scmp.ne.s32.totalorder %s22, %s23
    %p37 = scmp.eq.s32.totalorder %s15, 1
    %p38 = por %p36, %p37
    %p40 = scmp.ne.s32.totalorder %s23, %s39
    %p41 = scmp.eq.s32.totalorder %s15, 0
    %p42 = por %p40, %p41
    %s44 = sadd.s32 %s43, 1
    %p47 = scmp.eq.s32.totalorder %s9, 1
    %p48 = scmp.ne.s32.totalorder %s43, %s45
    %p49 = scmp.eq.s32.totalorder %s9, 0
    %p50 = por %p48, %p49
    %p51 = scmp.ne.s32.totalorder %s43, %s45
    %p52 = scmp.eq.s32.totalorder %s14, 1
    %p53 = por %p51, %p52
    %p54 = scmp.ne.s32.totalorder %s45, %s46
    %p55 = scmp.eq.s32.totalorder %s14, 0
    %p56 = por %p54, %p55
    %p57 = scmp.ne.s32.totalorder %s45, %s46
    %p58 = scmp.eq.s32.totalorder %s15, 1
    %p59 = por %p57, %p58
    %p61 = scmp.ne.s32.totalorder %s46, %s60
    %p62 = scmp.eq.s32.totalorder %s15, 0
    %p63 = por %p61, %p62
    %s65 = sadd.s32 %s64, 1
    %p68 = scmp.eq.s32.totalorder %s9, 1
    %p69 = scmp.ne.s32.totalorder %s64, %s66
    %p70 = scmp.eq.s32.totalorder %s9, 0
    %p71 = por %p69, %p70
    %p72 = scmp.ne.s32.totalorder %s64, %s66
    %p73 = scmp.eq.s32.totalorder %s14, 1
    %p74 = por %p72, %p73
    %p75 = scmp.ne.s32.totalorder %s66, %s67
    %p76 = scmp.eq.s32.totalorder %s14, 0
    %p77 = por %p75, %p76
    %p78 = scmp.ne.s32.totalorder %s66, %s67
    %p79 = scmp.eq.s32.totalorder %s15, 1
    %p80 = por %p78, %p79
    %p82 = scmp.ne.s32.totalorder %s67, %s81
    %p83 = scmp.eq.s32.totalorder %s15, 0
    %p84 = por %p82, %p83
    %s85 = ssub.s32 %s9, %s16
    %p86 = scmp.eq.s32.totalorder %s85, 0
    %s88 = sadd.s32 %s87, 1
    %s89 = scalar_select %p86, %s87, %s88
    %p92 = pneg %p86
    %p93 = scmp.eq.s32.totalorder %s9, 1
    %p94 = por %p92, %p93
    %p95 = scmp.ne.s32.totalorder %s87, %s90
    %p96 = scmp.eq.s32.totalorder %s9, 0
    %p97 = por %p95, %p96
    %p98 = scmp.ne.s32.totalorder %s87, %s90
    %p99 = scmp.eq.s32.totalorder %s14, 1
    %p100 = por %p98, %p99
    %p101 = scmp.ne.s32.totalorder %s90, %s91
    %p102 = scmp.eq.s32.totalorder %s14, 0
    %p103 = por %p101, %p102
    %p104 = scmp.ne.s32.totalorder %s90, %s91
    %p105 = scmp.eq.s32.totalorder %s15, 1
    %p106 = por %p104, %p105
    %p108 = scmp.ne.s32.totalorder %s91, %s107
    %p109 = scmp.eq.s32.totalorder %s15, 0
    %p110 = por %p108, %p109
    %p111 = scmp.le.s32.totalorder 1, %s9
    %p112 = scmp.lt.s32.totalorder %s9, 3
    %p113 = pnand %p111, %p112
    %p114 = pneg %p113
    // Predicated region
    $region9: #{discriminator_forward.10} parent=5 // pred_check
      _
    $region10: #{discriminator_forward.10} parent=5 // pred_check_branch
      %116 = sbr.rel (%p113) target = $region12
    $region11: #{discriminator_forward.10} parent=5 // pred_region
      %s117 = ssub.s32 %s9, 1
      // Predicated region
      $region13: #{discriminator_forward.10} parent=11 // pred_check
        %p118 = pneg %p56
      $region14: #{discriminator_forward.10} parent=11 // pred_check_branch
        %120 = sbr.rel (%p118) target = $region16
      $region15: #{discriminator_forward.10} parent=11 // pred_region
        _
      $region16: #{discriminator_forward.10} parent=11 // pred_fallthru
        _
      // Predicated region
      $region17: #{discriminator_forward.10} parent=11 // pred_check
        %p121 = pneg %p77
      $region18: #{discriminator_forward.10} parent=11 // pred_check_branch
        %123 = sbr.rel (%p121) target = $region20
      $region19: #{discriminator_forward.10} parent=11 // pred_region
        _
      $region20: #{discriminator_forward.10} parent=11 // pred_fallthru
        _
    $region12: #{discriminator_forward.10} parent=5 // pred_fallthru
      _
    %p124 = scmp.lt.s32.totalorder %s9, 2
    // Predicated region
    $region21: #{discriminator_forward.10} parent=5 // pred_check
      %p125 = pneg %p124
    $region22: #{discriminator_forward.10} parent=5 // pred_check_branch
      %127 = sbr.rel (%p125) target = $region24
    $region23: #{discriminator_forward.10} parent=5 // pred_region
      // Predicated region
      $region25: #{discriminator_forward.10} parent=23 // pred_check
        %p128 = pneg %p29
      $region26: #{discriminator_forward.10} parent=23 // pred_check_branch
        %130 = sbr.rel (%p128) target = $region28
      $region27: #{discriminator_forward.10} parent=23 // pred_region
        %s131 = smul.u32 8, %s9
        %p132 = scmp.lt.s32.totalorder %s131, 15
        %s133 = scalar_select %p132, %s131, 15
        %s134 = smul.addr %s133, 4
        %s135 = scalar_lea.vmem %s0, %s134
        %s136 = smul.u32 8, %s9
      $region28: #{discriminator_forward.10} parent=23 // pred_fallthru
        _
    $region24: #{discriminator_forward.10} parent=5 // pred_fallthru
      _
    %p137 = scmp.le.s32.totalorder 1, %s9
    %p138 = scmp.lt.s32.totalorder %s9, 3
    %p139 = pnand %p137, %p138
    %p140 = pneg %p139
    // Predicated region
    $region29: #{discriminator_forward.10} parent=5 // pred_check
      _
    $region30: #{discriminator_forward.10} parent=5 // pred_check_branch
      %142 = sbr.rel (%p139) target = $region32
    $region31: #{discriminator_forward.10} parent=5 // pred_region
      %s143 = ssub.s32 %s9, 1
      %s144 = smul.u32 8, %s14
      %p145 = scmp.lt.s32.totalorder %s144, 15
      %s146 = scalar_select %p145, %s144, 15
      %s147 = smul.addr %s146, 4
      %s148 = scalar_lea.vmem %s0, %s147
      %p149 = pneg %p35
      %p150 = pneg %p32
      %p151 = pneg %p56
      %p152 = pneg %p53
      %p153 = pneg %p77
      %p154 = pneg %p74
      %p155 = pneg %p103
      %p156 = pneg %p100
      %s157 = smul.u32 8, %s14
      %p158 = scmp.lt.s32.totalorder %s157, 15
      %s159 = scalar_select %p158, %s157, 15
      %s160 = smul.addr %s159, 4
      %s161 = scalar_lea.vmem %s3, %s160
      %s162 = smul.u32 8, %s14
      %p163 = scmp.lt.s32.totalorder %s162, 15
      %s164 = scalar_select %p163, %s162, 15
      %s165 = smul.addr %s164, 4
      %s166 = scalar_lea.vmem %s0, %s165
      %s167 = smul.u32 8, %s14
      %s168 = smul.u32 8, %s14
      %p169 = scmp.lt.s32.totalorder %s168, 15
      %s170 = scalar_select %p169, %s168, 15
      %s171 = smul.addr %s170, 4
      %s172 = scalar_lea.vmem %s3, %s171
      %s173 = smul.u32 8, %s14
      %v174 = vld [vmem:[%s166] sm:$0xf]
      %v175 = vld [vmem:[%s166 + $0x4] sm:$0xf]
      %v176 = vld [vmem:[%s166 + $0x8] sm:$0xf]
      %v177 = vld [vmem:[%s166 + $0xc] sm:$0xf]
      %v178 = vld [vmem:[%s166 + $0x10] sm:$0xf]
      %v179 = vld [vmem:[%s166 + $0x14] sm:$0xf]
      %v180 = vld [vmem:[%s166 + $0x18] sm:$0xf]
      %v181 = vld [vmem:[%s166 + $0x1c] sm:$0xf]
      %v182 = vunpack.c.l.bf16 %v174
      %v183 = vunpack.c.l.bf16 %v175
      %v184 = vunpack.c.l.bf16 %v176
      %v185 = vunpack.c.l.bf16 %v177
      %v186 = vunpack.c.l.bf16 %v178
      %v187 = vunpack.c.l.bf16 %v179
      %v188 = vunpack.c.l.bf16 %v180
      %v189 = vunpack.c.l.bf16 %v181
      %v190 = vld [vmem:[%s1] sm:$0x1]
      %v192 = vlaneseq
      %v193 = vshrl.u32 %v192, 7
      %v194 = vsub.s32 0, %v193
      %v195 = vrot.slane %v190, %v194
      %v197 = vmul.f32 %v182, %v195
      %v198 = vmul.f32 %v183, %v195
      %v199 = vmul.f32 %v184, %v195
      %v200 = vmul.f32 %v185, %v195
      %v201 = vmul.f32 %v186, %v195
      %v202 = vmul.f32 %v187, %v195
      %v203 = vmul.f32 %v188, %v195
      %v204 = vmul.f32 %v189, %v195
      %v205 = vld [vmem:[%s2] sm:$0x1]
      %v207 = vlaneseq
      %v208 = vshrl.u32 %v207, 7
      %v209 = vsub.s32 0, %v208
      %v210 = vrot.slane %v205, %v209
      %v212 = vadd.f32 %v197, %v210
      %v213 = vadd.f32 %v198, %v210
      %v214 = vadd.f32 %v199, %v210
      %v215 = vadd.f32 %v200, %v210
      %v216 = vadd.f32 %v201, %v210
      %v217 = vadd.f32 %v202, %v210
      %v218 = vadd.f32 %v203, %v210
      %v219 = vadd.f32 %v204, %v210
      %vm220 = vcmp.ge.f32.partialorder %v212, 0.0
      %vm221 = vcmp.ge.f32.partialorder %v213, 0.0
      %vm222 = vcmp.ge.f32.partialorder %v214, 0.0
      %vm223 = vcmp.ge.f32.partialorder %v215, 0.0
      %vm224 = vcmp.ge.f32.partialorder %v216, 0.0
      %vm225 = vcmp.ge.f32.partialorder %v217, 0.0
      %vm226 = vcmp.ge.f32.partialorder %v218, 0.0
      %vm227 = vcmp.ge.f32.partialorder %v219, 0.0
      %v228 = vmul.f32 %v212, 0.01
      %v229 = vmul.f32 %v213, 0.01
      %v230 = vmul.f32 %v214, 0.01
      %v231 = vmul.f32 %v215, 0.01
      %v232 = vmul.f32 %v216, 0.01
      %v233 = vmul.f32 %v217, 0.01
      %v234 = vmul.f32 %v218, 0.01
      %v235 = vmul.f32 %v219, 0.01
      %v236 = vsel %vm220, %v212, %v228
      %v237 = vsel %vm221, %v213, %v229
      %v238 = vsel %vm222, %v214, %v230
      %v239 = vsel %vm223, %v215, %v231
      %v240 = vsel %vm224, %v216, %v232
      %v241 = vsel %vm225, %v217, %v233
      %v242 = vsel %vm226, %v218, %v234
      %v243 = vsel %vm227, %v219, %v235
      %v244 = vpack.c.bf16 %v237, %v236
      %v245 = vpack.c.bf16 %v239, %v238
      %v246 = vpack.c.bf16 %v241, %v240
      %v247 = vpack.c.bf16 %v243, %v242
      %v252 = vunpack.c.l.b16 %v244
      %v253 = vunpack.c.h.b16 %v244
      %v254 = vunpack.c.l.b16 %v245
      %v255 = vunpack.c.h.b16 %v245
      %v256 = vunpack.c.l.b16 %v246
      %v257 = vunpack.c.h.b16 %v246
      %v258 = vunpack.c.l.b16 %v247
      %v259 = vunpack.c.h.b16 %v247
      %v260 = vpack.c.b16 %v252, %v252
      %v261 = vpack.c.b16 %v253, %v253
      %v262 = vpack.c.b16 %v254, %v254
      %v263 = vpack.c.b16 %v255, %v255
      %v264 = vpack.c.b16 %v256, %v256
      %v265 = vpack.c.b16 %v257, %v257
      %v266 = vpack.c.b16 %v258, %v258
      %v267 = vpack.c.b16 %v259, %v259
      %276 = vst [vmem:[%s172] sm:$0xf] %v260
      %277 = vst [vmem:[%s172 + $0x4] sm:$0xf] %v261
      %278 = vst [vmem:[%s172 + $0x8] sm:$0xf] %v262
      %279 = vst [vmem:[%s172 + $0xc] sm:$0xf] %v263
      %280 = vst [vmem:[%s172 + $0x10] sm:$0xf] %v264
      %281 = vst [vmem:[%s172 + $0x14] sm:$0xf] %v265
      %282 = vst [vmem:[%s172 + $0x18] sm:$0xf] %v266
      %283 = vst [vmem:[%s172 + $0x1c] sm:$0xf] %v267
      %s284 = smul.u32 8, %s14
      %p285 = scmp.lt.s32.totalorder %s284, 15
      %s286 = scalar_select %p285, %s284, 15
      %s287 = smul.addr %s286, 4
      %s288 = scalar_lea.vmem %s3, %s287
      // Predicated region
      $region33: #{discriminator_forward.10} parent=31 // pred_check
        %p289 = pneg %p100
      $region34: #{discriminator_forward.10} parent=31 // pred_check_branch
        %291 = sbr.rel (%p289) target = $region36
      $region35: #{discriminator_forward.10} parent=31 // pred_region
        %s292 = smul.u32 8, %s14
      $region36: #{discriminator_forward.10} parent=31 // pred_fallthru
        _
    $region32: #{discriminator_forward.10} parent=5 // pred_fallthru
      _
    %p293 = scmp.le.s32.totalorder 2, %s9
    // Predicated region
    $region37: #{discriminator_forward.10} parent=5 // pred_check
      %p294 = pneg %p293
    $region38: #{discriminator_forward.10} parent=5 // pred_check_branch
      %296 = sbr.rel (%p294) target = $region40
    $region39: #{discriminator_forward.10} parent=5 // pred_region
      %s297 = ssub.s32 %s9, 2
      // Predicated region
      $region41: #{discriminator_forward.10} parent=39 // pred_check
        %p298 = pneg %p106
      $region42: #{discriminator_forward.10} parent=39 // pred_check_branch
        %300 = sbr.rel (%p298) target = $region44
      $region43: #{discriminator_forward.10} parent=39 // pred_region
        %s301 = smul.u32 8, %s15
        %p302 = scmp.lt.s32.totalorder %s301, 15
        %s303 = scalar_select %p302, %s301, 15
        %s304 = smul.addr %s303, 4
        %s305 = scalar_lea.vmem %s3, %s304
      $region44: #{discriminator_forward.10} parent=39 // pred_fallthru
        _
    $region40: #{discriminator_forward.10} parent=5 // pred_fallthru
      _
  $region6: #{discriminator_forward.10} parent=0 // loop_footer
    %s13 = sadd.s32 1, %s9
  $region7: #{discriminator_forward.10} parent=0 // loop_footer_branch
    %8 = sbr.rel target = $region3
  $region8: #{discriminator_forward.10} parent=0 // loop_exit
    _

// kernel: discriminator_forward.11
$region0: #{discriminator_forward.11}
  #allocation0 [shape = 'u32[]', space=smem, size = 0x4, offset = 0x4, fixed_abs, tag = 'smem constant byte address 0x4 - core index']
  #allocation1 [shape = 'u32[144,128]{1,0:T(1,128)}', space=vmem, size = 0x12000, scoped, tag = 'internal scratch']
  %s0 = inlined_call_operand.vmem [shape: bf16[64,1024], index: 0, kind: input, shape index: {}]
  %s1 = inlined_call_operand.vmem [shape: bf16[1024,128], index: 1, kind: input, shape index: {}]
  %s2 = inlined_call_operand.vmem [shape: bf16[64,128], index: 2, kind: output, shape index: {0}]
  %s3 = inlined_call_operand.vmem [shape: f32[2,2,128], index: 3, kind: output, shape index: {1}]
  %4 = xla_tuple %s2, %s3
  %s5 = sld [smem:[#allocation0]]
  $region49: #{discriminator_forward.11} parent=0
    _
  %s7 = ssub.s32 1, %s5
  %s8 = scalar_select 0, %s7, %s5
  loop: start=0, step=1, limit=4
  $region2: #{discriminator_forward.11} parent=0 // loop_pre_header
    _
  $region3: #{discriminator_forward.11} parent=0 // loop_header
    %s10 = sphi 0, %s14
    %p11 = scmp.ge.s32.totalorder %s10, 4
    %s20 = sphi 0, %s22
    %s23 = sphi 0, %s20
    %s24 = sphi 0, %s23
    %s40 = sphi 0, %s24
    %s44 = sphi 0, %s44
    %s46 = sphi 0, %s44
    %s47 = sphi 0, %s46
    %s61 = sphi 0, %s47
    %s67 = sphi 0, %s69
    %s70 = sphi 0, %s67
    %s71 = sphi 0, %s70
    %s87 = sphi 0, %s71
    %s93 = sphi 0, %s95
    %s96 = sphi 0, %s93
    %s97 = sphi 0, %s96
    %s113 = sphi 0, %s97
  $region4: #{discriminator_forward.11} parent=0 // loop_header_branch
    %13 = sbr.rel (%p11) target = $region8
  $region5: #{discriminator_forward.11} parent=0 // loop_body
    %s15 = ssub.s32 %s10, 1
    %s16 = ssub.s32 %s10, 2
    %s17 = sadd.s32 %s10, 1
    %s18 = ssub.s32 %s10, %s17
    %p19 = scmp.eq.s32.totalorder %s18, 0
    %s21 = sadd.s32 %s20, 1
    %s22 = scalar_select %p19, %s20, %s21
    %p25 = pneg %p19
    %p26 = scmp.eq.s32.totalorder %s10, 1
    %p27 = por %p25, %p26
    %p28 = scmp.ne.s32.totalorder %s20, %s23
    %p29 = scmp.eq.s32.totalorder %s10, 0
    %p30 = por %p28, %p29
    %p31 = scmp.ne.s32.totalorder %s20, %s23
    %p32 = scmp.eq.s32.totalorder %s15, 1
    %p33 = por %p31, %p32
    %p34 = scmp.ne.s32.totalorder %s23, %s24
    %p35 = scmp.eq.s32.totalorder %s15, 0
    %p36 = por %p34, %p35
    %p37 = scmp.ne.s32.totalorder %s23, %s24
    %p38 = scmp.eq.s32.totalorder %s16, 1
    %p39 = por %p37, %p38
    %p41 = scmp.ne.s32.totalorder %s24, %s40
    %p42 = scmp.eq.s32.totalorder %s16, 0
    %p43 = por %p41, %p42
    %s45 = sadd.s32 %s44, 1
    %p48 = scmp.eq.s32.totalorder %s10, 1
    %p49 = scmp.ne.s32.totalorder %s44, %s46
    %p50 = scmp.eq.s32.totalorder %s10, 0
    %p51 = por %p49, %p50
    %p52 = scmp.ne.s32.totalorder %s44, %s46
    %p53 = scmp.eq.s32.totalorder %s15, 1
    %p54 = por %p52, %p53
    %p55 = scmp.ne.s32.totalorder %s46, %s47
    %p56 = scmp.eq.s32.totalorder %s15, 0
    %p57 = por %p55, %p56
    %p58 = scmp.ne.s32.totalorder %s46, %s47
    %p59 = scmp.eq.s32.totalorder %s16, 1
    %p60 = por %p58, %p59
    %p62 = scmp.ne.s32.totalorder %s47, %s61
    %p63 = scmp.eq.s32.totalorder %s16, 0
    %p64 = por %p62, %p63
    %s65 = ssub.s32 %s10, %s17
    %p66 = scmp.eq.s32.totalorder %s65, 0
    %s68 = sadd.s32 %s67, 1
    %s69 = scalar_select %p66, %s67, %s68
    %p72 = pneg %p66
    %p73 = scmp.eq.s32.totalorder %s10, 1
    %p74 = por %p72, %p73
    %p75 = scmp.ne.s32.totalorder %s67, %s70
    %p76 = scmp.eq.s32.totalorder %s10, 0
    %p77 = por %p75, %p76
    %p78 = scmp.ne.s32.totalorder %s67, %s70
    %p79 = scmp.eq.s32.totalorder %s15, 1
    %p80 = por %p78, %p79
    %p81 = scmp.ne.s32.totalorder %s70, %s71
    %p82 = scmp.eq.s32.totalorder %s15, 0
    %p83 = por %p81, %p82
    %p84 = scmp.ne.s32.totalorder %s70, %s71
    %p85 = scmp.eq.s32.totalorder %s16, 1
    %p86 = por %p84, %p85
    %p88 = scmp.ne.s32.totalorder %s71, %s87
    %p89 = scmp.eq.s32.totalorder %s16, 0
    %p90 = por %p88, %p89
    %s91 = ssub.s32 %s10, %s17
    %p92 = scmp.eq.s32.totalorder %s91, 0
    %s94 = sadd.s32 %s93, 1
    %s95 = scalar_select %p92, %s93, %s94
    %p98 = pneg %p92
    %p99 = scmp.eq.s32.totalorder %s10, 1
    %p100 = por %p98, %p99
    %p101 = scmp.ne.s32.totalorder %s93, %s96
    %p102 = scmp.eq.s32.totalorder %s10, 0
    %p103 = por %p101, %p102
    %p104 = scmp.ne.s32.totalorder %s93, %s96
    %p105 = scmp.eq.s32.totalorder %s15, 1
    %p106 = por %p104, %p105
    %p107 = scmp.ne.s32.totalorder %s96, %s97
    %p108 = scmp.eq.s32.totalorder %s15, 0
    %p109 = por %p107, %p108
    %p110 = scmp.ne.s32.totalorder %s96, %s97
    %p111 = scmp.eq.s32.totalorder %s16, 1
    %p112 = por %p110, %p111
    %p114 = scmp.ne.s32.totalorder %s97, %s113
    %p115 = scmp.eq.s32.totalorder %s16, 0
    %p116 = por %p114, %p115
    %p117 = scmp.le.s32.totalorder 1, %s10
    %p118 = scmp.lt.s32.totalorder %s10, 3
    %p119 = pnand %p117, %p118
    %p120 = pneg %p119
    // Predicated region
    $region9: #{discriminator_forward.11} parent=5 // pred_check
      _
    $region10: #{discriminator_forward.11} parent=5 // pred_check_branch
      %122 = sbr.rel (%p119) target = $region12
    $region11: #{discriminator_forward.11} parent=5 // pred_region
      %s123 = ssub.s32 %s10, 1
      // Predicated region
      $region13: #{discriminator_forward.11} parent=11 // pred_check
        %p124 = pneg %p57
      $region14: #{discriminator_forward.11} parent=11 // pred_check_branch
        %126 = sbr.rel (%p124) target = $region16
      $region15: #{discriminator_forward.11} parent=11 // pred_region
        _
      $region16: #{discriminator_forward.11} parent=11 // pred_fallthru
        _
    $region12: #{discriminator_forward.11} parent=5 // pred_fallthru
      _
    %p127 = scmp.lt.s32.totalorder %s10, 2
    // Predicated region
    $region17: #{discriminator_forward.11} parent=5 // pred_check
      %p128 = pneg %p127
    $region18: #{discriminator_forward.11} parent=5 // pred_check_branch
      %130 = sbr.rel (%p128) target = $region20
    $region19: #{discriminator_forward.11} parent=5 // pred_region
      // Predicated region
      $region21: #{discriminator_forward.11} parent=19 // pred_check
        %p131 = pneg %p30
      $region22: #{discriminator_forward.11} parent=19 // pred_check_branch
        %133 = sbr.rel (%p131) target = $region24
      $region23: #{discriminator_forward.11} parent=19 // pred_region
        %s134 = smul.u32 4, %s10
        %p135 = scmp.lt.s32.totalorder %s134, 7
        %s136 = scalar_select %p135, %s134, 7
        %s137 = smul.addr %s136, 8
        %s138 = smul.addr %s137, 4
        %s139 = scalar_lea.vmem %s0, %s138
        %s140 = smul.u32 4, %s10
      $region24: #{discriminator_forward.11} parent=19 // pred_fallthru
        _
    $region20: #{discriminator_forward.11} parent=5 // pred_fallthru
      _
    %p141 = scmp.le.s32.totalorder 1, %s10
    %p142 = scmp.lt.s32.totalorder %s10, 3
    %p143 = pnand %p141, %p142
    %p144 = pneg %p143
    // Predicated region
    $region25: #{discriminator_forward.11} parent=5 // pred_check
      _
    $region26: #{discriminator_forward.11} parent=5 // pred_check_branch
      %146 = sbr.rel (%p143) target = $region28
    $region27: #{discriminator_forward.11} parent=5 // pred_region
      %s147 = ssub.s32 %s10, 1
      %s148 = smul.u32 4, %s15
      %p149 = scmp.lt.s32.totalorder %s148, 7
      %s150 = scalar_select %p149, %s148, 7
      %s151 = smul.addr %s150, 8
      %s152 = smul.addr %s151, 4
      %s153 = scalar_lea.vmem %s0, %s152
      %p154 = pneg %p36
      %p155 = pneg %p33
      %p156 = pneg %p57
      %p157 = pneg %p54
      %p158 = pneg %p83
      %p159 = pneg %p80
      %s160 = smul.u32 4, %s15
      %p161 = scmp.lt.s32.totalorder %s160, 7
      %s162 = scalar_select %p161, %s160, 7
      %s163 = smul.addr %s162, 4
      %s164 = scalar_lea.vmem %s2, %s163
      %p165 = pneg %p109
      %p166 = pneg %p106
      %p167 = scmp.lt.s32.totalorder %s15, 1
      %s168 = scalar_select %p167, %s15, 1
      %s169 = smul.addr %s168, 2
      %s170 = scalar_lea.vmem %s3, %s169
      %s171 = smul.u32 4, %s15
      %p172 = scmp.lt.s32.totalorder %s171, 7
      %s173 = scalar_select %p172, %s171, 7
      %s174 = smul.addr %s173, 8
      %s175 = smul.addr %s174, 4
      %s176 = scalar_lea.vmem %s0, %s175
      %s177 = smul.u32 4, %s15
      %s178 = smul.u32 4, %s15
      %p179 = scmp.lt.s32.totalorder %s178, 7
      %s180 = scalar_select %p179, %s178, 7
      %s181 = smul.addr %s180, 4
      %s182 = scalar_lea.vmem %s2, %s181
      %s183 = smul.u32 4, %s15
      %p184 = scmp.lt.s32.totalorder %s15, 1
      %s185 = scalar_select %p184, %s15, 1
      %s186 = smul.addr %s185, 2
      %s187 = scalar_lea.vmem %s3, %s186
      %v189 = vld [vmem:[%s176] sm:$0xff]
      %v190 = vld [vmem:[%s176 + $0x8] sm:$0xff]
      %v191 = vld [vmem:[%s176 + $0x10] sm:$0xff]
      %v192 = vld [vmem:[%s176 + $0x18] sm:$0xff]
      %v193 = vld [vmem:[%s176 + $0x20] sm:$0xff]
      %v194 = vld [vmem:[%s176 + $0x28] sm:$0xff]
      %v195 = vld [vmem:[%s176 + $0x30] sm:$0xff]
      %v196 = vld [vmem:[%s176 + $0x38] sm:$0xff]
      %v197 = vld [vmem:[%s176 + $0x40] sm:$0xff]
      %v198 = vld [vmem:[%s176 + $0x48] sm:$0xff]
      %v199 = vld [vmem:[%s176 + $0x50] sm:$0xff]
      %v200 = vld [vmem:[%s176 + $0x58] sm:$0xff]
      %v201 = vld [vmem:[%s176 + $0x60] sm:$0xff]
      %v202 = vld [vmem:[%s176 + $0x68] sm:$0xff]
      %v203 = vld [vmem:[%s176 + $0x70] sm:$0xff]
      %v204 = vld [vmem:[%s176 + $0x78] sm:$0xff]
      %v205 = vld [vmem:[%s1] sm:$0xf]
      %v206 = vld [vmem:[%s1 + $0x4] sm:$0xf]
      %v207 = vld [vmem:[%s1 + $0x8] sm:$0xf]
      %v208 = vld [vmem:[%s1 + $0xc] sm:$0xf]
      %v209 = vld [vmem:[%s1 + $0x10] sm:$0xf]
      %v210 = vld [vmem:[%s1 + $0x14] sm:$0xf]
      %v211 = vld [vmem:[%s1 + $0x18] sm:$0xf]
      %v212 = vld [vmem:[%s1 + $0x1c] sm:$0xf]
      %v213 = vld [vmem:[%s1 + $0x20] sm:$0xf]
      %v214 = vld [vmem:[%s1 + $0x24] sm:$0xf]
      %v215 = vld [vmem:[%s1 + $0x28] sm:$0xf]
      %v216 = vld [vmem:[%s1 + $0x2c] sm:$0xf]
      %v217 = vld [vmem:[%s1 + $0x30] sm:$0xf]
      %v218 = vld [vmem:[%s1 + $0x34] sm:$0xf]
      %v219 = vld [vmem:[%s1 + $0x38] sm:$0xf]
      %v220 = vld [vmem:[%s1 + $0x3c] sm:$0xf]
      %v221 = vld [vmem:[%s1 + $0x40] sm:$0xf]
      %v222 = vld [vmem:[%s1 + $0x44] sm:$0xf]
      %v223 = vld [vmem:[%s1 + $0x48] sm:$0xf]
      %v224 = vld [vmem:[%s1 + $0x4c] sm:$0xf]
      %v225 = vld [vmem:[%s1 + $0x50] sm:$0xf]
      %v226 = vld [vmem:[%s1 + $0x54] sm:$0xf]
      %v227 = vld [vmem:[%s1 + $0x58] sm:$0xf]
      %v228 = vld [vmem:[%s1 + $0x5c] sm:$0xf]
      %v229 = vld [vmem:[%s1 + $0x60] sm:$0xf]
      %v230 = vld [vmem:[%s1 + $0x64] sm:$0xf]
      %v231 = vld [vmem:[%s1 + $0x68] sm:$0xf]
      %v232 = vld [vmem:[%s1 + $0x6c] sm:$0xf]
      %v233 = vld [vmem:[%s1 + $0x70] sm:$0xf]
      %v234 = vld [vmem:[%s1 + $0x74] sm:$0xf]
      %v235 = vld [vmem:[%s1 + $0x78] sm:$0xf]
      %v236 = vld [vmem:[%s1 + $0x7c] sm:$0xf]
      %v237 = vld [vmem:[%s1 + $0x80] sm:$0xf]
      %v238 = vld [vmem:[%s1 + $0x84] sm:$0xf]
      %v239 = vld [vmem:[%s1 + $0x88] sm:$0xf]
      %v240 = vld [vmem:[%s1 + $0x8c] sm:$0xf]
      %v241 = vld [vmem:[%s1 + $0x90] sm:$0xf]
      %v242 = vld [vmem:[%s1 + $0x94] sm:$0xf]
      %v243 = vld [vmem:[%s1 + $0x98] sm:$0xf]
      %v244 = vld [vmem:[%s1 + $0x9c] sm:$0xf]
      %v245 = vld [vmem:[%s1 + $0xa0] sm:$0xf]
      %v246 = vld [vmem:[%s1 + $0xa4] sm:$0xf]
      %v247 = vld [vmem:[%s1 + $0xa8] sm:$0xf]
      %v248 = vld [vmem:[%s1 + $0xac] sm:$0xf]
      %v249 = vld [vmem:[%s1 + $0xb0] sm:$0xf]
      %v250 = vld [vmem:[%s1 + $0xb4] sm:$0xf]
      %v251 = vld [vmem:[%s1 + $0xb8] sm:$0xf]
      %v252 = vld [vmem:[%s1 + $0xbc] sm:$0xf]
      %v253 = vld [vmem:[%s1 + $0xc0] sm:$0xf]
      %v254 = vld [vmem:[%s1 + $0xc4] sm:$0xf]
      %v255 = vld [vmem:[%s1 + $0xc8] sm:$0xf]
      %v256 = vld [vmem:[%s1 + $0xcc] sm:$0xf]
      %v257 = vld [vmem:[%s1 + $0xd0] sm:$0xf]
      %v258 = vld [vmem:[%s1 + $0xd4] sm:$0xf]
      %v259 = vld [vmem:[%s1 + $0xd8] sm:$0xf]
      %v260 = vld [vmem:[%s1 + $0xdc] sm:$0xf]
      %v261 = vld [vmem:[%s1 + $0xe0] sm:$0xf]
      %v262 = vld [vmem:[%s1 + $0xe4] sm:$0xf]
      %v263 = vld [vmem:[%s1 + $0xe8] sm:$0xf]
      %v264 = vld [vmem:[%s1 + $0xec] sm:$0xf]
      %v265 = vld [vmem:[%s1 + $0xf0] sm:$0xf]
      %v266 = vld [vmem:[%s1 + $0xf4] sm:$0xf]
      %v267 = vld [vmem:[%s1 + $0xf8] sm:$0xf]
      %v268 = vld [vmem:[%s1 + $0xfc] sm:$0xf]
      %v269 = vld [vmem:[%s1 + $0x100] sm:$0xf]
      %v270 = vld [vmem:[%s1 + $0x104] sm:$0xf]
      %v271 = vld [vmem:[%s1 + $0x108] sm:$0xf]
      %v272 = vld [vmem:[%s1 + $0x10c] sm:$0xf]
      %v273 = vld [vmem:[%s1 + $0x110] sm:$0xf]
      %v274 = vld [vmem:[%s1 + $0x114] sm:$0xf]
      %v275 = vld [vmem:[%s1 + $0x118] sm:$0xf]
      %v276 = vld [vmem:[%s1 + $0x11c] sm:$0xf]
      %v277 = vld [vmem:[%s1 + $0x120] sm:$0xf]
      %v278 = vld [vmem:[%s1 + $0x124] sm:$0xf]
      %v279 = vld [vmem:[%s1 + $0x128] sm:$0xf]
      %v280 = vld [vmem:[%s1 + $0x12c] sm:$0xf]
      %v281 = vld [vmem:[%s1 + $0x130] sm:$0xf]
      %v282 = vld [vmem:[%s1 + $0x134] sm:$0xf]
      %v283 = vld [vmem:[%s1 + $0x138] sm:$0xf]
      %v284 = vld [vmem:[%s1 + $0x13c] sm:$0xf]
      %v285 = vld [vmem:[%s1 + $0x140] sm:$0xf]
      %v286 = vld [vmem:[%s1 + $0x144] sm:$0xf]
      %v287 = vld [vmem:[%s1 + $0x148] sm:$0xf]
      %v288 = vld [vmem:[%s1 + $0x14c] sm:$0xf]
      %v289 = vld [vmem:[%s1 + $0x150] sm:$0xf]
      %v290 = vld [vmem:[%s1 + $0x154] sm:$0xf]
      %v291 = vld [vmem:[%s1 + $0x158] sm:$0xf]
      %v292 = vld [vmem:[%s1 + $0x15c] sm:$0xf]
      %v293 = vld [vmem:[%s1 + $0x160] sm:$0xf]
      %v294 = vld [vmem:[%s1 + $0x164] sm:$0xf]
      %v295 = vld [vmem:[%s1 + $0x168] sm:$0xf]
      %v296 = vld [vmem:[%s1 + $0x16c] sm:$0xf]
      %v297 = vld [vmem:[%s1 + $0x170] sm:$0xf]
      %v298 = vld [vmem:[%s1 + $0x174] sm:$0xf]
      %v299 = vld [vmem:[%s1 + $0x178] sm:$0xf]
      %v300 = vld [vmem:[%s1 + $0x17c] sm:$0xf]
      %v301 = vld [vmem:[%s1 + $0x180] sm:$0xf]
      %v302 = vld [vmem:[%s1 + $0x184] sm:$0xf]
      %v303 = vld [vmem:[%s1 + $0x188] sm:$0xf]
      %v304 = vld [vmem:[%s1 + $0x18c] sm:$0xf]
      %v305 = vld [vmem:[%s1 + $0x190] sm:$0xf]
      %v306 = vld [vmem:[%s1 + $0x194] sm:$0xf]
      %v307 = vld [vmem:[%s1 + $0x198] sm:$0xf]
      %v308 = vld [vmem:[%s1 + $0x19c] sm:$0xf]
      %v309 = vld [vmem:[%s1 + $0x1a0] sm:$0xf]
      %v310 = vld [vmem:[%s1 + $0x1a4] sm:$0xf]
      %v311 = vld [vmem:[%s1 + $0x1a8] sm:$0xf]
      %v312 = vld [vmem:[%s1 + $0x1ac] sm:$0xf]
      %v313 = vld [vmem:[%s1 + $0x1b0] sm:$0xf]
      %v314 = vld [vmem:[%s1 + $0x1b4] sm:$0xf]
      %v315 = vld [vmem:[%s1 + $0x1b8] sm:$0xf]
      %v316 = vld [vmem:[%s1 + $0x1bc] sm:$0xf]
      %v317 = vld [vmem:[%s1 + $0x1c0] sm:$0xf]
      %v318 = vld [vmem:[%s1 + $0x1c4] sm:$0xf]
      %v319 = vld [vmem:[%s1 + $0x1c8] sm:$0xf]
      %v320 = vld [vmem:[%s1 + $0x1cc] sm:$0xf]
      %v321 = vld [vmem:[%s1 + $0x1d0] sm:$0xf]
      %v322 = vld [vmem:[%s1 + $0x1d4] sm:$0xf]
      %v323 = vld [vmem:[%s1 + $0x1d8] sm:$0xf]
      %v324 = vld [vmem:[%s1 + $0x1dc] sm:$0xf]
      %v325 = vld [vmem:[%s1 + $0x1e0] sm:$0xf]
      %v326 = vld [vmem:[%s1 + $0x1e4] sm:$0xf]
      %v327 = vld [vmem:[%s1 + $0x1e8] sm:$0xf]
      %v328 = vld [vmem:[%s1 + $0x1ec] sm:$0xf]
      %v329 = vld [vmem:[%s1 + $0x1f0] sm:$0xf]
      %v330 = vld [vmem:[%s1 + $0x1f4] sm:$0xf]
      %v331 = vld [vmem:[%s1 + $0x1f8] sm:$0xf]
      %v332 = vld [vmem:[%s1 + $0x1fc] sm:$0xf]
      %v349 = vunpack.c.l.b16 %v189
      %v350 = vunpack.c.h.b16 %v189
      %v351 = vunpack.c.l.b16 %v190
      %v352 = vunpack.c.h.b16 %v190
      %v353 = vunpack.c.l.b16 %v191
      %v354 = vunpack.c.h.b16 %v191
      %v355 = vunpack.c.l.b16 %v192
      %v356 = vunpack.c.h.b16 %v192
      %v357 = vunpack.c.l.b16 %v193
      %v358 = vunpack.c.h.b16 %v193
      %v359 = vunpack.c.l.b16 %v194
      %v360 = vunpack.c.h.b16 %v194
      %v361 = vunpack.c.l.b16 %v195
      %v362 = vunpack.c.h.b16 %v195
      %v363 = vunpack.c.l.b16 %v196
      %v364 = vunpack.c.h.b16 %v196
      %v365 = vunpack.c.l.b16 %v197
      %v366 = vunpack.c.h.b16 %v197
      %v367 = vunpack.c.l.b16 %v198
      %v368 = vunpack.c.h.b16 %v198
      %v369 = vunpack.c.l.b16 %v199
      %v370 = vunpack.c.h.b16 %v199
      %v371 = vunpack.c.l.b16 %v200
      %v372 = vunpack.c.h.b16 %v200
      %v373 = vunpack.c.l.b16 %v201
      %v374 = vunpack.c.h.b16 %v201
      %v375 = vunpack.c.l.b16 %v202
      %v376 = vunpack.c.h.b16 %v202
      %v377 = vunpack.c.l.b16 %v203
      %v378 = vunpack.c.h.b16 %v203
      %v379 = vunpack.c.l.b16 %v204
      %v380 = vunpack.c.h.b16 %v204
      %v381 = vpack.c.b16 %v357, %v349
      %v382 = vpack.c.b16 %v358, %v350
      %v383 = vpack.c.b16 %v359, %v351
      %v384 = vpack.c.b16 %v360, %v352
      %v385 = vpack.c.b16 %v361, %v353
      %v386 = vpack.c.b16 %v362, %v354
      %v387 = vpack.c.b16 %v363, %v355
      %v388 = vpack.c.b16 %v364, %v356
      %v389 = vpack.c.b16 %v373, %v365
      %v390 = vpack.c.b16 %v374, %v366
      %v391 = vpack.c.b16 %v375, %v367
      %v392 = vpack.c.b16 %v376, %v368
      %v393 = vpack.c.b16 %v377, %v369
      %v394 = vpack.c.b16 %v378, %v370
      %v395 = vpack.c.b16 %v379, %v371
      %v396 = vpack.c.b16 %v380, %v372
      %v541 = vunpack.c.l.b16 %v205
      %v542 = vunpack.c.l.b16 %v206
      %v543 = vunpack.c.l.b16 %v207
      %v544 = vunpack.c.l.b16 %v208
      %v545 = vunpack.c.l.b16 %v209
      %v546 = vunpack.c.l.b16 %v210
      %v547 = vunpack.c.l.b16 %v211
      %v548 = vunpack.c.l.b16 %v212
      %v549 = vunpack.c.l.b16 %v213
      %v550 = vunpack.c.l.b16 %v214
      %v551 = vunpack.c.l.b16 %v215
      %v552 = vunpack.c.l.b16 %v216
      %v553 = vunpack.c.l.b16 %v217
      %v554 = vunpack.c.l.b16 %v218
      %v555 = vunpack.c.l.b16 %v219
      %v556 = vunpack.c.l.b16 %v220
      %v557 = vunpack.c.l.b16 %v221
      %v558 = vunpack.c.l.b16 %v222
      %v559 = vunpack.c.l.b16 %v223
      %v560 = vunpack.c.l.b16 %v224
      %v561 = vunpack.c.l.b16 %v225
      %v562 = vunpack.c.l.b16 %v226
      %v563 = vunpack.c.l.b16 %v227
      %v564 = vunpack.c.l.b16 %v228
      %v565 = vunpack.c.l.b16 %v229
      %v566 = vunpack.c.l.b16 %v230
      %v567 = vunpack.c.l.b16 %v231
      %v568 = vunpack.c.l.b16 %v232
      %v569 = vunpack.c.l.b16 %v233
      %v570 = vunpack.c.l.b16 %v234
      %v571 = vunpack.c.l.b16 %v235
      %v572 = vunpack.c.l.b16 %v236
      %v573 = vunpack.c.l.b16 %v237
      %v574 = vunpack.c.l.b16 %v238
      %v575 = vunpack.c.l.b16 %v239
      %v576 = vunpack.c.l.b16 %v240
      %v577 = vunpack.c.l.b16 %v241
      %v578 = vunpack.c.l.b16 %v242
      %v579 = vunpack.c.l.b16 %v243
      %v580 = vunpack.c.l.b16 %v244
      %v581 = vunpack.c.l.b16 %v245
      %v582 = vunpack.c.l.b16 %v246
      %v583 = vunpack.c.l.b16 %v247
      %v584 = vunpack.c.l.b16 %v248
      %v585 = vunpack.c.l.b16 %v249
      %v586 = vunpack.c.l.b16 %v250
      %v587 = vunpack.c.l.b16 %v251
      %v588 = vunpack.c.l.b16 %v252
      %v589 = vunpack.c.l.b16 %v253
      %v590 = vunpack.c.l.b16 %v254
      %v591 = vunpack.c.l.b16 %v255
      %v592 = vunpack.c.l.b16 %v256
      %v593 = vunpack.c.l.b16 %v257
      %v594 = vunpack.c.l.b16 %v258
      %v595 = vunpack.c.l.b16 %v259
      %v596 = vunpack.c.l.b16 %v260
      %v597 = vunpack.c.l.b16 %v261
      %v598 = vunpack.c.l.b16 %v262
      %v599 = vunpack.c.l.b16 %v263
      %v600 = vunpack.c.l.b16 %v264
      %v601 = vunpack.c.l.b16 %v265
      %v602 = vunpack.c.l.b16 %v266
      %v603 = vunpack.c.l.b16 %v267
      %v604 = vunpack.c.l.b16 %v268
      %v605 = vunpack.c.l.b16 %v269
      %v606 = vunpack.c.l.b16 %v270
      %v607 = vunpack.c.l.b16 %v271
      %v608 = vunpack.c.l.b16 %v272
      %v609 = vunpack.c.l.b16 %v273
      %v610 = vunpack.c.l.b16 %v274
      %v611 = vunpack.c.l.b16 %v275
      %v612 = vunpack.c.l.b16 %v276
      %v613 = vunpack.c.l.b16 %v277
      %v614 = vunpack.c.l.b16 %v278
      %v615 = vunpack.c.l.b16 %v279
      %v616 = vunpack.c.l.b16 %v280
      %v617 = vunpack.c.l.b16 %v281
      %v618 = vunpack.c.l.b16 %v282
      %v619 = vunpack.c.l.b16 %v283
      %v620 = vunpack.c.l.b16 %v284
      %v621 = vunpack.c.l.b16 %v285
      %v622 = vunpack.c.l.b16 %v286
      %v623 = vunpack.c.l.b16 %v287
      %v624 = vunpack.c.l.b16 %v288
      %v625 = vunpack.c.l.b16 %v289
      %v626 = vunpack.c.l.b16 %v290
      %v627 = vunpack.c.l.b16 %v291
      %v628 = vunpack.c.l.b16 %v292
      %v629 = vunpack.c.l.b16 %v293
      %v630 = vunpack.c.l.b16 %v294
      %v631 = vunpack.c.l.b16 %v295
      %v632 = vunpack.c.l.b16 %v296
      %v633 = vunpack.c.l.b16 %v297
      %v634 = vunpack.c.l.b16 %v298
      %v635 = vunpack.c.l.b16 %v299
      %v636 = vunpack.c.l.b16 %v300
      %v637 = vunpack.c.l.b16 %v301
      %v638 = vunpack.c.l.b16 %v302
      %v639 = vunpack.c.l.b16 %v303
      %v640 = vunpack.c.l.b16 %v304
      %v641 = vunpack.c.l.b16 %v305
      %v642 = vunpack.c.l.b16 %v306
      %v643 = vunpack.c.l.b16 %v307
      %v644 = vunpack.c.l.b16 %v308
      %v645 = vunpack.c.l.b16 %v309
      %v646 = vunpack.c.l.b16 %v310
      %v647 = vunpack.c.l.b16 %v311
      %v648 = vunpack.c.l.b16 %v312
      %v649 = vunpack.c.l.b16 %v313
      %v650 = vunpack.c.l.b16 %v314
      %v651 = vunpack.c.l.b16 %v315
      %v652 = vunpack.c.l.b16 %v316
      %v653 = vunpack.c.l.b16 %v317
      %v654 = vunpack.c.l.b16 %v318
      %v655 = vunpack.c.l.b16 %v319
      %v656 = vunpack.c.l.b16 %v320
      %v657 = vunpack.c.l.b16 %v321
      %v658 = vunpack.c.l.b16 %v322
      %v659 = vunpack.c.l.b16 %v323
      %v660 = vunpack.c.l.b16 %v324
      %v661 = vunpack.c.l.b16 %v325
      %v662 = vunpack.c.l.b16 %v326
      %v663 = vunpack.c.l.b16 %v327
      %v664 = vunpack.c.l.b16 %v328
      %v665 = vunpack.c.l.b16 %v329
      %v666 = vunpack.c.l.b16 %v330
      %v667 = vunpack.c.l.b16 %v331
      %v668 = vunpack.c.l.b16 %v332
      %v669 = vpack.c.b16 %v542, %v541
      %v670 = vpack.c.b16 %v544, %v543
      %v671 = vpack.c.b16 %v546, %v545
      %v672 = vpack.c.b16 %v548, %v547
      %v673 = vpack.c.b16 %v550, %v549
      %v674 = vpack.c.b16 %v552, %v551
      %v675 = vpack.c.b16 %v554, %v553
      %v676 = vpack.c.b16 %v556, %v555
      %v677 = vpack.c.b16 %v558, %v557
      %v678 = vpack.c.b16 %v560, %v559
      %v679 = vpack.c.b16 %v562, %v561
      %v680 = vpack.c.b16 %v564, %v563
      %v681 = vpack.c.b16 %v566, %v565
      %v682 = vpack.c.b16 %v568, %v567
      %v683 = vpack.c.b16 %v570, %v569
      %v684 = vpack.c.b16 %v572, %v571
      %v685 = vpack.c.b16 %v574, %v573
      %v686 = vpack.c.b16 %v576, %v575
      %v687 = vpack.c.b16 %v578, %v577
      %v688 = vpack.c.b16 %v580, %v579
      %v689 = vpack.c.b16 %v582, %v581
      %v690 = vpack.c.b16 %v584, %v583
      %v691 = vpack.c.b16 %v586, %v585
      %v692 = vpack.c.b16 %v588, %v587
      %v693 = vpack.c.b16 %v590, %v589
      %v694 = vpack.c.b16 %v592, %v591
      %v695 = vpack.c.b16 %v594, %v593
      %v696 = vpack.c.b16 %v596, %v595
      %v697 = vpack.c.b16 %v598, %v597
      %v698 = vpack.c.b16 %v600, %v599
      %v699 = vpack.c.b16 %v602, %v601
      %v700 = vpack.c.b16 %v604, %v603
      %v701 = vpack.c.b16 %v606, %v605
      %v702 = vpack.c.b16 %v608, %v607
      %v703 = vpack.c.b16 %v610, %v609
      %v704 = vpack.c.b16 %v612, %v611
      %v705 = vpack.c.b16 %v614, %v613
      %v706 = vpack.c.b16 %v616, %v615
      %v707 = vpack.c.b16 %v618, %v617
      %v708 = vpack.c.b16 %v620, %v619
      %v709 = vpack.c.b16 %v622, %v621
      %v710 = vpack.c.b16 %v624, %v623
      %v711 = vpack.c.b16 %v626, %v625
      %v712 = vpack.c.b16 %v628, %v627
      %v713 = vpack.c.b16 %v630, %v629
      %v714 = vpack.c.b16 %v632, %v631
      %v715 = vpack.c.b16 %v634, %v633
      %v716 = vpack.c.b16 %v636, %v635
      %v717 = vpack.c.b16 %v638, %v637
      %v718 = vpack.c.b16 %v640, %v639
      %v719 = vpack.c.b16 %v642, %v641
      %v720 = vpack.c.b16 %v644, %v643
      %v721 = vpack.c.b16 %v646, %v645
      %v722 = vpack.c.b16 %v648, %v647
      %v723 = vpack.c.b16 %v650, %v649
      %v724 = vpack.c.b16 %v652, %v651
      %v725 = vpack.c.b16 %v654, %v653
      %v726 = vpack.c.b16 %v656, %v655
      %v727 = vpack.c.b16 %v658, %v657
      %v728 = vpack.c.b16 %v660, %v659
      %v729 = vpack.c.b16 %v662, %v661
      %v730 = vpack.c.b16 %v664, %v663
      %v731 = vpack.c.b16 %v666, %v665
      %v732 = vpack.c.b16 %v668, %v667
      %797 = vmatprep.subr.bf16.mxu0 0
      %798 = vmatpush1.bf16.msra.mxu0 %v676
      %799 = vmatprep.subr.bf16.mxu0 0
      %800 = vmatpush1.bf16.msra.mxu0 %v675
      %801 = vmatprep.subr.bf16.mxu0 0
      %802 = vmatpush1.bf16.msra.mxu0 %v674
      %803 = vmatprep.subr.bf16.mxu0 0
      %804 = vmatpush1.bf16.msra.mxu0 %v673
      %805 = vmatprep.subr.bf16.mxu0 0
      %806 = vmatpush1.bf16.msra.mxu0 %v672
      %807 = vmatprep.subr.bf16.mxu0 0
      %808 = vmatpush1.bf16.msra.mxu0 %v671
      %809 = vmatprep.subr.bf16.mxu0 0
      %810 = vmatpush1.bf16.msra.mxu0 %v670
      %811 = vmatprep.subr.bf16.mxu0 0
      %812 = vmatpush1.bf16.msra.mxu0 %v669
      %813 = vmatprep.subr.bf16.mxu0 0
      %814 = vmatpush2.bf16.msra.mxu0 %v684
      %815 = vmatprep.subr.bf16.mxu0 0
      %816 = vmatpush2.bf16.msra.mxu0 %v683
      %817 = vmatprep.subr.bf16.mxu0 0
      %818 = vmatpush2.bf16.msra.mxu0 %v682
      %819 = vmatprep.subr.bf16.mxu0 0
      %820 = vmatpush2.bf16.msra.mxu0 %v681
      %821 = vmatprep.subr.bf16.mxu0 0
      %822 = vmatpush2.bf16.msra.mxu0 %v680
      %823 = vmatprep.subr.bf16.mxu0 0
      %824 = vmatpush2.bf16.msra.mxu0 %v679
      %825 = vmatprep.subr.bf16.mxu0 0
      %826 = vmatpush2.bf16.msra.mxu0 %v678
      %827 = vmatprep.subr.bf16.mxu0 0
      %828 = vmatpush2.bf16.msra.mxu0 %v677
      %829 = vmatprep.mubr.bf16.mxu0 %v382
      %830 = vmatmul.mubr.bf16.gmra.mxu0 %v381
      %v831 = vpop.f32.mrf.mxu0
      %v832 = vadd.f32 0.0, %v831
      %v833 = vpop.f32.mrf.mxu0
      %v834 = vpop.f32.mrf.mxu0
      %v835 = vadd.f32 0.0, %v834
      %v836 = vpop.f32.mrf.mxu0
      %837 = vmatprep.mubr.bf16.mxu0 %v390
      %838 = vmatmul.mubr.bf16.gmra.mxu0 %v389
      %v839 = vpop.f32.mrf.mxu0
      %v840 = vadd.f32 0.0, %v839
      %v841 = vpop.f32.mrf.mxu0
      %v842 = vpop.f32.mrf.mxu0
      %v843 = vadd.f32 0.0, %v842
      %v844 = vpop.f32.mrf.mxu0
      %845 = vdwg.mxu0
      %846 = vmatprep.subr.bf16.mxu0 0
      %847 = vmatpush1.bf16.msra.mxu0 %v692
      %848 = vmatprep.subr.bf16.mxu0 0
      %849 = vmatpush1.bf16.msra.mxu0 %v691
      %850 = vmatprep.subr.bf16.mxu0 0
      %851 = vmatpush1.bf16.msra.mxu0 %v690
      %852 = vmatprep.subr.bf16.mxu0 0
      %853 = vmatpush1.bf16.msra.mxu0 %v689
      %854 = vmatprep.subr.bf16.mxu0 0
      %855 = vmatpush1.bf16.msra.mxu0 %v688
      %856 = vmatprep.subr.bf16.mxu0 0
      %857 = vmatpush1.bf16.msra.mxu0 %v687
      %858 = vmatprep.subr.bf16.mxu0 0
      %859 = vmatpush1.bf16.msra.mxu0 %v686
      %860 = vmatprep.subr.bf16.mxu0 0
      %861 = vmatpush1.bf16.msra.mxu0 %v685
      %862 = vmatprep.subr.bf16.mxu0 0
      %863 = vmatpush2.bf16.msra.mxu0 %v700
      %864 = vmatprep.subr.bf16.mxu0 0
      %865 = vmatpush2.bf16.msra.mxu0 %v699
      %866 = vmatprep.subr.bf16.mxu0 0
      %867 = vmatpush2.bf16.msra.mxu0 %v698
      %868 = vmatprep.subr.bf16.mxu0 0
      %869 = vmatpush2.bf16.msra.mxu0 %v697
      %870 = vmatprep.subr.bf16.mxu0 0
      %871 = vmatpush2.bf16.msra.mxu0 %v696
      %872 = vmatprep.subr.bf16.mxu0 0
      %873 = vmatpush2.bf16.msra.mxu0 %v695
      %874 = vmatprep.subr.bf16.mxu0 0
      %875 = vmatpush2.bf16.msra.mxu0 %v694
      %876 = vmatprep.subr.bf16.mxu0 0
      %877 = vmatpush2.bf16.msra.mxu0 %v693
      %878 = vmatprep.mubr.bf16.mxu0 %v384
      %879 = vmatmul.mubr.bf16.gmra.mxu0 %v383
      %v880 = vpop.f32.mrf.mxu0
      %v881 = vadd.f32 %v832, %v880
      %v882 = vpop.f32.mrf.mxu0
      %v883 = vpop.f32.mrf.mxu0
      %v884 = vadd.f32 %v835, %v883
      %v885 = vpop.f32.mrf.mxu0
      %886 = vmatprep.mubr.bf16.mxu0 %v392
      %887 = vmatmul.mubr.bf16.gmra.mxu0 %v391
      %v888 = vpop.f32.mrf.mxu0
      %v889 = vadd.f32 %v840, %v888
      %v890 = vpop.f32.mrf.mxu0
      %v891 = vpop.f32.mrf.mxu0
      %v892 = vadd.f32 %v843, %v891
      %v893 = vpop.f32.mrf.mxu0
      %894 = vdwg.mxu0
      %895 = vmatprep.subr.bf16.mxu0 0
      %896 = vmatpush1.bf16.msra.mxu0 %v708
      %897 = vmatprep.subr.bf16.mxu0 0
      %898 = vmatpush1.bf16.msra.mxu0 %v707
      %899 = vmatprep.subr.bf16.mxu0 0
      %900 = vmatpush1.bf16.msra.mxu0 %v706
      %901 = vmatprep.subr.bf16.mxu0 0
      %902 = vmatpush1.bf16.msra.mxu0 %v705
      %903 = vmatprep.subr.bf16.mxu0 0
      %904 = vmatpush1.bf16.msra.mxu0 %v704
      %905 = vmatprep.subr.bf16.mxu0 0
      %906 = vmatpush1.bf16.msra.mxu0 %v703
      %907 = vmatprep.subr.bf16.mxu0 0
      %908 = vmatpush1.bf16.msra.mxu0 %v702
      %909 = vmatprep.subr.bf16.mxu0 0
      %910 = vmatpush1.bf16.msra.mxu0 %v701
      %911 = vmatprep.subr.bf16.mxu0 0
      %912 = vmatpush2.bf16.msra.mxu0 %v716
      %913 = vmatprep.subr.bf16.mxu0 0
      %914 = vmatpush2.bf16.msra.mxu0 %v715
      %915 = vmatprep.subr.bf16.mxu0 0
      %916 = vmatpush2.bf16.msra.mxu0 %v714
      %917 = vmatprep.subr.bf16.mxu0 0
      %918 = vmatpush2.bf16.msra.mxu0 %v713
      %919 = vmatprep.subr.bf16.mxu0 0
      %920 = vmatpush2.bf16.msra.mxu0 %v712
      %921 = vmatprep.subr.bf16.mxu0 0
      %922 = vmatpush2.bf16.msra.mxu0 %v711
      %923 = vmatprep.subr.bf16.mxu0 0
      %924 = vmatpush2.bf16.msra.mxu0 %v710
      %925 = vmatprep.subr.bf16.mxu0 0
      %926 = vmatpush2.bf16.msra.mxu0 %v709
      %927 = vmatprep.mubr.bf16.mxu0 %v386
      %928 = vmatmul.mubr.bf16.gmra.mxu0 %v385
      %v929 = vpop.f32.mrf.mxu0
      %v930 = vadd.f32 %v881, %v929
      %v931 = vpop.f32.mrf.mxu0
      %v932 = vpop.f32.mrf.mxu0
      %v933 = vadd.f32 %v884, %v932
      %v934 = vpop.f32.mrf.mxu0
      %935 = vmatprep.mubr.bf16.mxu0 %v394
      %936 = vmatmul.mubr.bf16.gmra.mxu0 %v393
      %v937 = vpop.f32.mrf.mxu0
      %v938 = vadd.f32 %v889, %v937
      %v939 = vpop.f32.mrf.mxu0
      %v940 = vpop.f32.mrf.mxu0
      %v941 = vadd.f32 %v892, %v940
      %v942 = vpop.f32.mrf.mxu0
      %943 = vdwg.mxu0
      %944 = vmatprep.subr.bf16.mxu0 0
      %945 = vmatpush1.bf16.msra.mxu0 %v724
      %946 = vmatprep.subr.bf16.mxu0 0
      %947 = vmatpush1.bf16.msra.mxu0 %v723
      %948 = vmatprep.subr.bf16.mxu0 0
      %949 = vmatpush1.bf16.msra.mxu0 %v722
      %950 = vmatprep.subr.bf16.mxu0 0
      %951 = vmatpush1.bf16.msra.mxu0 %v721
      %952 = vmatprep.subr.bf16.mxu0 0
      %953 = vmatpush1.bf16.msra.mxu0 %v720
      %954 = vmatprep.subr.bf16.mxu0 0
      %955 = vmatpush1.bf16.msra.mxu0 %v719
      %956 = vmatprep.subr.bf16.mxu0 0
      %957 = vmatpush1.bf16.msra.mxu0 %v718
      %958 = vmatprep.subr.bf16.mxu0 0
      %959 = vmatpush1.bf16.msra.mxu0 %v717
      %960 = vmatprep.subr.bf16.mxu0 0
      %961 = vmatpush2.bf16.msra.mxu0 %v732
      %962 = vmatprep.subr.bf16.mxu0 0
      %963 = vmatpush2.bf16.msra.mxu0 %v731
      %964 = vmatprep.subr.bf16.mxu0 0
      %965 = vmatpush2.bf16.msra.mxu0 %v730
      %966 = vmatprep.subr.bf16.mxu0 0
      %967 = vmatpush2.bf16.msra.mxu0 %v729
      %968 = vmatprep.subr.bf16.mxu0 0
      %969 = vmatpush2.bf16.msra.mxu0 %v728
      %970 = vmatprep.subr.bf16.mxu0 0
      %971 = vmatpush2.bf16.msra.mxu0 %v727
      %972 = vmatprep.subr.bf16.mxu0 0
      %973 = vmatpush2.bf16.msra.mxu0 %v726
      %974 = vmatprep.subr.bf16.mxu0 0
      %975 = vmatpush2.bf16.msra.mxu0 %v725
      %976 = vmatprep.mubr.bf16.mxu0 %v388
      %977 = vmatmul.mubr.bf16.gmra.mxu0 %v387
      %v978 = vpop.f32.mrf.mxu0
      %v979 = vadd.f32 %v930, %v978
      %v980 = vpop.f32.mrf.mxu0
      %v981 = vpop.f32.mrf.mxu0
      %v982 = vadd.f32 %v933, %v981
      %v983 = vpop.f32.mrf.mxu0
      %984 = vmatprep.mubr.bf16.mxu0 %v396
      %985 = vmatmul.mubr.bf16.gmra.mxu0 %v395
      %v986 = vpop.f32.mrf.mxu0
      %v987 = vadd.f32 %v938, %v986
      %v988 = vpop.f32.mrf.mxu0
      %v989 = vpop.f32.mrf.mxu0
      %v990 = vadd.f32 %v941, %v989
      %v991 = vpop.f32.mrf.mxu0
      %992 = vdwg.mxu0
      %v993 = vadd.f32 %v979, %v982
      %v994 = vadd.f32 %v993, %v987
      %v995 = vadd.f32 %v994, %v990
      %v996 = vrot.slane %v995, 4
      %v997 = vadd.f32 %v995, %v996
      %v998 = vrot.slane %v997, 2
      %v999 = vadd.f32 %v997, %v998
      %v1000 = vrot.slane %v999, 1
      %v1001 = vadd.f32 %v999, %v1000
      %1002 = vst [vmem:[%s187] sm:$0x1] %v1001
      %v1003 = vmul.f32 %v979, %v979
      %v1004 = vmul.f32 %v982, %v982
      %v1005 = vmul.f32 %v987, %v987
      %v1006 = vmul.f32 %v990, %v990
      %v1007 = vadd.f32 %v1003, %v1004
      %v1008 = vadd.f32 %v1007, %v1005
      %v1009 = vadd.f32 %v1008, %v1006
      %v1010 = vrot.slane %v1009, 4
      %v1011 = vadd.f32 %v1009, %v1010
      %v1012 = vrot.slane %v1011, 2
      %v1013 = vadd.f32 %v1011, %v1012
      %v1014 = vrot.slane %v1013, 1
      %v1015 = vadd.f32 %v1013, %v1014
      %1016 = vst [vmem:[%s187 + $0x1] sm:$0x1] %v1015
      %v1017 = vpack.c.bf16 %v982, %v979
      %v1018 = vpack.c.bf16 %v990, %v987
      %v1021 = vunpack.c.l.b16 %v1017
      %v1022 = vunpack.c.h.b16 %v1017
      %v1023 = vunpack.c.l.b16 %v1018
      %v1024 = vunpack.c.h.b16 %v1018
      %v1025 = vpack.c.b16 %v1021, %v1021
      %v1026 = vpack.c.b16 %v1022, %v1022
      %v1027 = vpack.c.b16 %v1023, %v1023
      %v1028 = vpack.c.b16 %v1024, %v1024
      %1033 = vst [vmem:[%s182] sm:$0xf] %v1025
      %1034 = vst [vmem:[%s182 + $0x4] sm:$0xf] %v1026
      %1035 = vst [vmem:[%s182 + $0x8] sm:$0xf] %v1027
      %1036 = vst [vmem:[%s182 + $0xc] sm:$0xf] %v1028
      %s1037 = smul.u32 4, %s15
      %p1038 = scmp.lt.s32.totalorder %s1037, 7
      %s1039 = scalar_select %p1038, %s1037, 7
      %s1040 = smul.addr %s1039, 4
      %s1041 = scalar_lea.vmem %s2, %s1040
      %p1042 = scmp.lt.s32.totalorder %s15, 1
      %s1043 = scalar_select %p1042, %s15, 1
      %s1044 = smul.addr %s1043, 2
      %s1045 = scalar_lea.vmem %s3, %s1044
      // Predicated region
      $region29: #{discriminator_forward.11} parent=27 // pred_check
        %p1046 = pneg %p80
      $region30: #{discriminator_forward.11} parent=27 // pred_check_branch
        %1048 = sbr.rel (%p1046) target = $region32
      $region31: #{discriminator_forward.11} parent=27 // pred_region
        %s1049 = smul.u32 4, %s15
      $region32: #{discriminator_forward.11} parent=27 // pred_fallthru
        _
      // Predicated region
      $region33: #{discriminator_forward.11} parent=27 // pred_check
        %p1050 = pneg %p106
      $region34: #{discriminator_forward.11} parent=27 // pred_check_branch
        %1052 = sbr.rel (%p1050) target = $region36
      $region35: #{discriminator_forward.11} parent=27 // pred_region
        _
      $region36: #{discriminator_forward.11} parent=27 // pred_fallthru
        _
    $region28: #{discriminator_forward.11} parent=5 // pred_fallthru
      _
    %p1053 = scmp.le.s32.totalorder 2, %s10
    // Predicated region
    $region37: #{discriminator_forward.11} parent=5 // pred_check
      %p1054 = pneg %p1053
    $region38: #{discriminator_forward.11} parent=5 // pred_check_branch
      %1056 = sbr.rel (%p1054) target = $region40
    $region39: #{discriminator_forward.11} parent=5 // pred_region
      %s1057 = ssub.s32 %s10, 2
      // Predicated region
      $region41: #{discriminator_forward.11} parent=39 // pred_check
        %p1058 = pneg %p86
      $region42: #{discriminator_forward.11} parent=39 // pred_check_branch
        %1060 = sbr.rel (%p1058) target = $region44
      $region43: #{discriminator_forward.11} parent=39 // pred_region
        %s1061 = smul.u32 4, %s16
        %p1062 = scmp.lt.s32.totalorder %s1061, 7
        %s1063 = scalar_select %p1062, %s1061, 7
        %s1064 = smul.addr %s1063, 4
        %s1065 = scalar_lea.vmem %s2, %s1064
      $region44: #{discriminator_forward.11} parent=39 // pred_fallthru
        _
      // Predicated region
      $region45: #{discriminator_forward.11} parent=39 // pred_check
        %p1066 = pneg %p112
      $region46: #{discriminator_forward.11} parent=39 // pred_check_branch
        %1068 = sbr.rel (%p1066) target = $region48
      $region47: #{discriminator_forward.11} parent=39 // pred_region
        %p1069 = scmp.lt.s32.totalorder %s16, 1
        %s1070 = scalar_select %p1069, %s16, 1
        %s1071 = smul.addr %s1070, 2
        %s1072 = scalar_lea.vmem %s3, %s1071
      $region48: #{discriminator_forward.11} parent=39 // pred_fallthru
        _
    $region40: #{discriminator_forward.11} parent=5 // pred_fallthru
      _
  $region6: #{discriminator_forward.11} parent=0 // loop_footer
    %s14 = sadd.s32 1, %s10
  $region7: #{discriminator_forward.11} parent=0 // loop_footer_branch
    %9 = sbr.rel target = $region3
  $region8: #{discriminator_forward.11} parent=0 // loop_exit
    _

// kernel: discriminator_forward.12
$region0: #{discriminator_forward.12}
  #allocation0 [shape = 'u32[]', space=smem, size = 0x4, offset = 0x4, fixed_abs, tag = 'smem constant byte address 0x4 - core index']
  #allocation1 [shape = 'u32[144,128]{1,0:T(1,128)}', space=vmem, size = 0x12000, scoped, tag = 'internal scratch']
  %s0 = inlined_call_operand.vmem [shape: bf16[64,128], index: 0, kind: input, shape index: {}]
  %s1 = inlined_call_operand.vmem [shape: f32[1,128], index: 1, kind: input, shape index: {}]
  %s2 = inlined_call_operand.vmem [shape: f32[1,128], index: 2, kind: input, shape index: {}]
  %s3 = inlined_call_operand.vmem [shape: bf16[64,128], index: 3, kind: output, shape index: {}]
  %s4 = sld [smem:[#allocation0]]
  $region45: #{discriminator_forward.12} parent=0
    _
  %s6 = ssub.s32 1, %s4
  %s7 = scalar_select 0, %s6, %s4
  loop: start=0, step=1, limit=4
  $region2: #{discriminator_forward.12} parent=0 // loop_pre_header
    _
  $region3: #{discriminator_forward.12} parent=0 // loop_header
    %s9 = sphi 0, %s13
    %p10 = scmp.ge.s32.totalorder %s9, 4
    %s19 = sphi 0, %s21
    %s22 = sphi 0, %s19
    %s23 = sphi 0, %s22
    %s39 = sphi 0, %s23
    %s43 = sphi 0, %s43
    %s45 = sphi 0, %s43
    %s46 = sphi 0, %s45
    %s60 = sphi 0, %s46
    %s64 = sphi 0, %s64
    %s66 = sphi 0, %s64
    %s67 = sphi 0, %s66
    %s81 = sphi 0, %s67
    %s87 = sphi 0, %s89
    %s90 = sphi 0, %s87
    %s91 = sphi 0, %s90
    %s107 = sphi 0, %s91
  $region4: #{discriminator_forward.12} parent=0 // loop_header_branch
    %12 = sbr.rel (%p10) target = $region8
  $region5: #{discriminator_forward.12} parent=0 // loop_body
    %s14 = ssub.s32 %s9, 1
    %s15 = ssub.s32 %s9, 2
    %s16 = sadd.s32 %s9, 1
    %s17 = ssub.s32 %s9, %s16
    %p18 = scmp.eq.s32.totalorder %s17, 0
    %s20 = sadd.s32 %s19, 1
    %s21 = scalar_select %p18, %s19, %s20
    %p24 = pneg %p18
    %p25 = scmp.eq.s32.totalorder %s9, 1
    %p26 = por %p24, %p25
    %p27 = scmp.ne.s32.totalorder %s19, %s22
    %p28 = scmp.eq.s32.totalorder %s9, 0
    %p29 = por %p27, %p28
    %p30 = scmp.ne.s32.totalorder %s19, %s22
    %p31 = scmp.eq.s32.totalorder %s14, 1
    %p32 = por %p30, %p31
    %p33 = scmp.ne.s32.totalorder %s22, %s23
    %p34 = scmp.eq.s32.totalorder %s14, 0
    %p35 = por %p33, %p34
    %p36 = scmp.ne.s32.totalorder %s22, %s23
    %p37 = scmp.eq.s32.totalorder %s15, 1
    %p38 = por %p36, %p37
    %p40 = scmp.ne.s32.totalorder %s23, %s39
    %p41 = scmp.eq.s32.totalorder %s15, 0
    %p42 = por %p40, %p41
    %s44 = sadd.s32 %s43, 1
    %p47 = scmp.eq.s32.totalorder %s9, 1
    %p48 = scmp.ne.s32.totalorder %s43, %s45
    %p49 = scmp.eq.s32.totalorder %s9, 0
    %p50 = por %p48, %p49
    %p51 = scmp.ne.s32.totalorder %s43, %s45
    %p52 = scmp.eq.s32.totalorder %s14, 1
    %p53 = por %p51, %p52
    %p54 = scmp.ne.s32.totalorder %s45, %s46
    %p55 = scmp.eq.s32.totalorder %s14, 0
    %p56 = por %p54, %p55
    %p57 = scmp.ne.s32.totalorder %s45, %s46
    %p58 = scmp.eq.s32.totalorder %s15, 1
    %p59 = por %p57, %p58
    %p61 = scmp.ne.s32.totalorder %s46, %s60
    %p62 = scmp.eq.s32.totalorder %s15, 0
    %p63 = por %p61, %p62
    %s65 = sadd.s32 %s64, 1
    %p68 = scmp.eq.s32.totalorder %s9, 1
    %p69 = scmp.ne.s32.totalorder %s64, %s66
    %p70 = scmp.eq.s32.totalorder %s9, 0
    %p71 = por %p69, %p70
    %p72 = scmp.ne.s32.totalorder %s64, %s66
    %p73 = scmp.eq.s32.totalorder %s14, 1
    %p74 = por %p72, %p73
    %p75 = scmp.ne.s32.totalorder %s66, %s67
    %p76 = scmp.eq.s32.totalorder %s14, 0
    %p77 = por %p75, %p76
    %p78 = scmp.ne.s32.totalorder %s66, %s67
    %p79 = scmp.eq.s32.totalorder %s15, 1
    %p80 = por %p78, %p79
    %p82 = scmp.ne.s32.totalorder %s67, %s81
    %p83 = scmp.eq.s32.totalorder %s15, 0
    %p84 = por %p82, %p83
    %s85 = ssub.s32 %s9, %s16
    %p86 = scmp.eq.s32.totalorder %s85, 0
    %s88 = sadd.s32 %s87, 1
    %s89 = scalar_select %p86, %s87, %s88
    %p92 = pneg %p86
    %p93 = scmp.eq.s32.totalorder %s9, 1
    %p94 = por %p92, %p93
    %p95 = scmp.ne.s32.totalorder %s87, %s90
    %p96 = scmp.eq.s32.totalorder %s9, 0
    %p97 = por %p95, %p96
    %p98 = scmp.ne.s32.totalorder %s87, %s90
    %p99 = scmp.eq.s32.totalorder %s14, 1
    %p100 = por %p98, %p99
    %p101 = scmp.ne.s32.totalorder %s90, %s91
    %p102 = scmp.eq.s32.totalorder %s14, 0
    %p103 = por %p101, %p102
    %p104 = scmp.ne.s32.totalorder %s90, %s91
    %p105 = scmp.eq.s32.totalorder %s15, 1
    %p106 = por %p104, %p105
    %p108 = scmp.ne.s32.totalorder %s91, %s107
    %p109 = scmp.eq.s32.totalorder %s15, 0
    %p110 = por %p108, %p109
    %p111 = scmp.le.s32.totalorder 1, %s9
    %p112 = scmp.lt.s32.totalorder %s9, 3
    %p113 = pnand %p111, %p112
    %p114 = pneg %p113
    // Predicated region
    $region9: #{discriminator_forward.12} parent=5 // pred_check
      _
    $region10: #{discriminator_forward.12} parent=5 // pred_check_branch
      %116 = sbr.rel (%p113) target = $region12
    $region11: #{discriminator_forward.12} parent=5 // pred_region
      %s117 = ssub.s32 %s9, 1
      // Predicated region
      $region13: #{discriminator_forward.12} parent=11 // pred_check
        %p118 = pneg %p56
      $region14: #{discriminator_forward.12} parent=11 // pred_check_branch
        %120 = sbr.rel (%p118) target = $region16
      $region15: #{discriminator_forward.12} parent=11 // pred_region
        _
      $region16: #{discriminator_forward.12} parent=11 // pred_fallthru
        _
      // Predicated region
      $region17: #{discriminator_forward.12} parent=11 // pred_check
        %p121 = pneg %p77
      $region18: #{discriminator_forward.12} parent=11 // pred_check_branch
        %123 = sbr.rel (%p121) target = $region20
      $region19: #{discriminator_forward.12} parent=11 // pred_region
        _
      $region20: #{discriminator_forward.12} parent=11 // pred_fallthru
        _
    $region12: #{discriminator_forward.12} parent=5 // pred_fallthru
      _
    %p124 = scmp.lt.s32.totalorder %s9, 2
    // Predicated region
    $region21: #{discriminator_forward.12} parent=5 // pred_check
      %p125 = pneg %p124
    $region22: #{discriminator_forward.12} parent=5 // pred_check_branch
      %127 = sbr.rel (%p125) target = $region24
    $region23: #{discriminator_forward.12} parent=5 // pred_region
      // Predicated region
      $region25: #{discriminator_forward.12} parent=23 // pred_check
        %p128 = pneg %p29
      $region26: #{discriminator_forward.12} parent=23 // pred_check_branch
        %130 = sbr.rel (%p128) target = $region28
      $region27: #{discriminator_forward.12} parent=23 // pred_region
        %s131 = smul.u32 4, %s9
        %p132 = scmp.lt.s32.totalorder %s131, 7
        %s133 = scalar_select %p132, %s131, 7
        %s134 = smul.addr %s133, 4
        %s135 = scalar_lea.vmem %s0, %s134
        %s136 = smul.u32 4, %s9
      $region28: #{discriminator_forward.12} parent=23 // pred_fallthru
        _
    $region24: #{discriminator_forward.12} parent=5 // pred_fallthru
      _
    %p137 = scmp.le.s32.totalorder 1, %s9
    %p138 = scmp.lt.s32.totalorder %s9, 3
    %p139 = pnand %p137, %p138
    %p140 = pneg %p139
    // Predicated region
    $region29: #{discriminator_forward.12} parent=5 // pred_check
      _
    $region30: #{discriminator_forward.12} parent=5 // pred_check_branch
      %142 = sbr.rel (%p139) target = $region32
    $region31: #{discriminator_forward.12} parent=5 // pred_region
      %s143 = ssub.s32 %s9, 1
      %s144 = smul.u32 4, %s14
      %p145 = scmp.lt.s32.totalorder %s144, 7
      %s146 = scalar_select %p145, %s144, 7
      %s147 = smul.addr %s146, 4
      %s148 = scalar_lea.vmem %s0, %s147
      %p149 = pneg %p35
      %p150 = pneg %p32
      %p151 = pneg %p56
      %p152 = pneg %p53
      %p153 = pneg %p77
      %p154 = pneg %p74
      %p155 = pneg %p103
      %p156 = pneg %p100
      %s157 = smul.u32 4, %s14
      %p158 = scmp.lt.s32.totalorder %s157, 7
      %s159 = scalar_select %p158, %s157, 7
      %s160 = smul.addr %s159, 4
      %s161 = scalar_lea.vmem %s3, %s160
      %s162 = smul.u32 4, %s14
      %p163 = scmp.lt.s32.totalorder %s162, 7
      %s164 = scalar_select %p163, %s162, 7
      %s165 = smul.addr %s164, 4
      %s166 = scalar_lea.vmem %s0, %s165
      %s167 = smul.u32 4, %s14
      %s168 = smul.u32 4, %s14
      %p169 = scmp.lt.s32.totalorder %s168, 7
      %s170 = scalar_select %p169, %s168, 7
      %s171 = smul.addr %s170, 4
      %s172 = scalar_lea.vmem %s3, %s171
      %s173 = smul.u32 4, %s14
      %v174 = vld [vmem:[%s166] sm:$0xf]
      %v175 = vld [vmem:[%s166 + $0x4] sm:$0xf]
      %v176 = vld [vmem:[%s166 + $0x8] sm:$0xf]
      %v177 = vld [vmem:[%s166 + $0xc] sm:$0xf]
      %v178 = vunpack.c.l.bf16 %v174
      %v179 = vunpack.c.l.bf16 %v175
      %v180 = vunpack.c.l.bf16 %v176
      %v181 = vunpack.c.l.bf16 %v177
      %v182 = vld [vmem:[%s1] sm:$0x1]
      %v184 = vlaneseq
      %v185 = vshrl.u32 %v184, 7
      %v186 = vsub.s32 0, %v185
      %v187 = vrot.slane %v182, %v186
      %v189 = vmul.f32 %v178, %v187
      %v190 = vmul.f32 %v179, %v187
      %v191 = vmul.f32 %v180, %v187
      %v192 = vmul.f32 %v181, %v187
      %v193 = vld [vmem:[%s2] sm:$0x1]
      %v195 = vlaneseq
      %v196 = vshrl.u32 %v195, 7
      %v197 = vsub.s32 0, %v196
      %v198 = vrot.slane %v193, %v197
      %v200 = vadd.f32 %v189, %v198
      %v201 = vadd.f32 %v190, %v198
      %v202 = vadd.f32 %v191, %v198
      %v203 = vadd.f32 %v192, %v198
      %vm204 = vcmp.ge.f32.partialorder %v200, 0.0
      %vm205 = vcmp.ge.f32.partialorder %v201, 0.0
      %vm206 = vcmp.ge.f32.partialorder %v202, 0.0
      %vm207 = vcmp.ge.f32.partialorder %v203, 0.0
      %v208 = vmul.f32 %v200, 0.01
      %v209 = vmul.f32 %v201, 0.01
      %v210 = vmul.f32 %v202, 0.01
      %v211 = vmul.f32 %v203, 0.01
      %v212 = vsel %vm204, %v200, %v208
      %v213 = vsel %vm205, %v201, %v209
      %v214 = vsel %vm206, %v202, %v210
      %v215 = vsel %vm207, %v203, %v211
      %v216 = vpack.c.bf16 %v213, %v212
      %v217 = vpack.c.bf16 %v215, %v214
      %v220 = vunpack.c.l.b16 %v216
      %v221 = vunpack.c.h.b16 %v216
      %v222 = vunpack.c.l.b16 %v217
      %v223 = vunpack.c.h.b16 %v217
      %v224 = vpack.c.b16 %v220, %v220
      %v225 = vpack.c.b16 %v221, %v221
      %v226 = vpack.c.b16 %v222, %v222
      %v227 = vpack.c.b16 %v223, %v223
      %232 = vst [vmem:[%s172] sm:$0xf] %v224
      %233 = vst [vmem:[%s172 + $0x4] sm:$0xf] %v225
      %234 = vst [vmem:[%s172 + $0x8] sm:$0xf] %v226
      %235 = vst [vmem:[%s172 + $0xc] sm:$0xf] %v227
      %s236 = smul.u32 4, %s14
      %p237 = scmp.lt.s32.totalorder %s236, 7
      %s238 = scalar_select %p237, %s236, 7
      %s239 = smul.addr %s238, 4
      %s240 = scalar_lea.vmem %s3, %s239
      // Predicated region
      $region33: #{discriminator_forward.12} parent=31 // pred_check
        %p241 = pneg %p100
      $region34: #{discriminator_forward.12} parent=31 // pred_check_branch
        %243 = sbr.rel (%p241) target = $region36
      $region35: #{discriminator_forward.12} parent=31 // pred_region
        %s244 = smul.u32 4, %s14
      $region36: #{discriminator_forward.12} parent=31 // pred_fallthru
        _
    $region32: #{discriminator_forward.12} parent=5 // pred_fallthru
      _
    %p245 = scmp.le.s32.totalorder 2, %s9
    // Predicated region
    $region37: #{discriminator_forward.12} parent=5 // pred_check
      %p246 = pneg %p245
    $region38: #{discriminator_forward.12} parent=5 // pred_check_branch
      %248 = sbr.rel (%p246) target = $region40
    $region39: #{discriminator_forward.12} parent=5 // pred_region
      %s249 = ssub.s32 %s9, 2
      // Predicated region
      $region41: #{discriminator_forward.12} parent=39 // pred_check
        %p250 = pneg %p106
      $region42: #{discriminator_forward.12} parent=39 // pred_check_branch
        %252 = sbr.rel (%p250) target = $region44
      $region43: #{discriminator_forward.12} parent=39 // pred_region
        %s253 = smul.u32 4, %s15
        %p254 = scmp.lt.s32.totalorder %s253, 7
        %s255 = scalar_select %p254, %s253, 7
        %s256 = smul.addr %s255, 4
        %s257 = scalar_lea.vmem %s3, %s256
      $region44: #{discriminator_forward.12} parent=39 // pred_fallthru
        _
    $region40: #{discriminator_forward.12} parent=5 // pred_fallthru
      _
  $region6: #{discriminator_forward.12} parent=0 // loop_footer
    %s13 = sadd.s32 1, %s9
  $region7: #{discriminator_forward.12} parent=0 // loop_footer_branch
    %8 = sbr.rel target = $region3
  $region8: #{discriminator_forward.12} parent=0 // loop_exit
    _

// kernel: discriminator_forward.13
$region0: #{discriminator_forward.13}
  #allocation0 [shape = 'u32[]', space=smem, size = 0x4, offset = 0x4, fixed_abs, tag = 'smem constant byte address 0x4 - core index']
  #allocation1 [shape = 'u32[144,128]{1,0:T(1,128)}', space=vmem, size = 0x12000, scoped, tag = 'internal scratch']
  %s0 = inlined_call_operand.vmem [shape: bf16[32,1024], index: 0, kind: input, shape index: {}]
  %s1 = inlined_call_operand.vmem [shape: bf16[1024,128], index: 1, kind: input, shape index: {}]
  %s2 = inlined_call_operand.vmem [shape: bf16[32,128], index: 2, kind: output, shape index: {0}]
  %s3 = inlined_call_operand.vmem [shape: f32[2,2,128], index: 3, kind: output, shape index: {1}]
  %4 = xla_tuple %s2, %s3
  %s5 = sld [smem:[#allocation0]]
  $region49: #{discriminator_forward.13} parent=0
    _
  %s7 = ssub.s32 1, %s5
  %s8 = scalar_select 0, %s7, %s5
  loop: start=0, step=1, limit=4
  $region2: #{discriminator_forward.13} parent=0 // loop_pre_header
    _
  $region3: #{discriminator_forward.13} parent=0 // loop_header
    %s10 = sphi 0, %s14
    %p11 = scmp.ge.s32.totalorder %s10, 4
    %s20 = sphi 0, %s22
    %s23 = sphi 0, %s20
    %s24 = sphi 0, %s23
    %s40 = sphi 0, %s24
    %s44 = sphi 0, %s44
    %s46 = sphi 0, %s44
    %s47 = sphi 0, %s46
    %s61 = sphi 0, %s47
    %s67 = sphi 0, %s69
    %s70 = sphi 0, %s67
    %s71 = sphi 0, %s70
    %s87 = sphi 0, %s71
    %s93 = sphi 0, %s95
    %s96 = sphi 0, %s93
    %s97 = sphi 0, %s96
    %s113 = sphi 0, %s97
  $region4: #{discriminator_forward.13} parent=0 // loop_header_branch
    %13 = sbr.rel (%p11) target = $region8
  $region5: #{discriminator_forward.13} parent=0 // loop_body
    %s15 = ssub.s32 %s10, 1
    %s16 = ssub.s32 %s10, 2
    %s17 = sadd.s32 %s10, 1
    %s18 = ssub.s32 %s10, %s17
    %p19 = scmp.eq.s32.totalorder %s18, 0
    %s21 = sadd.s32 %s20, 1
    %s22 = scalar_select %p19, %s20, %s21
    %p25 = pneg %p19
    %p26 = scmp.eq.s32.totalorder %s10, 1
    %p27 = por %p25, %p26
    %p28 = scmp.ne.s32.totalorder %s20, %s23
    %p29 = scmp.eq.s32.totalorder %s10, 0
    %p30 = por %p28, %p29
    %p31 = scmp.ne.s32.totalorder %s20, %s23
    %p32 = scmp.eq.s32.totalorder %s15, 1
    %p33 = por %p31, %p32
    %p34 = scmp.ne.s32.totalorder %s23, %s24
    %p35 = scmp.eq.s32.totalorder %s15, 0
    %p36 = por %p34, %p35
    %p37 = scmp.ne.s32.totalorder %s23, %s24
    %p38 = scmp.eq.s32.totalorder %s16, 1
    %p39 = por %p37, %p38
    %p41 = scmp.ne.s32.totalorder %s24, %s40
    %p42 = scmp.eq.s32.totalorder %s16, 0
    %p43 = por %p41, %p42
    %s45 = sadd.s32 %s44, 1
    %p48 = scmp.eq.s32.totalorder %s10, 1
    %p49 = scmp.ne.s32.totalorder %s44, %s46
    %p50 = scmp.eq.s32.totalorder %s10, 0
    %p51 = por %p49, %p50
    %p52 = scmp.ne.s32.totalorder %s44, %s46
    %p53 = scmp.eq.s32.totalorder %s15, 1
    %p54 = por %p52, %p53
    %p55 = scmp.ne.s32.totalorder %s46, %s47
    %p56 = scmp.eq.s32.totalorder %s15, 0
    %p57 = por %p55, %p56
    %p58 = scmp.ne.s32.totalorder %s46, %s47
    %p59 = scmp.eq.s32.totalorder %s16, 1
    %p60 = por %p58, %p59
    %p62 = scmp.ne.s32.totalorder %s47, %s61
    %p63 = scmp.eq.s32.totalorder %s16, 0
    %p64 = por %p62, %p63
    %s65 = ssub.s32 %s10, %s17
    %p66 = scmp.eq.s32.totalorder %s65, 0
    %s68 = sadd.s32 %s67, 1
    %s69 = scalar_select %p66, %s67, %s68
    %p72 = pneg %p66
    %p73 = scmp.eq.s32.totalorder %s10, 1
    %p74 = por %p72, %p73
    %p75 = scmp.ne.s32.totalorder %s67, %s70
    %p76 = scmp.eq.s32.totalorder %s10, 0
    %p77 = por %p75, %p76
    %p78 = scmp.ne.s32.totalorder %s67, %s70
    %p79 = scmp.eq.s32.totalorder %s15, 1
    %p80 = por %p78, %p79
    %p81 = scmp.ne.s32.totalorder %s70, %s71
    %p82 = scmp.eq.s32.totalorder %s15, 0
    %p83 = por %p81, %p82
    %p84 = scmp.ne.s32.totalorder %s70, %s71
    %p85 = scmp.eq.s32.totalorder %s16, 1
    %p86 = por %p84, %p85
    %p88 = scmp.ne.s32.totalorder %s71, %s87
    %p89 = scmp.eq.s32.totalorder %s16, 0
    %p90 = por %p88, %p89
    %s91 = ssub.s32 %s10, %s17
    %p92 = scmp.eq.s32.totalorder %s91, 0
    %s94 = sadd.s32 %s93, 1
    %s95 = scalar_select %p92, %s93, %s94
    %p98 = pneg %p92
    %p99 = scmp.eq.s32.totalorder %s10, 1
    %p100 = por %p98, %p99
    %p101 = scmp.ne.s32.totalorder %s93, %s96
    %p102 = scmp.eq.s32.totalorder %s10, 0
    %p103 = por %p101, %p102
    %p104 = scmp.ne.s32.totalorder %s93, %s96
    %p105 = scmp.eq.s32.totalorder %s15, 1
    %p106 = por %p104, %p105
    %p107 = scmp.ne.s32.totalorder %s96, %s97
    %p108 = scmp.eq.s32.totalorder %s15, 0
    %p109 = por %p107, %p108
    %p110 = scmp.ne.s32.totalorder %s96, %s97
    %p111 = scmp.eq.s32.totalorder %s16, 1
    %p112 = por %p110, %p111
    %p114 = scmp.ne.s32.totalorder %s97, %s113
    %p115 = scmp.eq.s32.totalorder %s16, 0
    %p116 = por %p114, %p115
    %p117 = scmp.le.s32.totalorder 1, %s10
    %p118 = scmp.lt.s32.totalorder %s10, 3
    %p119 = pnand %p117, %p118
    %p120 = pneg %p119
    // Predicated region
    $region9: #{discriminator_forward.13} parent=5 // pred_check
      _
    $region10: #{discriminator_forward.13} parent=5 // pred_check_branch
      %122 = sbr.rel (%p119) target = $region12
    $region11: #{discriminator_forward.13} parent=5 // pred_region
      %s123 = ssub.s32 %s10, 1
      // Predicated region
      $region13: #{discriminator_forward.13} parent=11 // pred_check
        %p124 = pneg %p57
      $region14: #{discriminator_forward.13} parent=11 // pred_check_branch
        %126 = sbr.rel (%p124) target = $region16
      $region15: #{discriminator_forward.13} parent=11 // pred_region
        _
      $region16: #{discriminator_forward.13} parent=11 // pred_fallthru
        _
    $region12: #{discriminator_forward.13} parent=5 // pred_fallthru
      _
    %p127 = scmp.lt.s32.totalorder %s10, 2
    // Predicated region
    $region17: #{discriminator_forward.13} parent=5 // pred_check
      %p128 = pneg %p127
    $region18: #{discriminator_forward.13} parent=5 // pred_check_branch
      %130 = sbr.rel (%p128) target = $region20
    $region19: #{discriminator_forward.13} parent=5 // pred_region
      // Predicated region
      $region21: #{discriminator_forward.13} parent=19 // pred_check
        %p131 = pneg %p30
      $region22: #{discriminator_forward.13} parent=19 // pred_check_branch
        %133 = sbr.rel (%p131) target = $region24
      $region23: #{discriminator_forward.13} parent=19 // pred_region
        %s134 = smul.u32 2, %s10
        %p135 = scmp.lt.s32.totalorder %s134, 3
        %s136 = scalar_select %p135, %s134, 3
        %s137 = smul.addr %s136, 8
        %s138 = smul.addr %s137, 4
        %s139 = scalar_lea.vmem %s0, %s138
        %s140 = smul.u32 2, %s10
      $region24: #{discriminator_forward.13} parent=19 // pred_fallthru
        _
    $region20: #{discriminator_forward.13} parent=5 // pred_fallthru
      _
    %p141 = scmp.le.s32.totalorder 1, %s10
    %p142 = scmp.lt.s32.totalorder %s10, 3
    %p143 = pnand %p141, %p142
    %p144 = pneg %p143
    // Predicated region
    $region25: #{discriminator_forward.13} parent=5 // pred_check
      _
    $region26: #{discriminator_forward.13} parent=5 // pred_check_branch
      %146 = sbr.rel (%p143) target = $region28
    $region27: #{discriminator_forward.13} parent=5 // pred_region
      %s147 = ssub.s32 %s10, 1
      %s148 = smul.u32 2, %s15
      %p149 = scmp.lt.s32.totalorder %s148, 3
      %s150 = scalar_select %p149, %s148, 3
      %s151 = smul.addr %s150, 8
      %s152 = smul.addr %s151, 4
      %s153 = scalar_lea.vmem %s0, %s152
      %p154 = pneg %p36
      %p155 = pneg %p33
      %p156 = pneg %p57
      %p157 = pneg %p54
      %p158 = pneg %p83
      %p159 = pneg %p80
      %s160 = smul.u32 2, %s15
      %p161 = scmp.lt.s32.totalorder %s160, 3
      %s162 = scalar_select %p161, %s160, 3
      %s163 = smul.addr %s162, 4
      %s164 = scalar_lea.vmem %s2, %s163
      %p165 = pneg %p109
      %p166 = pneg %p106
      %p167 = scmp.lt.s32.totalorder %s15, 1
      %s168 = scalar_select %p167, %s15, 1
      %s169 = smul.addr %s168, 2
      %s170 = scalar_lea.vmem %s3, %s169
      %s171 = smul.u32 2, %s15
      %p172 = scmp.lt.s32.totalorder %s171, 3
      %s173 = scalar_select %p172, %s171, 3
      %s174 = smul.addr %s173, 8
      %s175 = smul.addr %s174, 4
      %s176 = scalar_lea.vmem %s0, %s175
      %s177 = smul.u32 2, %s15
      %s178 = smul.u32 2, %s15
      %p179 = scmp.lt.s32.totalorder %s178, 3
      %s180 = scalar_select %p179, %s178, 3
      %s181 = smul.addr %s180, 4
      %s182 = scalar_lea.vmem %s2, %s181
      %s183 = smul.u32 2, %s15
      %p184 = scmp.lt.s32.totalorder %s15, 1
      %s185 = scalar_select %p184, %s15, 1
      %s186 = smul.addr %s185, 2
      %s187 = scalar_lea.vmem %s3, %s186
      %v189 = vld [vmem:[%s176] sm:$0xff]
      %v190 = vld [vmem:[%s176 + $0x8] sm:$0xff]
      %v191 = vld [vmem:[%s176 + $0x10] sm:$0xff]
      %v192 = vld [vmem:[%s176 + $0x18] sm:$0xff]
      %v193 = vld [vmem:[%s176 + $0x20] sm:$0xff]
      %v194 = vld [vmem:[%s176 + $0x28] sm:$0xff]
      %v195 = vld [vmem:[%s176 + $0x30] sm:$0xff]
      %v196 = vld [vmem:[%s176 + $0x38] sm:$0xff]
      %v197 = vld [vmem:[%s1] sm:$0xf]
      %v198 = vld [vmem:[%s1 + $0x4] sm:$0xf]
      %v199 = vld [vmem:[%s1 + $0x8] sm:$0xf]
      %v200 = vld [vmem:[%s1 + $0xc] sm:$0xf]
      %v201 = vld [vmem:[%s1 + $0x10] sm:$0xf]
      %v202 = vld [vmem:[%s1 + $0x14] sm:$0xf]
      %v203 = vld [vmem:[%s1 + $0x18] sm:$0xf]
      %v204 = vld [vmem:[%s1 + $0x1c] sm:$0xf]
      %v205 = vld [vmem:[%s1 + $0x20] sm:$0xf]
      %v206 = vld [vmem:[%s1 + $0x24] sm:$0xf]
      %v207 = vld [vmem:[%s1 + $0x28] sm:$0xf]
      %v208 = vld [vmem:[%s1 + $0x2c] sm:$0xf]
      %v209 = vld [vmem:[%s1 + $0x30] sm:$0xf]
      %v210 = vld [vmem:[%s1 + $0x34] sm:$0xf]
      %v211 = vld [vmem:[%s1 + $0x38] sm:$0xf]
      %v212 = vld [vmem:[%s1 + $0x3c] sm:$0xf]
      %v213 = vld [vmem:[%s1 + $0x40] sm:$0xf]
      %v214 = vld [vmem:[%s1 + $0x44] sm:$0xf]
      %v215 = vld [vmem:[%s1 + $0x48] sm:$0xf]
      %v216 = vld [vmem:[%s1 + $0x4c] sm:$0xf]
      %v217 = vld [vmem:[%s1 + $0x50] sm:$0xf]
      %v218 = vld [vmem:[%s1 + $0x54] sm:$0xf]
      %v219 = vld [vmem:[%s1 + $0x58] sm:$0xf]
      %v220 = vld [vmem:[%s1 + $0x5c] sm:$0xf]
      %v221 = vld [vmem:[%s1 + $0x60] sm:$0xf]
      %v222 = vld [vmem:[%s1 + $0x64] sm:$0xf]
      %v223 = vld [vmem:[%s1 + $0x68] sm:$0xf]
      %v224 = vld [vmem:[%s1 + $0x6c] sm:$0xf]
      %v225 = vld [vmem:[%s1 + $0x70] sm:$0xf]
      %v226 = vld [vmem:[%s1 + $0x74] sm:$0xf]
      %v227 = vld [vmem:[%s1 + $0x78] sm:$0xf]
      %v228 = vld [vmem:[%s1 + $0x7c] sm:$0xf]
      %v229 = vld [vmem:[%s1 + $0x80] sm:$0xf]
      %v230 = vld [vmem:[%s1 + $0x84] sm:$0xf]
      %v231 = vld [vmem:[%s1 + $0x88] sm:$0xf]
      %v232 = vld [vmem:[%s1 + $0x8c] sm:$0xf]
      %v233 = vld [vmem:[%s1 + $0x90] sm:$0xf]
      %v234 = vld [vmem:[%s1 + $0x94] sm:$0xf]
      %v235 = vld [vmem:[%s1 + $0x98] sm:$0xf]
      %v236 = vld [vmem:[%s1 + $0x9c] sm:$0xf]
      %v237 = vld [vmem:[%s1 + $0xa0] sm:$0xf]
      %v238 = vld [vmem:[%s1 + $0xa4] sm:$0xf]
      %v239 = vld [vmem:[%s1 + $0xa8] sm:$0xf]
      %v240 = vld [vmem:[%s1 + $0xac] sm:$0xf]
      %v241 = vld [vmem:[%s1 + $0xb0] sm:$0xf]
      %v242 = vld [vmem:[%s1 + $0xb4] sm:$0xf]
      %v243 = vld [vmem:[%s1 + $0xb8] sm:$0xf]
      %v244 = vld [vmem:[%s1 + $0xbc] sm:$0xf]
      %v245 = vld [vmem:[%s1 + $0xc0] sm:$0xf]
      %v246 = vld [vmem:[%s1 + $0xc4] sm:$0xf]
      %v247 = vld [vmem:[%s1 + $0xc8] sm:$0xf]
      %v248 = vld [vmem:[%s1 + $0xcc] sm:$0xf]
      %v249 = vld [vmem:[%s1 + $0xd0] sm:$0xf]
      %v250 = vld [vmem:[%s1 + $0xd4] sm:$0xf]
      %v251 = vld [vmem:[%s1 + $0xd8] sm:$0xf]
      %v252 = vld [vmem:[%s1 + $0xdc] sm:$0xf]
      %v253 = vld [vmem:[%s1 + $0xe0] sm:$0xf]
      %v254 = vld [vmem:[%s1 + $0xe4] sm:$0xf]
      %v255 = vld [vmem:[%s1 + $0xe8] sm:$0xf]
      %v256 = vld [vmem:[%s1 + $0xec] sm:$0xf]
      %v257 = vld [vmem:[%s1 + $0xf0] sm:$0xf]
      %v258 = vld [vmem:[%s1 + $0xf4] sm:$0xf]
      %v259 = vld [vmem:[%s1 + $0xf8] sm:$0xf]
      %v260 = vld [vmem:[%s1 + $0xfc] sm:$0xf]
      %v261 = vld [vmem:[%s1 + $0x100] sm:$0xf]
      %v262 = vld [vmem:[%s1 + $0x104] sm:$0xf]
      %v263 = vld [vmem:[%s1 + $0x108] sm:$0xf]
      %v264 = vld [vmem:[%s1 + $0x10c] sm:$0xf]
      %v265 = vld [vmem:[%s1 + $0x110] sm:$0xf]
      %v266 = vld [vmem:[%s1 + $0x114] sm:$0xf]
      %v267 = vld [vmem:[%s1 + $0x118] sm:$0xf]
      %v268 = vld [vmem:[%s1 + $0x11c] sm:$0xf]
      %v269 = vld [vmem:[%s1 + $0x120] sm:$0xf]
      %v270 = vld [vmem:[%s1 + $0x124] sm:$0xf]
      %v271 = vld [vmem:[%s1 + $0x128] sm:$0xf]
      %v272 = vld [vmem:[%s1 + $0x12c] sm:$0xf]
      %v273 = vld [vmem:[%s1 + $0x130] sm:$0xf]
      %v274 = vld [vmem:[%s1 + $0x134] sm:$0xf]
      %v275 = vld [vmem:[%s1 + $0x138] sm:$0xf]
      %v276 = vld [vmem:[%s1 + $0x13c] sm:$0xf]
      %v277 = vld [vmem:[%s1 + $0x140] sm:$0xf]
      %v278 = vld [vmem:[%s1 + $0x144] sm:$0xf]
      %v279 = vld [vmem:[%s1 + $0x148] sm:$0xf]
      %v280 = vld [vmem:[%s1 + $0x14c] sm:$0xf]
      %v281 = vld [vmem:[%s1 + $0x150] sm:$0xf]
      %v282 = vld [vmem:[%s1 + $0x154] sm:$0xf]
      %v283 = vld [vmem:[%s1 + $0x158] sm:$0xf]
      %v284 = vld [vmem:[%s1 + $0x15c] sm:$0xf]
      %v285 = vld [vmem:[%s1 + $0x160] sm:$0xf]
      %v286 = vld [vmem:[%s1 + $0x164] sm:$0xf]
      %v287 = vld [vmem:[%s1 + $0x168] sm:$0xf]
      %v288 = vld [vmem:[%s1 + $0x16c] sm:$0xf]
      %v289 = vld [vmem:[%s1 + $0x170] sm:$0xf]
      %v290 = vld [vmem:[%s1 + $0x174] sm:$0xf]
      %v291 = vld [vmem:[%s1 + $0x178] sm:$0xf]
      %v292 = vld [vmem:[%s1 + $0x17c] sm:$0xf]
      %v293 = vld [vmem:[%s1 + $0x180] sm:$0xf]
      %v294 = vld [vmem:[%s1 + $0x184] sm:$0xf]
      %v295 = vld [vmem:[%s1 + $0x188] sm:$0xf]
      %v296 = vld [vmem:[%s1 + $0x18c] sm:$0xf]
      %v297 = vld [vmem:[%s1 + $0x190] sm:$0xf]
      %v298 = vld [vmem:[%s1 + $0x194] sm:$0xf]
      %v299 = vld [vmem:[%s1 + $0x198] sm:$0xf]
      %v300 = vld [vmem:[%s1 + $0x19c] sm:$0xf]
      %v301 = vld [vmem:[%s1 + $0x1a0] sm:$0xf]
      %v302 = vld [vmem:[%s1 + $0x1a4] sm:$0xf]
      %v303 = vld [vmem:[%s1 + $0x1a8] sm:$0xf]
      %v304 = vld [vmem:[%s1 + $0x1ac] sm:$0xf]
      %v305 = vld [vmem:[%s1 + $0x1b0] sm:$0xf]
      %v306 = vld [vmem:[%s1 + $0x1b4] sm:$0xf]
      %v307 = vld [vmem:[%s1 + $0x1b8] sm:$0xf]
      %v308 = vld [vmem:[%s1 + $0x1bc] sm:$0xf]
      %v309 = vld [vmem:[%s1 + $0x1c0] sm:$0xf]
      %v310 = vld [vmem:[%s1 + $0x1c4] sm:$0xf]
      %v311 = vld [vmem:[%s1 + $0x1c8] sm:$0xf]
      %v312 = vld [vmem:[%s1 + $0x1cc] sm:$0xf]
      %v313 = vld [vmem:[%s1 + $0x1d0] sm:$0xf]
      %v314 = vld [vmem:[%s1 + $0x1d4] sm:$0xf]
      %v315 = vld [vmem:[%s1 + $0x1d8] sm:$0xf]
      %v316 = vld [vmem:[%s1 + $0x1dc] sm:$0xf]
      %v317 = vld [vmem:[%s1 + $0x1e0] sm:$0xf]
      %v318 = vld [vmem:[%s1 + $0x1e4] sm:$0xf]
      %v319 = vld [vmem:[%s1 + $0x1e8] sm:$0xf]
      %v320 = vld [vmem:[%s1 + $0x1ec] sm:$0xf]
      %v321 = vld [vmem:[%s1 + $0x1f0] sm:$0xf]
      %v322 = vld [vmem:[%s1 + $0x1f4] sm:$0xf]
      %v323 = vld [vmem:[%s1 + $0x1f8] sm:$0xf]
      %v324 = vld [vmem:[%s1 + $0x1fc] sm:$0xf]
      %v333 = vunpack.c.l.b16 %v189
      %v334 = vunpack.c.h.b16 %v189
      %v335 = vunpack.c.l.b16 %v190
      %v336 = vunpack.c.h.b16 %v190
      %v337 = vunpack.c.l.b16 %v191
      %v338 = vunpack.c.h.b16 %v191
      %v339 = vunpack.c.l.b16 %v192
      %v340 = vunpack.c.h.b16 %v192
      %v341 = vunpack.c.l.b16 %v193
      %v342 = vunpack.c.h.b16 %v193
      %v343 = vunpack.c.l.b16 %v194
      %v344 = vunpack.c.h.b16 %v194
      %v345 = vunpack.c.l.b16 %v195
      %v346 = vunpack.c.h.b16 %v195
      %v347 = vunpack.c.l.b16 %v196
      %v348 = vunpack.c.h.b16 %v196
      %v349 = vpack.c.b16 %v341, %v333
      %v350 = vpack.c.b16 %v342, %v334
      %v351 = vpack.c.b16 %v343, %v335
      %v352 = vpack.c.b16 %v344, %v336
      %v353 = vpack.c.b16 %v345, %v337
      %v354 = vpack.c.b16 %v346, %v338
      %v355 = vpack.c.b16 %v347, %v339
      %v356 = vpack.c.b16 %v348, %v340
      %v493 = vunpack.c.l.b16 %v197
      %v494 = vunpack.c.l.b16 %v198
      %v495 = vunpack.c.l.b16 %v199
      %v496 = vunpack.c.l.b16 %v200
      %v497 = vunpack.c.l.b16 %v201
      %v498 = vunpack.c.l.b16 %v202
      %v499 = vunpack.c.l.b16 %v203
      %v500 = vunpack.c.l.b16 %v204
      %v501 = vunpack.c.l.b16 %v205
      %v502 = vunpack.c.l.b16 %v206
      %v503 = vunpack.c.l.b16 %v207
      %v504 = vunpack.c.l.b16 %v208
      %v505 = vunpack.c.l.b16 %v209
      %v506 = vunpack.c.l.b16 %v210
      %v507 = vunpack.c.l.b16 %v211
      %v508 = vunpack.c.l.b16 %v212
      %v509 = vunpack.c.l.b16 %v213
      %v510 = vunpack.c.l.b16 %v214
      %v511 = vunpack.c.l.b16 %v215
      %v512 = vunpack.c.l.b16 %v216
      %v513 = vunpack.c.l.b16 %v217
      %v514 = vunpack.c.l.b16 %v218
      %v515 = vunpack.c.l.b16 %v219
      %v516 = vunpack.c.l.b16 %v220
      %v517 = vunpack.c.l.b16 %v221
      %v518 = vunpack.c.l.b16 %v222
      %v519 = vunpack.c.l.b16 %v223
      %v520 = vunpack.c.l.b16 %v224
      %v521 = vunpack.c.l.b16 %v225
      %v522 = vunpack.c.l.b16 %v226
      %v523 = vunpack.c.l.b16 %v227
      %v524 = vunpack.c.l.b16 %v228
      %v525 = vunpack.c.l.b16 %v229
      %v526 = vunpack.c.l.b16 %v230
      %v527 = vunpack.c.l.b16 %v231
      %v528 = vunpack.c.l.b16 %v232
      %v529 = vunpack.c.l.b16 %v233
      %v530 = vunpack.c.l.b16 %v234
      %v531 = vunpack.c.l.b16 %v235
      %v532 = vunpack.c.l.b16 %v236
      %v533 = vunpack.c.l.b16 %v237
      %v534 = vunpack.c.l.b16 %v238
      %v535 = vunpack.c.l.b16 %v239
      %v536 = vunpack.c.l.b16 %v240
      %v537 = vunpack.c.l.b16 %v241
      %v538 = vunpack.c.l.b16 %v242
      %v539 = vunpack.c.l.b16 %v243
      %v540 = vunpack.c.l.b16 %v244
      %v541 = vunpack.c.l.b16 %v245
      %v542 = vunpack.c.l.b16 %v246
      %v543 = vunpack.c.l.b16 %v247
      %v544 = vunpack.c.l.b16 %v248
      %v545 = vunpack.c.l.b16 %v249
      %v546 = vunpack.c.l.b16 %v250
      %v547 = vunpack.c.l.b16 %v251
      %v548 = vunpack.c.l.b16 %v252
      %v549 = vunpack.c.l.b16 %v253
      %v550 = vunpack.c.l.b16 %v254
      %v551 = vunpack.c.l.b16 %v255
      %v552 = vunpack.c.l.b16 %v256
      %v553 = vunpack.c.l.b16 %v257
      %v554 = vunpack.c.l.b16 %v258
      %v555 = vunpack.c.l.b16 %v259
      %v556 = vunpack.c.l.b16 %v260
      %v557 = vunpack.c.l.b16 %v261
      %v558 = vunpack.c.l.b16 %v262
      %v559 = vunpack.c.l.b16 %v263
      %v560 = vunpack.c.l.b16 %v264
      %v561 = vunpack.c.l.b16 %v265
      %v562 = vunpack.c.l.b16 %v266
      %v563 = vunpack.c.l.b16 %v267
      %v564 = vunpack.c.l.b16 %v268
      %v565 = vunpack.c.l.b16 %v269
      %v566 = vunpack.c.l.b16 %v270
      %v567 = vunpack.c.l.b16 %v271
      %v568 = vunpack.c.l.b16 %v272
      %v569 = vunpack.c.l.b16 %v273
      %v570 = vunpack.c.l.b16 %v274
      %v571 = vunpack.c.l.b16 %v275
      %v572 = vunpack.c.l.b16 %v276
      %v573 = vunpack.c.l.b16 %v277
      %v574 = vunpack.c.l.b16 %v278
      %v575 = vunpack.c.l.b16 %v279
      %v576 = vunpack.c.l.b16 %v280
      %v577 = vunpack.c.l.b16 %v281
      %v578 = vunpack.c.l.b16 %v282
      %v579 = vunpack.c.l.b16 %v283
      %v580 = vunpack.c.l.b16 %v284
      %v581 = vunpack.c.l.b16 %v285
      %v582 = vunpack.c.l.b16 %v286
      %v583 = vunpack.c.l.b16 %v287
      %v584 = vunpack.c.l.b16 %v288
      %v585 = vunpack.c.l.b16 %v289
      %v586 = vunpack.c.l.b16 %v290
      %v587 = vunpack.c.l.b16 %v291
      %v588 = vunpack.c.l.b16 %v292
      %v589 = vunpack.c.l.b16 %v293
      %v590 = vunpack.c.l.b16 %v294
      %v591 = vunpack.c.l.b16 %v295
      %v592 = vunpack.c.l.b16 %v296
      %v593 = vunpack.c.l.b16 %v297
      %v594 = vunpack.c.l.b16 %v298
      %v595 = vunpack.c.l.b16 %v299
      %v596 = vunpack.c.l.b16 %v300
      %v597 = vunpack.c.l.b16 %v301
      %v598 = vunpack.c.l.b16 %v302
      %v599 = vunpack.c.l.b16 %v303
      %v600 = vunpack.c.l.b16 %v304
      %v601 = vunpack.c.l.b16 %v305
      %v602 = vunpack.c.l.b16 %v306
      %v603 = vunpack.c.l.b16 %v307
      %v604 = vunpack.c.l.b16 %v308
      %v605 = vunpack.c.l.b16 %v309
      %v606 = vunpack.c.l.b16 %v310
      %v607 = vunpack.c.l.b16 %v311
      %v608 = vunpack.c.l.b16 %v312
      %v609 = vunpack.c.l.b16 %v313
      %v610 = vunpack.c.l.b16 %v314
      %v611 = vunpack.c.l.b16 %v315
      %v612 = vunpack.c.l.b16 %v316
      %v613 = vunpack.c.l.b16 %v317
      %v614 = vunpack.c.l.b16 %v318
      %v615 = vunpack.c.l.b16 %v319
      %v616 = vunpack.c.l.b16 %v320
      %v617 = vunpack.c.l.b16 %v321
      %v618 = vunpack.c.l.b16 %v322
      %v619 = vunpack.c.l.b16 %v323
      %v620 = vunpack.c.l.b16 %v324
      %v621 = vpack.c.b16 %v494, %v493
      %v622 = vpack.c.b16 %v496, %v495
      %v623 = vpack.c.b16 %v498, %v497
      %v624 = vpack.c.b16 %v500, %v499
      %v625 = vpack.c.b16 %v502, %v501
      %v626 = vpack.c.b16 %v504, %v503
      %v627 = vpack.c.b16 %v506, %v505
      %v628 = vpack.c.b16 %v508, %v507
      %v629 = vpack.c.b16 %v510, %v509
      %v630 = vpack.c.b16 %v512, %v511
      %v631 = vpack.c.b16 %v514, %v513
      %v632 = vpack.c.b16 %v516, %v515
      %v633 = vpack.c.b16 %v518, %v517
      %v634 = vpack.c.b16 %v520, %v519
      %v635 = vpack.c.b16 %v522, %v521
      %v636 = vpack.c.b16 %v524, %v523
      %v637 = vpack.c.b16 %v526, %v525
      %v638 = vpack.c.b16 %v528, %v527
      %v639 = vpack.c.b16 %v530, %v529
      %v640 = vpack.c.b16 %v532, %v531
      %v641 = vpack.c.b16 %v534, %v533
      %v642 = vpack.c.b16 %v536, %v535
      %v643 = vpack.c.b16 %v538, %v537
      %v644 = vpack.c.b16 %v540, %v539
      %v645 = vpack.c.b16 %v542, %v541
      %v646 = vpack.c.b16 %v544, %v543
      %v647 = vpack.c.b16 %v546, %v545
      %v648 = vpack.c.b16 %v548, %v547
      %v649 = vpack.c.b16 %v550, %v549
      %v650 = vpack.c.b16 %v552, %v551
      %v651 = vpack.c.b16 %v554, %v553
      %v652 = vpack.c.b16 %v556, %v555
      %v653 = vpack.c.b16 %v558, %v557
      %v654 = vpack.c.b16 %v560, %v559
      %v655 = vpack.c.b16 %v562, %v561
      %v656 = vpack.c.b16 %v564, %v563
      %v657 = vpack.c.b16 %v566, %v565
      %v658 = vpack.c.b16 %v568, %v567
      %v659 = vpack.c.b16 %v570, %v569
      %v660 = vpack.c.b16 %v572, %v571
      %v661 = vpack.c.b16 %v574, %v573
      %v662 = vpack.c.b16 %v576, %v575
      %v663 = vpack.c.b16 %v578, %v577
      %v664 = vpack.c.b16 %v580, %v579
      %v665 = vpack.c.b16 %v582, %v581
      %v666 = vpack.c.b16 %v584, %v583
      %v667 = vpack.c.b16 %v586, %v585
      %v668 = vpack.c.b16 %v588, %v587
      %v669 = vpack.c.b16 %v590, %v589
      %v670 = vpack.c.b16 %v592, %v591
      %v671 = vpack.c.b16 %v594, %v593
      %v672 = vpack.c.b16 %v596, %v595
      %v673 = vpack.c.b16 %v598, %v597
      %v674 = vpack.c.b16 %v600, %v599
      %v675 = vpack.c.b16 %v602, %v601
      %v676 = vpack.c.b16 %v604, %v603
      %v677 = vpack.c.b16 %v606, %v605
      %v678 = vpack.c.b16 %v608, %v607
      %v679 = vpack.c.b16 %v610, %v609
      %v680 = vpack.c.b16 %v612, %v611
      %v681 = vpack.c.b16 %v614, %v613
      %v682 = vpack.c.b16 %v616, %v615
      %v683 = vpack.c.b16 %v618, %v617
      %v684 = vpack.c.b16 %v620, %v619
      %749 = vmatprep.subr.bf16.mxu0 0
      %750 = vmatpush1.bf16.msra.mxu0 %v628
      %751 = vmatprep.subr.bf16.mxu0 0
      %752 = vmatpush1.bf16.msra.mxu0 %v627
      %753 = vmatprep.subr.bf16.mxu0 0
      %754 = vmatpush1.bf16.msra.mxu0 %v626
      %755 = vmatprep.subr.bf16.mxu0 0
      %756 = vmatpush1.bf16.msra.mxu0 %v625
      %757 = vmatprep.subr.bf16.mxu0 0
      %758 = vmatpush1.bf16.msra.mxu0 %v624
      %759 = vmatprep.subr.bf16.mxu0 0
      %760 = vmatpush1.bf16.msra.mxu0 %v623
      %761 = vmatprep.subr.bf16.mxu0 0
      %762 = vmatpush1.bf16.msra.mxu0 %v622
      %763 = vmatprep.subr.bf16.mxu0 0
      %764 = vmatpush1.bf16.msra.mxu0 %v621
      %765 = vmatprep.subr.bf16.mxu0 0
      %766 = vmatpush2.bf16.msra.mxu0 %v636
      %767 = vmatprep.subr.bf16.mxu0 0
      %768 = vmatpush2.bf16.msra.mxu0 %v635
      %769 = vmatprep.subr.bf16.mxu0 0
      %770 = vmatpush2.bf16.msra.mxu0 %v634
      %771 = vmatprep.subr.bf16.mxu0 0
      %772 = vmatpush2.bf16.msra.mxu0 %v633
      %773 = vmatprep.subr.bf16.mxu0 0
      %774 = vmatpush2.bf16.msra.mxu0 %v632
      %775 = vmatprep.subr.bf16.mxu0 0
      %776 = vmatpush2.bf16.msra.mxu0 %v631
      %777 = vmatprep.subr.bf16.mxu0 0
      %778 = vmatpush2.bf16.msra.mxu0 %v630
      %779 = vmatprep.subr.bf16.mxu0 0
      %780 = vmatpush2.bf16.msra.mxu0 %v629
      %781 = vmatprep.mubr.bf16.mxu0 %v350
      %782 = vmatmul.mubr.bf16.gmra.mxu0 %v349
      %v783 = vpop.f32.mrf.mxu0
      %v784 = vadd.f32 0.0, %v783
      %v785 = vpop.f32.mrf.mxu0
      %v786 = vpop.f32.mrf.mxu0
      %v787 = vadd.f32 0.0, %v786
      %v788 = vpop.f32.mrf.mxu0
      %789 = vdwg.mxu0
      %790 = vmatprep.subr.bf16.mxu0 0
      %791 = vmatpush1.bf16.msra.mxu0 %v644
      %792 = vmatprep.subr.bf16.mxu0 0
      %793 = vmatpush1.bf16.msra.mxu0 %v643
      %794 = vmatprep.subr.bf16.mxu0 0
      %795 = vmatpush1.bf16.msra.mxu0 %v642
      %796 = vmatprep.subr.bf16.mxu0 0
      %797 = vmatpush1.bf16.msra.mxu0 %v641
      %798 = vmatprep.subr.bf16.mxu0 0
      %799 = vmatpush1.bf16.msra.mxu0 %v640
      %800 = vmatprep.subr.bf16.mxu0 0
      %801 = vmatpush1.bf16.msra.mxu0 %v639
      %802 = vmatprep.subr.bf16.mxu0 0
      %803 = vmatpush1.bf16.msra.mxu0 %v638
      %804 = vmatprep.subr.bf16.mxu0 0
      %805 = vmatpush1.bf16.msra.mxu0 %v637
      %806 = vmatprep.subr.bf16.mxu0 0
      %807 = vmatpush2.bf16.msra.mxu0 %v652
      %808 = vmatprep.subr.bf16.mxu0 0
      %809 = vmatpush2.bf16.msra.mxu0 %v651
      %810 = vmatprep.subr.bf16.mxu0 0
      %811 = vmatpush2.bf16.msra.mxu0 %v650
      %812 = vmatprep.subr.bf16.mxu0 0
      %813 = vmatpush2.bf16.msra.mxu0 %v649
      %814 = vmatprep.subr.bf16.mxu0 0
      %815 = vmatpush2.bf16.msra.mxu0 %v648
      %816 = vmatprep.subr.bf16.mxu0 0
      %817 = vmatpush2.bf16.msra.mxu0 %v647
      %818 = vmatprep.subr.bf16.mxu0 0
      %819 = vmatpush2.bf16.msra.mxu0 %v646
      %820 = vmatprep.subr.bf16.mxu0 0
      %821 = vmatpush2.bf16.msra.mxu0 %v645
      %822 = vmatprep.mubr.bf16.mxu0 %v352
      %823 = vmatmul.mubr.bf16.gmra.mxu0 %v351
      %v824 = vpop.f32.mrf.mxu0
      %v825 = vadd.f32 %v784, %v824
      %v826 = vpop.f32.mrf.mxu0
      %v827 = vpop.f32.mrf.mxu0
      %v828 = vadd.f32 %v787, %v827
      %v829 = vpop.f32.mrf.mxu0
      %830 = vdwg.mxu0
      %831 = vmatprep.subr.bf16.mxu0 0
      %832 = vmatpush1.bf16.msra.mxu0 %v660
      %833 = vmatprep.subr.bf16.mxu0 0
      %834 = vmatpush1.bf16.msra.mxu0 %v659
      %835 = vmatprep.subr.bf16.mxu0 0
      %836 = vmatpush1.bf16.msra.mxu0 %v658
      %837 = vmatprep.subr.bf16.mxu0 0
      %838 = vmatpush1.bf16.msra.mxu0 %v657
      %839 = vmatprep.subr.bf16.mxu0 0
      %840 = vmatpush1.bf16.msra.mxu0 %v656
      %841 = vmatprep.subr.bf16.mxu0 0
      %842 = vmatpush1.bf16.msra.mxu0 %v655
      %843 = vmatprep.subr.bf16.mxu0 0
      %844 = vmatpush1.bf16.msra.mxu0 %v654
      %845 = vmatprep.subr.bf16.mxu0 0
      %846 = vmatpush1.bf16.msra.mxu0 %v653
      %847 = vmatprep.subr.bf16.mxu0 0
      %848 = vmatpush2.bf16.msra.mxu0 %v668
      %849 = vmatprep.subr.bf16.mxu0 0
      %850 = vmatpush2.bf16.msra.mxu0 %v667
      %851 = vmatprep.subr.bf16.mxu0 0
      %852 = vmatpush2.bf16.msra.mxu0 %v666
      %853 = vmatprep.subr.bf16.mxu0 0
      %854 = vmatpush2.bf16.msra.mxu0 %v665
      %855 = vmatprep.subr.bf16.mxu0 0
      %856 = vmatpush2.bf16.msra.mxu0 %v664
      %857 = vmatprep.subr.bf16.mxu0 0
      %858 = vmatpush2.bf16.msra.mxu0 %v663
      %859 = vmatprep.subr.bf16.mxu0 0
      %860 = vmatpush2.bf16.msra.mxu0 %v662
      %861 = vmatprep.subr.bf16.mxu0 0
      %862 = vmatpush2.bf16.msra.mxu0 %v661
      %863 = vmatprep.mubr.bf16.mxu0 %v354
      %864 = vmatmul.mubr.bf16.gmra.mxu0 %v353
      %v865 = vpop.f32.mrf.mxu0
      %v866 = vadd.f32 %v825, %v865
      %v867 = vpop.f32.mrf.mxu0
      %v868 = vpop.f32.mrf.mxu0
      %v869 = vadd.f32 %v828, %v868
      %v870 = vpop.f32.mrf.mxu0
      %871 = vdwg.mxu0
      %872 = vmatprep.subr.bf16.mxu0 0
      %873 = vmatpush1.bf16.msra.mxu0 %v676
      %874 = vmatprep.subr.bf16.mxu0 0
      %875 = vmatpush1.bf16.msra.mxu0 %v675
      %876 = vmatprep.subr.bf16.mxu0 0
      %877 = vmatpush1.bf16.msra.mxu0 %v674
      %878 = vmatprep.subr.bf16.mxu0 0
      %879 = vmatpush1.bf16.msra.mxu0 %v673
      %880 = vmatprep.subr.bf16.mxu0 0
      %881 = vmatpush1.bf16.msra.mxu0 %v672
      %882 = vmatprep.subr.bf16.mxu0 0
      %883 = vmatpush1.bf16.msra.mxu0 %v671
      %884 = vmatprep.subr.bf16.mxu0 0
      %885 = vmatpush1.bf16.msra.mxu0 %v670
      %886 = vmatprep.subr.bf16.mxu0 0
      %887 = vmatpush1.bf16.msra.mxu0 %v669
      %888 = vmatprep.subr.bf16.mxu0 0
      %889 = vmatpush2.bf16.msra.mxu0 %v684
      %890 = vmatprep.subr.bf16.mxu0 0
      %891 = vmatpush2.bf16.msra.mxu0 %v683
      %892 = vmatprep.subr.bf16.mxu0 0
      %893 = vmatpush2.bf16.msra.mxu0 %v682
      %894 = vmatprep.subr.bf16.mxu0 0
      %895 = vmatpush2.bf16.msra.mxu0 %v681
      %896 = vmatprep.subr.bf16.mxu0 0
      %897 = vmatpush2.bf16.msra.mxu0 %v680
      %898 = vmatprep.subr.bf16.mxu0 0
      %899 = vmatpush2.bf16.msra.mxu0 %v679
      %900 = vmatprep.subr.bf16.mxu0 0
      %901 = vmatpush2.bf16.msra.mxu0 %v678
      %902 = vmatprep.subr.bf16.mxu0 0
      %903 = vmatpush2.bf16.msra.mxu0 %v677
      %904 = vmatprep.mubr.bf16.mxu0 %v356
      %905 = vmatmul.mubr.bf16.gmra.mxu0 %v355
      %v906 = vpop.f32.mrf.mxu0
      %v907 = vadd.f32 %v866, %v906
      %v908 = vpop.f32.mrf.mxu0
      %v909 = vpop.f32.mrf.mxu0
      %v910 = vadd.f32 %v869, %v909
      %v911 = vpop.f32.mrf.mxu0
      %912 = vdwg.mxu0
      %v913 = vadd.f32 %v907, %v910
      %v914 = vrot.slane %v913, 4
      %v915 = vadd.f32 %v913, %v914
      %v916 = vrot.slane %v915, 2
      %v917 = vadd.f32 %v915, %v916
      %v918 = vrot.slane %v917, 1
      %v919 = vadd.f32 %v917, %v918
      %920 = vst [vmem:[%s187] sm:$0x1] %v919
      %v921 = vmul.f32 %v907, %v907
      %v922 = vmul.f32 %v910, %v910
      %v923 = vadd.f32 %v921, %v922
      %v924 = vrot.slane %v923, 4
      %v925 = vadd.f32 %v923, %v924
      %v926 = vrot.slane %v925, 2
      %v927 = vadd.f32 %v925, %v926
      %v928 = vrot.slane %v927, 1
      %v929 = vadd.f32 %v927, %v928
      %930 = vst [vmem:[%s187 + $0x1] sm:$0x1] %v929
      %v931 = vpack.c.bf16 %v910, %v907
      %v933 = vunpack.c.l.b16 %v931
      %v934 = vunpack.c.h.b16 %v931
      %v935 = vpack.c.b16 %v933, %v933
      %v936 = vpack.c.b16 %v934, %v934
      %939 = vst [vmem:[%s182] sm:$0xf] %v935
      %940 = vst [vmem:[%s182 + $0x4] sm:$0xf] %v936
      %s941 = smul.u32 2, %s15
      %p942 = scmp.lt.s32.totalorder %s941, 3
      %s943 = scalar_select %p942, %s941, 3
      %s944 = smul.addr %s943, 4
      %s945 = scalar_lea.vmem %s2, %s944
      %p946 = scmp.lt.s32.totalorder %s15, 1
      %s947 = scalar_select %p946, %s15, 1
      %s948 = smul.addr %s947, 2
      %s949 = scalar_lea.vmem %s3, %s948
      // Predicated region
      $region29: #{discriminator_forward.13} parent=27 // pred_check
        %p950 = pneg %p80
      $region30: #{discriminator_forward.13} parent=27 // pred_check_branch
        %952 = sbr.rel (%p950) target = $region32
      $region31: #{discriminator_forward.13} parent=27 // pred_region
        %s953 = smul.u32 2, %s15
      $region32: #{discriminator_forward.13} parent=27 // pred_fallthru
        _
      // Predicated region
      $region33: #{discriminator_forward.13} parent=27 // pred_check
        %p954 = pneg %p106
      $region34: #{discriminator_forward.13} parent=27 // pred_check_branch
        %956 = sbr.rel (%p954) target = $region36
      $region35: #{discriminator_forward.13} parent=27 // pred_region
        _
      $region36: #{discriminator_forward.13} parent=27 // pred_fallthru
        _
    $region28: #{discriminator_forward.13} parent=5 // pred_fallthru
      _
    %p957 = scmp.le.s32.totalorder 2, %s10
    // Predicated region
    $region37: #{discriminator_forward.13} parent=5 // pred_check
      %p958 = pneg %p957
    $region38: #{discriminator_forward.13} parent=5 // pred_check_branch
      %960 = sbr.rel (%p958) target = $region40
    $region39: #{discriminator_forward.13} parent=5 // pred_region
      %s961 = ssub.s32 %s10, 2
      // Predicated region
      $region41: #{discriminator_forward.13} parent=39 // pred_check
        %p962 = pneg %p86
      $region42: #{discriminator_forward.13} parent=39 // pred_check_branch
        %964 = sbr.rel (%p962) target = $region44
      $region43: #{discriminator_forward.13} parent=39 // pred_region
        %s965 = smul.u32 2, %s16
        %p966 = scmp.lt.s32.totalorder %s965, 3
        %s967 = scalar_select %p966, %s965, 3
        %s968 = smul.addr %s967, 4
        %s969 = scalar_lea.vmem %s2, %s968
      $region44: #{discriminator_forward.13} parent=39 // pred_fallthru
        _
      // Predicated region
      $region45: #{discriminator_forward.13} parent=39 // pred_check
        %p970 = pneg %p112
      $region46: #{discriminator_forward.13} parent=39 // pred_check_branch
        %972 = sbr.rel (%p970) target = $region48
      $region47: #{discriminator_forward.13} parent=39 // pred_region
        %p973 = scmp.lt.s32.totalorder %s16, 1
        %s974 = scalar_select %p973, %s16, 1
        %s975 = smul.addr %s974, 2
        %s976 = scalar_lea.vmem %s3, %s975
      $region48: #{discriminator_forward.13} parent=39 // pred_fallthru
        _
    $region40: #{discriminator_forward.13} parent=5 // pred_fallthru
      _
  $region6: #{discriminator_forward.13} parent=0 // loop_footer
    %s14 = sadd.s32 1, %s10
  $region7: #{discriminator_forward.13} parent=0 // loop_footer_branch
    %9 = sbr.rel target = $region3
  $region8: #{discriminator_forward.13} parent=0 // loop_exit
    _

// kernel: discriminator_forward.14
$region0: #{discriminator_forward.14}
  #allocation0 [shape = 'u32[]', space=smem, size = 0x4, offset = 0x4, fixed_abs, tag = 'smem constant byte address 0x4 - core index']
  #allocation1 [shape = 'u32[144,128]{1,0:T(1,128)}', space=vmem, size = 0x12000, scoped, tag = 'internal scratch']
  %s0 = inlined_call_operand.vmem [shape: bf16[32,128], index: 0, kind: input, shape index: {}]
  %s1 = inlined_call_operand.vmem [shape: f32[1,128], index: 1, kind: input, shape index: {}]
  %s2 = inlined_call_operand.vmem [shape: f32[1,128], index: 2, kind: input, shape index: {}]
  %s3 = inlined_call_operand.vmem [shape: bf16[32,128], index: 3, kind: output, shape index: {}]
  %s4 = sld [smem:[#allocation0]]
  $region45: #{discriminator_forward.14} parent=0
    _
  %s6 = ssub.s32 1, %s4
  %s7 = scalar_select 0, %s6, %s4
  loop: start=0, step=1, limit=4
  $region2: #{discriminator_forward.14} parent=0 // loop_pre_header
    _
  $region3: #{discriminator_forward.14} parent=0 // loop_header
    %s9 = sphi 0, %s13
    %p10 = scmp.ge.s32.totalorder %s9, 4
    %s19 = sphi 0, %s21
    %s22 = sphi 0, %s19
    %s23 = sphi 0, %s22
    %s39 = sphi 0, %s23
    %s43 = sphi 0, %s43
    %s45 = sphi 0, %s43
    %s46 = sphi 0, %s45
    %s60 = sphi 0, %s46
    %s64 = sphi 0, %s64
    %s66 = sphi 0, %s64
    %s67 = sphi 0, %s66
    %s81 = sphi 0, %s67
    %s87 = sphi 0, %s89
    %s90 = sphi 0, %s87
    %s91 = sphi 0, %s90
    %s107 = sphi 0, %s91
  $region4: #{discriminator_forward.14} parent=0 // loop_header_branch
    %12 = sbr.rel (%p10) target = $region8
  $region5: #{discriminator_forward.14} parent=0 // loop_body
    %s14 = ssub.s32 %s9, 1
    %s15 = ssub.s32 %s9, 2
    %s16 = sadd.s32 %s9, 1
    %s17 = ssub.s32 %s9, %s16
    %p18 = scmp.eq.s32.totalorder %s17, 0
    %s20 = sadd.s32 %s19, 1
    %s21 = scalar_select %p18, %s19, %s20
    %p24 = pneg %p18
    %p25 = scmp.eq.s32.totalorder %s9, 1
    %p26 = por %p24, %p25
    %p27 = scmp.ne.s32.totalorder %s19, %s22
    %p28 = scmp.eq.s32.totalorder %s9, 0
    %p29 = por %p27, %p28
    %p30 = scmp.ne.s32.totalorder %s19, %s22
    %p31 = scmp.eq.s32.totalorder %s14, 1
    %p32 = por %p30, %p31
    %p33 = scmp.ne.s32.totalorder %s22, %s23
    %p34 = scmp.eq.s32.totalorder %s14, 0
    %p35 = por %p33, %p34
    %p36 = scmp.ne.s32.totalorder %s22, %s23
    %p37 = scmp.eq.s32.totalorder %s15, 1
    %p38 = por %p36, %p37
    %p40 = scmp.ne.s32.totalorder %s23, %s39
    %p41 = scmp.eq.s32.totalorder %s15, 0
    %p42 = por %p40, %p41
    %s44 = sadd.s32 %s43, 1
    %p47 = scmp.eq.s32.totalorder %s9, 1
    %p48 = scmp.ne.s32.totalorder %s43, %s45
    %p49 = scmp.eq.s32.totalorder %s9, 0
    %p50 = por %p48, %p49
    %p51 = scmp.ne.s32.totalorder %s43, %s45
    %p52 = scmp.eq.s32.totalorder %s14, 1
    %p53 = por %p51, %p52
    %p54 = scmp.ne.s32.totalorder %s45, %s46
    %p55 = scmp.eq.s32.totalorder %s14, 0
    %p56 = por %p54, %p55
    %p57 = scmp.ne.s32.totalorder %s45, %s46
    %p58 = scmp.eq.s32.totalorder %s15, 1
    %p59 = por %p57, %p58
    %p61 = scmp.ne.s32.totalorder %s46, %s60
    %p62 = scmp.eq.s32.totalorder %s15, 0
    %p63 = por %p61, %p62
    %s65 = sadd.s32 %s64, 1
    %p68 = scmp.eq.s32.totalorder %s9, 1
    %p69 = scmp.ne.s32.totalorder %s64, %s66
    %p70 = scmp.eq.s32.totalorder %s9, 0
    %p71 = por %p69, %p70
    %p72 = scmp.ne.s32.totalorder %s64, %s66
    %p73 = scmp.eq.s32.totalorder %s14, 1
    %p74 = por %p72, %p73
    %p75 = scmp.ne.s32.totalorder %s66, %s67
    %p76 = scmp.eq.s32.totalorder %s14, 0
    %p77 = por %p75, %p76
    %p78 = scmp.ne.s32.totalorder %s66, %s67
    %p79 = scmp.eq.s32.totalorder %s15, 1
    %p80 = por %p78, %p79
    %p82 = scmp.ne.s32.totalorder %s67, %s81
    %p83 = scmp.eq.s32.totalorder %s15, 0
    %p84 = por %p82, %p83
    %s85 = ssub.s32 %s9, %s16
    %p86 = scmp.eq.s32.totalorder %s85, 0
    %s88 = sadd.s32 %s87, 1
    %s89 = scalar_select %p86, %s87, %s88
    %p92 = pneg %p86
    %p93 = scmp.eq.s32.totalorder %s9, 1
    %p94 = por %p92, %p93
    %p95 = scmp.ne.s32.totalorder %s87, %s90
    %p96 = scmp.eq.s32.totalorder %s9, 0
    %p97 = por %p95, %p96
    %p98 = scmp.ne.s32.totalorder %s87, %s90
    %p99 = scmp.eq.s32.totalorder %s14, 1
    %p100 = por %p98, %p99
    %p101 = scmp.ne.s32.totalorder %s90, %s91
    %p102 = scmp.eq.s32.totalorder %s14, 0
    %p103 = por %p101, %p102
    %p104 = scmp.ne.s32.totalorder %s90, %s91
    %p105 = scmp.eq.s32.totalorder %s15, 1
    %p106 = por %p104, %p105
    %p108 = scmp.ne.s32.totalorder %s91, %s107
    %p109 = scmp.eq.s32.totalorder %s15, 0
    %p110 = por %p108, %p109
    %p111 = scmp.le.s32.totalorder 1, %s9
    %p112 = scmp.lt.s32.totalorder %s9, 3
    %p113 = pnand %p111, %p112
    %p114 = pneg %p113
    // Predicated region
    $region9: #{discriminator_forward.14} parent=5 // pred_check
      _
    $region10: #{discriminator_forward.14} parent=5 // pred_check_branch
      %116 = sbr.rel (%p113) target = $region12
    $region11: #{discriminator_forward.14} parent=5 // pred_region
      %s117 = ssub.s32 %s9, 1
      // Predicated region
      $region13: #{discriminator_forward.14} parent=11 // pred_check
        %p118 = pneg %p56
      $region14: #{discriminator_forward.14} parent=11 // pred_check_branch
        %120 = sbr.rel (%p118) target = $region16
      $region15: #{discriminator_forward.14} parent=11 // pred_region
        _
      $region16: #{discriminator_forward.14} parent=11 // pred_fallthru
        _
      // Predicated region
      $region17: #{discriminator_forward.14} parent=11 // pred_check
        %p121 = pneg %p77
      $region18: #{discriminator_forward.14} parent=11 // pred_check_branch
        %123 = sbr.rel (%p121) target = $region20
      $region19: #{discriminator_forward.14} parent=11 // pred_region
        _
      $region20: #{discriminator_forward.14} parent=11 // pred_fallthru
        _
    $region12: #{discriminator_forward.14} parent=5 // pred_fallthru
      _
    %p124 = scmp.lt.s32.totalorder %s9, 2
    // Predicated region
    $region21: #{discriminator_forward.14} parent=5 // pred_check
      %p125 = pneg %p124
    $region22: #{discriminator_forward.14} parent=5 // pred_check_branch
      %127 = sbr.rel (%p125) target = $region24
    $region23: #{discriminator_forward.14} parent=5 // pred_region
      // Predicated region
      $region25: #{discriminator_forward.14} parent=23 // pred_check
        %p128 = pneg %p29
      $region26: #{discriminator_forward.14} parent=23 // pred_check_branch
        %130 = sbr.rel (%p128) target = $region28
      $region27: #{discriminator_forward.14} parent=23 // pred_region
        %s131 = smul.u32 2, %s9
        %p132 = scmp.lt.s32.totalorder %s131, 3
        %s133 = scalar_select %p132, %s131, 3
        %s134 = smul.addr %s133, 4
        %s135 = scalar_lea.vmem %s0, %s134
        %s136 = smul.u32 2, %s9
      $region28: #{discriminator_forward.14} parent=23 // pred_fallthru
        _
    $region24: #{discriminator_forward.14} parent=5 // pred_fallthru
      _
    %p137 = scmp.le.s32.totalorder 1, %s9
    %p138 = scmp.lt.s32.totalorder %s9, 3
    %p139 = pnand %p137, %p138
    %p140 = pneg %p139
    // Predicated region
    $region29: #{discriminator_forward.14} parent=5 // pred_check
      _
    $region30: #{discriminator_forward.14} parent=5 // pred_check_branch
      %142 = sbr.rel (%p139) target = $region32
    $region31: #{discriminator_forward.14} parent=5 // pred_region
      %s143 = ssub.s32 %s9, 1
      %s144 = smul.u32 2, %s14
      %p145 = scmp.lt.s32.totalorder %s144, 3
      %s146 = scalar_select %p145, %s144, 3
      %s147 = smul.addr %s146, 4
      %s148 = scalar_lea.vmem %s0, %s147
      %p149 = pneg %p35
      %p150 = pneg %p32
      %p151 = pneg %p56
      %p152 = pneg %p53
      %p153 = pneg %p77
      %p154 = pneg %p74
      %p155 = pneg %p103
      %p156 = pneg %p100
      %s157 = smul.u32 2, %s14
      %p158 = scmp.lt.s32.totalorder %s157, 3
      %s159 = scalar_select %p158, %s157, 3
      %s160 = smul.addr %s159, 4
      %s161 = scalar_lea.vmem %s3, %s160
      %s162 = smul.u32 2, %s14
      %p163 = scmp.lt.s32.totalorder %s162, 3
      %s164 = scalar_select %p163, %s162, 3
      %s165 = smul.addr %s164, 4
      %s166 = scalar_lea.vmem %s0, %s165
      %s167 = smul.u32 2, %s14
      %s168 = smul.u32 2, %s14
      %p169 = scmp.lt.s32.totalorder %s168, 3
      %s170 = scalar_select %p169, %s168, 3
      %s171 = smul.addr %s170, 4
      %s172 = scalar_lea.vmem %s3, %s171
      %s173 = smul.u32 2, %s14
      %v174 = vld [vmem:[%s166] sm:$0xf]
      %v175 = vld [vmem:[%s166 + $0x4] sm:$0xf]
      %v176 = vunpack.c.l.bf16 %v174
      %v177 = vunpack.c.l.bf16 %v175
      %v178 = vld [vmem:[%s1] sm:$0x1]
      %v180 = vlaneseq
      %v181 = vshrl.u32 %v180, 7
      %v182 = vsub.s32 0, %v181
      %v183 = vrot.slane %v178, %v182
      %v185 = vmul.f32 %v176, %v183
      %v186 = vmul.f32 %v177, %v183
      %v187 = vld [vmem:[%s2] sm:$0x1]
      %v189 = vlaneseq
      %v190 = vshrl.u32 %v189, 7
      %v191 = vsub.s32 0, %v190
      %v192 = vrot.slane %v187, %v191
      %v194 = vadd.f32 %v185, %v192
      %v195 = vadd.f32 %v186, %v192
      %vm196 = vcmp.ge.f32.partialorder %v194, 0.0
      %vm197 = vcmp.ge.f32.partialorder %v195, 0.0
      %v198 = vmul.f32 %v194, 0.01
      %v199 = vmul.f32 %v195, 0.01
      %v200 = vsel %vm196, %v194, %v198
      %v201 = vsel %vm197, %v195, %v199
      %v202 = vpack.c.bf16 %v201, %v200
      %v204 = vunpack.c.l.b16 %v202
      %v205 = vunpack.c.h.b16 %v202
      %v206 = vpack.c.b16 %v204, %v204
      %v207 = vpack.c.b16 %v205, %v205
      %210 = vst [vmem:[%s172] sm:$0xf] %v206
      %211 = vst [vmem:[%s172 + $0x4] sm:$0xf] %v207
      %s212 = smul.u32 2, %s14
      %p213 = scmp.lt.s32.totalorder %s212, 3
      %s214 = scalar_select %p213, %s212, 3
      %s215 = smul.addr %s214, 4
      %s216 = scalar_lea.vmem %s3, %s215
      // Predicated region
      $region33: #{discriminator_forward.14} parent=31 // pred_check
        %p217 = pneg %p100
      $region34: #{discriminator_forward.14} parent=31 // pred_check_branch
        %219 = sbr.rel (%p217) target = $region36
      $region35: #{discriminator_forward.14} parent=31 // pred_region
        %s220 = smul.u32 2, %s14
      $region36: #{discriminator_forward.14} parent=31 // pred_fallthru
        _
    $region32: #{discriminator_forward.14} parent=5 // pred_fallthru
      _
    %p221 = scmp.le.s32.totalorder 2, %s9
    // Predicated region
    $region37: #{discriminator_forward.14} parent=5 // pred_check
      %p222 = pneg %p221
    $region38: #{discriminator_forward.14} parent=5 // pred_check_branch
      %224 = sbr.rel (%p222) target = $region40
    $region39: #{discriminator_forward.14} parent=5 // pred_region
      %s225 = ssub.s32 %s9, 2
      // Predicated region
      $region41: #{discriminator_forward.14} parent=39 // pred_check
        %p226 = pneg %p106
      $region42: #{discriminator_forward.14} parent=39 // pred_check_branch
        %228 = sbr.rel (%p226) target = $region44
      $region43: #{discriminator_forward.14} parent=39 // pred_region
        %s229 = smul.u32 2, %s15
        %p230 = scmp.lt.s32.totalorder %s229, 3
        %s231 = scalar_select %p230, %s229, 3
        %s232 = smul.addr %s231, 4
        %s233 = scalar_lea.vmem %s3, %s232
      $region44: #{discriminator_forward.14} parent=39 // pred_fallthru
        _
    $region40: #{discriminator_forward.14} parent=5 // pred_fallthru
      _
  $region6: #{discriminator_forward.14} parent=0 // loop_footer
    %s13 = sadd.s32 1, %s9
  $region7: #{discriminator_forward.14} parent=0 // loop_footer_branch
    %8 = sbr.rel target = $region3
  $region8: #{discriminator_forward.14} parent=0 // loop_exit
    _

// kernel: discriminator_forward.15
$region0: #{discriminator_forward.15}
  #allocation0 [shape = 'u32[]', space=smem, size = 0x4, offset = 0x4, fixed_abs, tag = 'smem constant byte address 0x4 - core index']
  #allocation1 [shape = 'u32[144,128]{1,0:T(1,128)}', space=vmem, size = 0x12000, scoped, tag = 'internal scratch']
  %s0 = inlined_call_operand.vmem [shape: bf16[2,2048], index: 0, kind: input, shape index: {}]
  %s1 = inlined_call_operand.vmem [shape: bf16[2048,128], index: 1, kind: input, shape index: {}]
  %s2 = inlined_call_operand.vmem [shape: f32[2,128], index: 2, kind: output, shape index: {}]
  %s3 = sld [smem:[#allocation0]]
  $region18: #{discriminator_forward.15} parent=0
    _
  %s5 = ssub.s32 1, %s3
  %s6 = scalar_select 0, %s5, %s3
  // Predicated region
  $region2: #{discriminator_forward.15} parent=0 // pred_check
    _
  $region3: #{discriminator_forward.15} parent=0 // pred_check_branch
    %8 = sbr.rel (0) target = $region5
  $region4: #{discriminator_forward.15} parent=0 // pred_region
    _
  $region5: #{discriminator_forward.15} parent=0 // pred_fallthru
    _
  // Predicated region
  $region6: #{discriminator_forward.15} parent=0 // pred_check
    _
  $region7: #{discriminator_forward.15} parent=0 // pred_check_branch
    %10 = sbr.rel (0) target = $region9
  $region8: #{discriminator_forward.15} parent=0 // pred_region
    _
  $region9: #{discriminator_forward.15} parent=0 // pred_fallthru
    _
  %v12 = vld [vmem:[%s0] sm:$0xff]
  %v13 = vld [vmem:[%s0 + $0x8] sm:$0xff]
  %v14 = vld [vmem:[%s1] sm:$0xf]
  %v15 = vld [vmem:[%s1 + $0x4] sm:$0xf]
  %v16 = vld [vmem:[%s1 + $0x8] sm:$0xf]
  %v17 = vld [vmem:[%s1 + $0xc] sm:$0xf]
  %v18 = vld [vmem:[%s1 + $0x10] sm:$0xf]
  %v19 = vld [vmem:[%s1 + $0x14] sm:$0xf]
  %v20 = vld [vmem:[%s1 + $0x18] sm:$0xf]
  %v21 = vld [vmem:[%s1 + $0x1c] sm:$0xf]
  %v22 = vld [vmem:[%s1 + $0x20] sm:$0xf]
  %v23 = vld [vmem:[%s1 + $0x24] sm:$0xf]
  %v24 = vld [vmem:[%s1 + $0x28] sm:$0xf]
  %v25 = vld [vmem:[%s1 + $0x2c] sm:$0xf]
  %v26 = vld [vmem:[%s1 + $0x30] sm:$0xf]
  %v27 = vld [vmem:[%s1 + $0x34] sm:$0xf]
  %v28 = vld [vmem:[%s1 + $0x38] sm:$0xf]
  %v29 = vld [vmem:[%s1 + $0x3c] sm:$0xf]
  %v30 = vld [vmem:[%s1 + $0x40] sm:$0xf]
  %v31 = vld [vmem:[%s1 + $0x44] sm:$0xf]
  %v32 = vld [vmem:[%s1 + $0x48] sm:$0xf]
  %v33 = vld [vmem:[%s1 + $0x4c] sm:$0xf]
  %v34 = vld [vmem:[%s1 + $0x50] sm:$0xf]
  %v35 = vld [vmem:[%s1 + $0x54] sm:$0xf]
  %v36 = vld [vmem:[%s1 + $0x58] sm:$0xf]
  %v37 = vld [vmem:[%s1 + $0x5c] sm:$0xf]
  %v38 = vld [vmem:[%s1 + $0x60] sm:$0xf]
  %v39 = vld [vmem:[%s1 + $0x64] sm:$0xf]
  %v40 = vld [vmem:[%s1 + $0x68] sm:$0xf]
  %v41 = vld [vmem:[%s1 + $0x6c] sm:$0xf]
  %v42 = vld [vmem:[%s1 + $0x70] sm:$0xf]
  %v43 = vld [vmem:[%s1 + $0x74] sm:$0xf]
  %v44 = vld [vmem:[%s1 + $0x78] sm:$0xf]
  %v45 = vld [vmem:[%s1 + $0x7c] sm:$0xf]
  %v46 = vld [vmem:[%s1 + $0x80] sm:$0xf]
  %v47 = vld [vmem:[%s1 + $0x84] sm:$0xf]
  %v48 = vld [vmem:[%s1 + $0x88] sm:$0xf]
  %v49 = vld [vmem:[%s1 + $0x8c] sm:$0xf]
  %v50 = vld [vmem:[%s1 + $0x90] sm:$0xf]
  %v51 = vld [vmem:[%s1 + $0x94] sm:$0xf]
  %v52 = vld [vmem:[%s1 + $0x98] sm:$0xf]
  %v53 = vld [vmem:[%s1 + $0x9c] sm:$0xf]
  %v54 = vld [vmem:[%s1 + $0xa0] sm:$0xf]
  %v55 = vld [vmem:[%s1 + $0xa4] sm:$0xf]
  %v56 = vld [vmem:[%s1 + $0xa8] sm:$0xf]
  %v57 = vld [vmem:[%s1 + $0xac] sm:$0xf]
  %v58 = vld [vmem:[%s1 + $0xb0] sm:$0xf]
  %v59 = vld [vmem:[%s1 + $0xb4] sm:$0xf]
  %v60 = vld [vmem:[%s1 + $0xb8] sm:$0xf]
  %v61 = vld [vmem:[%s1 + $0xbc] sm:$0xf]
  %v62 = vld [vmem:[%s1 + $0xc0] sm:$0xf]
  %v63 = vld [vmem:[%s1 + $0xc4] sm:$0xf]
  %v64 = vld [vmem:[%s1 + $0xc8] sm:$0xf]
  %v65 = vld [vmem:[%s1 + $0xcc] sm:$0xf]
  %v66 = vld [vmem:[%s1 + $0xd0] sm:$0xf]
  %v67 = vld [vmem:[%s1 + $0xd4] sm:$0xf]
  %v68 = vld [vmem:[%s1 + $0xd8] sm:$0xf]
  %v69 = vld [vmem:[%s1 + $0xdc] sm:$0xf]
  %v70 = vld [vmem:[%s1 + $0xe0] sm:$0xf]
  %v71 = vld [vmem:[%s1 + $0xe4] sm:$0xf]
  %v72 = vld [vmem:[%s1 + $0xe8] sm:$0xf]
  %v73 = vld [vmem:[%s1 + $0xec] sm:$0xf]
  %v74 = vld [vmem:[%s1 + $0xf0] sm:$0xf]
  %v75 = vld [vmem:[%s1 + $0xf4] sm:$0xf]
  %v76 = vld [vmem:[%s1 + $0xf8] sm:$0xf]
  %v77 = vld [vmem:[%s1 + $0xfc] sm:$0xf]
  %v78 = vld [vmem:[%s1 + $0x100] sm:$0xf]
  %v79 = vld [vmem:[%s1 + $0x104] sm:$0xf]
  %v80 = vld [vmem:[%s1 + $0x108] sm:$0xf]
  %v81 = vld [vmem:[%s1 + $0x10c] sm:$0xf]
  %v82 = vld [vmem:[%s1 + $0x110] sm:$0xf]
  %v83 = vld [vmem:[%s1 + $0x114] sm:$0xf]
  %v84 = vld [vmem:[%s1 + $0x118] sm:$0xf]
  %v85 = vld [vmem:[%s1 + $0x11c] sm:$0xf]
  %v86 = vld [vmem:[%s1 + $0x120] sm:$0xf]
  %v87 = vld [vmem:[%s1 + $0x124] sm:$0xf]
  %v88 = vld [vmem:[%s1 + $0x128] sm:$0xf]
  %v89 = vld [vmem:[%s1 + $0x12c] sm:$0xf]
  %v90 = vld [vmem:[%s1 + $0x130] sm:$0xf]
  %v91 = vld [vmem:[%s1 + $0x134] sm:$0xf]
  %v92 = vld [vmem:[%s1 + $0x138] sm:$0xf]
  %v93 = vld [vmem:[%s1 + $0x13c] sm:$0xf]
  %v94 = vld [vmem:[%s1 + $0x140] sm:$0xf]
  %v95 = vld [vmem:[%s1 + $0x144] sm:$0xf]
  %v96 = vld [vmem:[%s1 + $0x148] sm:$0xf]
  %v97 = vld [vmem:[%s1 + $0x14c] sm:$0xf]
  %v98 = vld [vmem:[%s1 + $0x150] sm:$0xf]
  %v99 = vld [vmem:[%s1 + $0x154] sm:$0xf]
  %v100 = vld [vmem:[%s1 + $0x158] sm:$0xf]
  %v101 = vld [vmem:[%s1 + $0x15c] sm:$0xf]
  %v102 = vld [vmem:[%s1 + $0x160] sm:$0xf]
  %v103 = vld [vmem:[%s1 + $0x164] sm:$0xf]
  %v104 = vld [vmem:[%s1 + $0x168] sm:$0xf]
  %v105 = vld [vmem:[%s1 + $0x16c] sm:$0xf]
  %v106 = vld [vmem:[%s1 + $0x170] sm:$0xf]
  %v107 = vld [vmem:[%s1 + $0x174] sm:$0xf]
  %v108 = vld [vmem:[%s1 + $0x178] sm:$0xf]
  %v109 = vld [vmem:[%s1 + $0x17c] sm:$0xf]
  %v110 = vld [vmem:[%s1 + $0x180] sm:$0xf]
  %v111 = vld [vmem:[%s1 + $0x184] sm:$0xf]
  %v112 = vld [vmem:[%s1 + $0x188] sm:$0xf]
  %v113 = vld [vmem:[%s1 + $0x18c] sm:$0xf]
  %v114 = vld [vmem:[%s1 + $0x190] sm:$0xf]
  %v115 = vld [vmem:[%s1 + $0x194] sm:$0xf]
  %v116 = vld [vmem:[%s1 + $0x198] sm:$0xf]
  %v117 = vld [vmem:[%s1 + $0x19c] sm:$0xf]
  %v118 = vld [vmem:[%s1 + $0x1a0] sm:$0xf]
  %v119 = vld [vmem:[%s1 + $0x1a4] sm:$0xf]
  %v120 = vld [vmem:[%s1 + $0x1a8] sm:$0xf]
  %v121 = vld [vmem:[%s1 + $0x1ac] sm:$0xf]
  %v122 = vld [vmem:[%s1 + $0x1b0] sm:$0xf]
  %v123 = vld [vmem:[%s1 + $0x1b4] sm:$0xf]
  %v124 = vld [vmem:[%s1 + $0x1b8] sm:$0xf]
  %v125 = vld [vmem:[%s1 + $0x1bc] sm:$0xf]
  %v126 = vld [vmem:[%s1 + $0x1c0] sm:$0xf]
  %v127 = vld [vmem:[%s1 + $0x1c4] sm:$0xf]
  %v128 = vld [vmem:[%s1 + $0x1c8] sm:$0xf]
  %v129 = vld [vmem:[%s1 + $0x1cc] sm:$0xf]
  %v130 = vld [vmem:[%s1 + $0x1d0] sm:$0xf]
  %v131 = vld [vmem:[%s1 + $0x1d4] sm:$0xf]
  %v132 = vld [vmem:[%s1 + $0x1d8] sm:$0xf]
  %v133 = vld [vmem:[%s1 + $0x1dc] sm:$0xf]
  %v134 = vld [vmem:[%s1 + $0x1e0] sm:$0xf]
  %v135 = vld [vmem:[%s1 + $0x1e4] sm:$0xf]
  %v136 = vld [vmem:[%s1 + $0x1e8] sm:$0xf]
  %v137 = vld [vmem:[%s1 + $0x1ec] sm:$0xf]
  %v138 = vld [vmem:[%s1 + $0x1f0] sm:$0xf]
  %v139 = vld [vmem:[%s1 + $0x1f4] sm:$0xf]
  %v140 = vld [vmem:[%s1 + $0x1f8] sm:$0xf]
  %v141 = vld [vmem:[%s1 + $0x1fc] sm:$0xf]
  %v142 = vld [vmem:[%s1 + $0x200] sm:$0xf]
  %v143 = vld [vmem:[%s1 + $0x204] sm:$0xf]
  %v144 = vld [vmem:[%s1 + $0x208] sm:$0xf]
  %v145 = vld [vmem:[%s1 + $0x20c] sm:$0xf]
  %v146 = vld [vmem:[%s1 + $0x210] sm:$0xf]
  %v147 = vld [vmem:[%s1 + $0x214] sm:$0xf]
  %v148 = vld [vmem:[%s1 + $0x218] sm:$0xf]
  %v149 = vld [vmem:[%s1 + $0x21c] sm:$0xf]
  %v150 = vld [vmem:[%s1 + $0x220] sm:$0xf]
  %v151 = vld [vmem:[%s1 + $0x224] sm:$0xf]
  %v152 = vld [vmem:[%s1 + $0x228] sm:$0xf]
  %v153 = vld [vmem:[%s1 + $0x22c] sm:$0xf]
  %v154 = vld [vmem:[%s1 + $0x230] sm:$0xf]
  %v155 = vld [vmem:[%s1 + $0x234] sm:$0xf]
  %v156 = vld [vmem:[%s1 + $0x238] sm:$0xf]
  %v157 = vld [vmem:[%s1 + $0x23c] sm:$0xf]
  %v158 = vld [vmem:[%s1 + $0x240] sm:$0xf]
  %v159 = vld [vmem:[%s1 + $0x244] sm:$0xf]
  %v160 = vld [vmem:[%s1 + $0x248] sm:$0xf]
  %v161 = vld [vmem:[%s1 + $0x24c] sm:$0xf]
  %v162 = vld [vmem:[%s1 + $0x250] sm:$0xf]
  %v163 = vld [vmem:[%s1 + $0x254] sm:$0xf]
  %v164 = vld [vmem:[%s1 + $0x258] sm:$0xf]
  %v165 = vld [vmem:[%s1 + $0x25c] sm:$0xf]
  %v166 = vld [vmem:[%s1 + $0x260] sm:$0xf]
  %v167 = vld [vmem:[%s1 + $0x264] sm:$0xf]
  %v168 = vld [vmem:[%s1 + $0x268] sm:$0xf]
  %v169 = vld [vmem:[%s1 + $0x26c] sm:$0xf]
  %v170 = vld [vmem:[%s1 + $0x270] sm:$0xf]
  %v171 = vld [vmem:[%s1 + $0x274] sm:$0xf]
  %v172 = vld [vmem:[%s1 + $0x278] sm:$0xf]
  %v173 = vld [vmem:[%s1 + $0x27c] sm:$0xf]
  %v174 = vld [vmem:[%s1 + $0x280] sm:$0xf]
  %v175 = vld [vmem:[%s1 + $0x284] sm:$0xf]
  %v176 = vld [vmem:[%s1 + $0x288] sm:$0xf]
  %v177 = vld [vmem:[%s1 + $0x28c] sm:$0xf]
  %v178 = vld [vmem:[%s1 + $0x290] sm:$0xf]
  %v179 = vld [vmem:[%s1 + $0x294] sm:$0xf]
  %v180 = vld [vmem:[%s1 + $0x298] sm:$0xf]
  %v181 = vld [vmem:[%s1 + $0x29c] sm:$0xf]
  %v182 = vld [vmem:[%s1 + $0x2a0] sm:$0xf]
  %v183 = vld [vmem:[%s1 + $0x2a4] sm:$0xf]
  %v184 = vld [vmem:[%s1 + $0x2a8] sm:$0xf]
  %v185 = vld [vmem:[%s1 + $0x2ac] sm:$0xf]
  %v186 = vld [vmem:[%s1 + $0x2b0] sm:$0xf]
  %v187 = vld [vmem:[%s1 + $0x2b4] sm:$0xf]
  %v188 = vld [vmem:[%s1 + $0x2b8] sm:$0xf]
  %v189 = vld [vmem:[%s1 + $0x2bc] sm:$0xf]
  %v190 = vld [vmem:[%s1 + $0x2c0] sm:$0xf]
  %v191 = vld [vmem:[%s1 + $0x2c4] sm:$0xf]
  %v192 = vld [vmem:[%s1 + $0x2c8] sm:$0xf]
  %v193 = vld [vmem:[%s1 + $0x2cc] sm:$0xf]
  %v194 = vld [vmem:[%s1 + $0x2d0] sm:$0xf]
  %v195 = vld [vmem:[%s1 + $0x2d4] sm:$0xf]
  %v196 = vld [vmem:[%s1 + $0x2d8] sm:$0xf]
  %v197 = vld [vmem:[%s1 + $0x2dc] sm:$0xf]
  %v198 = vld [vmem:[%s1 + $0x2e0] sm:$0xf]
  %v199 = vld [vmem:[%s1 + $0x2e4] sm:$0xf]
  %v200 = vld [vmem:[%s1 + $0x2e8] sm:$0xf]
  %v201 = vld [vmem:[%s1 + $0x2ec] sm:$0xf]
  %v202 = vld [vmem:[%s1 + $0x2f0] sm:$0xf]
  %v203 = vld [vmem:[%s1 + $0x2f4] sm:$0xf]
  %v204 = vld [vmem:[%s1 + $0x2f8] sm:$0xf]
  %v205 = vld [vmem:[%s1 + $0x2fc] sm:$0xf]
  %v206 = vld [vmem:[%s1 + $0x300] sm:$0xf]
  %v207 = vld [vmem:[%s1 + $0x304] sm:$0xf]
  %v208 = vld [vmem:[%s1 + $0x308] sm:$0xf]
  %v209 = vld [vmem:[%s1 + $0x30c] sm:$0xf]
  %v210 = vld [vmem:[%s1 + $0x310] sm:$0xf]
  %v211 = vld [vmem:[%s1 + $0x314] sm:$0xf]
  %v212 = vld [vmem:[%s1 + $0x318] sm:$0xf]
  %v213 = vld [vmem:[%s1 + $0x31c] sm:$0xf]
  %v214 = vld [vmem:[%s1 + $0x320] sm:$0xf]
  %v215 = vld [vmem:[%s1 + $0x324] sm:$0xf]
  %v216 = vld [vmem:[%s1 + $0x328] sm:$0xf]
  %v217 = vld [vmem:[%s1 + $0x32c] sm:$0xf]
  %v218 = vld [vmem:[%s1 + $0x330] sm:$0xf]
  %v219 = vld [vmem:[%s1 + $0x334] sm:$0xf]
  %v220 = vld [vmem:[%s1 + $0x338] sm:$0xf]
  %v221 = vld [vmem:[%s1 + $0x33c] sm:$0xf]
  %v222 = vld [vmem:[%s1 + $0x340] sm:$0xf]
  %v223 = vld [vmem:[%s1 + $0x344] sm:$0xf]
  %v224 = vld [vmem:[%s1 + $0x348] sm:$0xf]
  %v225 = vld [vmem:[%s1 + $0x34c] sm:$0xf]
  %v226 = vld [vmem:[%s1 + $0x350] sm:$0xf]
  %v227 = vld [vmem:[%s1 + $0x354] sm:$0xf]
  %v228 = vld [vmem:[%s1 + $0x358] sm:$0xf]
  %v229 = vld [vmem:[%s1 + $0x35c] sm:$0xf]
  %v230 = vld [vmem:[%s1 + $0x360] sm:$0xf]
  %v231 = vld [vmem:[%s1 + $0x364] sm:$0xf]
  %v232 = vld [vmem:[%s1 + $0x368] sm:$0xf]
  %v233 = vld [vmem:[%s1 + $0x36c] sm:$0xf]
  %v234 = vld [vmem:[%s1 + $0x370] sm:$0xf]
  %v235 = vld [vmem:[%s1 + $0x374] sm:$0xf]
  %v236 = vld [vmem:[%s1 + $0x378] sm:$0xf]
  %v237 = vld [vmem:[%s1 + $0x37c] sm:$0xf]
  %v238 = vld [vmem:[%s1 + $0x380] sm:$0xf]
  %v239 = vld [vmem:[%s1 + $0x384] sm:$0xf]
  %v240 = vld [vmem:[%s1 + $0x388] sm:$0xf]
  %v241 = vld [vmem:[%s1 + $0x38c] sm:$0xf]
  %v242 = vld [vmem:[%s1 + $0x390] sm:$0xf]
  %v243 = vld [vmem:[%s1 + $0x394] sm:$0xf]
  %v244 = vld [vmem:[%s1 + $0x398] sm:$0xf]
  %v245 = vld [vmem:[%s1 + $0x39c] sm:$0xf]
  %v246 = vld [vmem:[%s1 + $0x3a0] sm:$0xf]
  %v247 = vld [vmem:[%s1 + $0x3a4] sm:$0xf]
  %v248 = vld [vmem:[%s1 + $0x3a8] sm:$0xf]
  %v249 = vld [vmem:[%s1 + $0x3ac] sm:$0xf]
  %v250 = vld [vmem:[%s1 + $0x3b0] sm:$0xf]
  %v251 = vld [vmem:[%s1 + $0x3b4] sm:$0xf]
  %v252 = vld [vmem:[%s1 + $0x3b8] sm:$0xf]
  %v253 = vld [vmem:[%s1 + $0x3bc] sm:$0xf]
  %v254 = vld [vmem:[%s1 + $0x3c0] sm:$0xf]
  %v255 = vld [vmem:[%s1 + $0x3c4] sm:$0xf]
  %v256 = vld [vmem:[%s1 + $0x3c8] sm:$0xf]
  %v257 = vld [vmem:[%s1 + $0x3cc] sm:$0xf]
  %v258 = vld [vmem:[%s1 + $0x3d0] sm:$0xf]
  %v259 = vld [vmem:[%s1 + $0x3d4] sm:$0xf]
  %v260 = vld [vmem:[%s1 + $0x3d8] sm:$0xf]
  %v261 = vld [vmem:[%s1 + $0x3dc] sm:$0xf]
  %v262 = vld [vmem:[%s1 + $0x3e0] sm:$0xf]
  %v263 = vld [vmem:[%s1 + $0x3e4] sm:$0xf]
  %v264 = vld [vmem:[%s1 + $0x3e8] sm:$0xf]
  %v265 = vld [vmem:[%s1 + $0x3ec] sm:$0xf]
  %v266 = vld [vmem:[%s1 + $0x3f0] sm:$0xf]
  %v267 = vld [vmem:[%s1 + $0x3f4] sm:$0xf]
  %v268 = vld [vmem:[%s1 + $0x3f8] sm:$0xf]
  %v269 = vld [vmem:[%s1 + $0x3fc] sm:$0xf]
  %v272 = vcombine.high %v12, %v12
  %v274 = vunpack.c.l.s4 1966171168
  %v275 = vunpack.c.0.s8 %v274
  %v276 = vlaneseq
  %v277 = vshrl.u32 %v276, 7
  %v278 = vsub.s32 %v275, %v277
  %v279 = vrot.slane %v12, %v278
  %v281 = vunpack.c.l.s4 1966171168
  %v282 = vunpack.c.0.s8 %v281
  %v283 = vlaneseq
  %v284 = vshrl.u32 %v283, 7
  %v285 = vsub.s32 %v282, %v284
  %v286 = vrot.slane %v272, %v285
  %v287 = vcombine.high %v279, %v279
  %v288 = vcombine.high %v286, %v286
  %v290 = vunpack.c.l.s4 1966171168
  %v291 = vunpack.c.0.s8 %v290
  %v292 = vlaneseq
  %v293 = vshrl.u32 %v292, 7
  %v294 = vsub.s32 %v291, %v293
  %v295 = vrot.slane %v279, %v294
  %v297 = vunpack.c.l.s4 1966171168
  %v298 = vunpack.c.0.s8 %v297
  %v299 = vlaneseq
  %v300 = vshrl.u32 %v299, 7
  %v301 = vsub.s32 %v298, %v300
  %v302 = vrot.slane %v286, %v301
  %v304 = vunpack.c.l.s4 1966171168
  %v305 = vunpack.c.0.s8 %v304
  %v306 = vlaneseq
  %v307 = vshrl.u32 %v306, 7
  %v308 = vsub.s32 %v305, %v307
  %v309 = vrot.slane %v287, %v308
  %v311 = vunpack.c.l.s4 1966171168
  %v312 = vunpack.c.0.s8 %v311
  %v313 = vlaneseq
  %v314 = vshrl.u32 %v313, 7
  %v315 = vsub.s32 %v312, %v314
  %v316 = vrot.slane %v288, %v315
  %v317 = vcombine.high %v295, %v295
  %v318 = vcombine.high %v302, %v302
  %v319 = vcombine.high %v309, %v309
  %v320 = vcombine.high %v316, %v316
  %v321 = vcombine.high %v13, %v13
  %v323 = vunpack.c.l.s4 1966171168
  %v324 = vunpack.c.0.s8 %v323
  %v325 = vlaneseq
  %v326 = vshrl.u32 %v325, 7
  %v327 = vsub.s32 %v324, %v326
  %v328 = vrot.slane %v13, %v327
  %v330 = vunpack.c.l.s4 1966171168
  %v331 = vunpack.c.0.s8 %v330
  %v332 = vlaneseq
  %v333 = vshrl.u32 %v332, 7
  %v334 = vsub.s32 %v331, %v333
  %v335 = vrot.slane %v321, %v334
  %v336 = vcombine.high %v328, %v328
  %v337 = vcombine.high %v335, %v335
  %v339 = vunpack.c.l.s4 1966171168
  %v340 = vunpack.c.0.s8 %v339
  %v341 = vlaneseq
  %v342 = vshrl.u32 %v341, 7
  %v343 = vsub.s32 %v340, %v342
  %v344 = vrot.slane %v328, %v343
  %v346 = vunpack.c.l.s4 1966171168
  %v347 = vunpack.c.0.s8 %v346
  %v348 = vlaneseq
  %v349 = vshrl.u32 %v348, 7
  %v350 = vsub.s32 %v347, %v349
  %v351 = vrot.slane %v335, %v350
  %v353 = vunpack.c.l.s4 1966171168
  %v354 = vunpack.c.0.s8 %v353
  %v355 = vlaneseq
  %v356 = vshrl.u32 %v355, 7
  %v357 = vsub.s32 %v354, %v356
  %v358 = vrot.slane %v336, %v357
  %v360 = vunpack.c.l.s4 1966171168
  %v361 = vunpack.c.0.s8 %v360
  %v362 = vlaneseq
  %v363 = vshrl.u32 %v362, 7
  %v364 = vsub.s32 %v361, %v363
  %v365 = vrot.slane %v337, %v364
  %v366 = vcombine.high %v344, %v344
  %v367 = vcombine.high %v351, %v351
  %v368 = vcombine.high %v358, %v358
  %v369 = vcombine.high %v365, %v365
  %v642 = vunpack.c.l.b16 %v14
  %v643 = vunpack.c.l.b16 %v15
  %v644 = vunpack.c.l.b16 %v16
  %v645 = vunpack.c.l.b16 %v17
  %v646 = vunpack.c.l.b16 %v18
  %v647 = vunpack.c.l.b16 %v19
  %v648 = vunpack.c.l.b16 %v20
  %v649 = vunpack.c.l.b16 %v21
  %v650 = vunpack.c.l.b16 %v22
  %v651 = vunpack.c.l.b16 %v23
  %v652 = vunpack.c.l.b16 %v24
  %v653 = vunpack.c.l.b16 %v25
  %v654 = vunpack.c.l.b16 %v26
  %v655 = vunpack.c.l.b16 %v27
  %v656 = vunpack.c.l.b16 %v28
  %v657 = vunpack.c.l.b16 %v29
  %v658 = vunpack.c.l.b16 %v30
  %v659 = vunpack.c.l.b16 %v31
  %v660 = vunpack.c.l.b16 %v32
  %v661 = vunpack.c.l.b16 %v33
  %v662 = vunpack.c.l.b16 %v34
  %v663 = vunpack.c.l.b16 %v35
  %v664 = vunpack.c.l.b16 %v36
  %v665 = vunpack.c.l.b16 %v37
  %v666 = vunpack.c.l.b16 %v38
  %v667 = vunpack.c.l.b16 %v39
  %v668 = vunpack.c.l.b16 %v40
  %v669 = vunpack.c.l.b16 %v41
  %v670 = vunpack.c.l.b16 %v42
  %v671 = vunpack.c.l.b16 %v43
  %v672 = vunpack.c.l.b16 %v44
  %v673 = vunpack.c.l.b16 %v45
  %v674 = vunpack.c.l.b16 %v46
  %v675 = vunpack.c.l.b16 %v47
  %v676 = vunpack.c.l.b16 %v48
  %v677 = vunpack.c.l.b16 %v49
  %v678 = vunpack.c.l.b16 %v50
  %v679 = vunpack.c.l.b16 %v51
  %v680 = vunpack.c.l.b16 %v52
  %v681 = vunpack.c.l.b16 %v53
  %v682 = vunpack.c.l.b16 %v54
  %v683 = vunpack.c.l.b16 %v55
  %v684 = vunpack.c.l.b16 %v56
  %v685 = vunpack.c.l.b16 %v57
  %v686 = vunpack.c.l.b16 %v58
  %v687 = vunpack.c.l.b16 %v59
  %v688 = vunpack.c.l.b16 %v60
  %v689 = vunpack.c.l.b16 %v61
  %v690 = vunpack.c.l.b16 %v62
  %v691 = vunpack.c.l.b16 %v63
  %v692 = vunpack.c.l.b16 %v64
  %v693 = vunpack.c.l.b16 %v65
  %v694 = vunpack.c.l.b16 %v66
  %v695 = vunpack.c.l.b16 %v67
  %v696 = vunpack.c.l.b16 %v68
  %v697 = vunpack.c.l.b16 %v69
  %v698 = vunpack.c.l.b16 %v70
  %v699 = vunpack.c.l.b16 %v71
  %v700 = vunpack.c.l.b16 %v72
  %v701 = vunpack.c.l.b16 %v73
  %v702 = vunpack.c.l.b16 %v74
  %v703 = vunpack.c.l.b16 %v75
  %v704 = vunpack.c.l.b16 %v76
  %v705 = vunpack.c.l.b16 %v77
  %v706 = vunpack.c.l.b16 %v78
  %v707 = vunpack.c.l.b16 %v79
  %v708 = vunpack.c.l.b16 %v80
  %v709 = vunpack.c.l.b16 %v81
  %v710 = vunpack.c.l.b16 %v82
  %v711 = vunpack.c.l.b16 %v83
  %v712 = vunpack.c.l.b16 %v84
  %v713 = vunpack.c.l.b16 %v85
  %v714 = vunpack.c.l.b16 %v86
  %v715 = vunpack.c.l.b16 %v87
  %v716 = vunpack.c.l.b16 %v88
  %v717 = vunpack.c.l.b16 %v89
  %v718 = vunpack.c.l.b16 %v90
  %v719 = vunpack.c.l.b16 %v91
  %v720 = vunpack.c.l.b16 %v92
  %v721 = vunpack.c.l.b16 %v93
  %v722 = vunpack.c.l.b16 %v94
  %v723 = vunpack.c.l.b16 %v95
  %v724 = vunpack.c.l.b16 %v96
  %v725 = vunpack.c.l.b16 %v97
  %v726 = vunpack.c.l.b16 %v98
  %v727 = vunpack.c.l.b16 %v99
  %v728 = vunpack.c.l.b16 %v100
  %v729 = vunpack.c.l.b16 %v101
  %v730 = vunpack.c.l.b16 %v102
  %v731 = vunpack.c.l.b16 %v103
  %v732 = vunpack.c.l.b16 %v104
  %v733 = vunpack.c.l.b16 %v105
  %v734 = vunpack.c.l.b16 %v106
  %v735 = vunpack.c.l.b16 %v107
  %v736 = vunpack.c.l.b16 %v108
  %v737 = vunpack.c.l.b16 %v109
  %v738 = vunpack.c.l.b16 %v110
  %v739 = vunpack.c.l.b16 %v111
  %v740 = vunpack.c.l.b16 %v112
  %v741 = vunpack.c.l.b16 %v113
  %v742 = vunpack.c.l.b16 %v114
  %v743 = vunpack.c.l.b16 %v115
  %v744 = vunpack.c.l.b16 %v116
  %v745 = vunpack.c.l.b16 %v117
  %v746 = vunpack.c.l.b16 %v118
  %v747 = vunpack.c.l.b16 %v119
  %v748 = vunpack.c.l.b16 %v120
  %v749 = vunpack.c.l.b16 %v121
  %v750 = vunpack.c.l.b16 %v122
  %v751 = vunpack.c.l.b16 %v123
  %v752 = vunpack.c.l.b16 %v124
  %v753 = vunpack.c.l.b16 %v125
  %v754 = vunpack.c.l.b16 %v126
  %v755 = vunpack.c.l.b16 %v127
  %v756 = vunpack.c.l.b16 %v128
  %v757 = vunpack.c.l.b16 %v129
  %v758 = vunpack.c.l.b16 %v130
  %v759 = vunpack.c.l.b16 %v131
  %v760 = vunpack.c.l.b16 %v132
  %v761 = vunpack.c.l.b16 %v133
  %v762 = vunpack.c.l.b16 %v134
  %v763 = vunpack.c.l.b16 %v135
  %v764 = vunpack.c.l.b16 %v136
  %v765 = vunpack.c.l.b16 %v137
  %v766 = vunpack.c.l.b16 %v138
  %v767 = vunpack.c.l.b16 %v139
  %v768 = vunpack.c.l.b16 %v140
  %v769 = vunpack.c.l.b16 %v141
  %v770 = vunpack.c.l.b16 %v142
  %v771 = vunpack.c.l.b16 %v143
  %v772 = vunpack.c.l.b16 %v144
  %v773 = vunpack.c.l.b16 %v145
  %v774 = vunpack.c.l.b16 %v146
  %v775 = vunpack.c.l.b16 %v147
  %v776 = vunpack.c.l.b16 %v148
  %v777 = vunpack.c.l.b16 %v149
  %v778 = vunpack.c.l.b16 %v150
  %v779 = vunpack.c.l.b16 %v151
  %v780 = vunpack.c.l.b16 %v152
  %v781 = vunpack.c.l.b16 %v153
  %v782 = vunpack.c.l.b16 %v154
  %v783 = vunpack.c.l.b16 %v155
  %v784 = vunpack.c.l.b16 %v156
  %v785 = vunpack.c.l.b16 %v157
  %v786 = vunpack.c.l.b16 %v158
  %v787 = vunpack.c.l.b16 %v159
  %v788 = vunpack.c.l.b16 %v160
  %v789 = vunpack.c.l.b16 %v161
  %v790 = vunpack.c.l.b16 %v162
  %v791 = vunpack.c.l.b16 %v163
  %v792 = vunpack.c.l.b16 %v164
  %v793 = vunpack.c.l.b16 %v165
  %v794 = vunpack.c.l.b16 %v166
  %v795 = vunpack.c.l.b16 %v167
  %v796 = vunpack.c.l.b16 %v168
  %v797 = vunpack.c.l.b16 %v169
  %v798 = vunpack.c.l.b16 %v170
  %v799 = vunpack.c.l.b16 %v171
  %v800 = vunpack.c.l.b16 %v172
  %v801 = vunpack.c.l.b16 %v173
  %v802 = vunpack.c.l.b16 %v174
  %v803 = vunpack.c.l.b16 %v175
  %v804 = vunpack.c.l.b16 %v176
  %v805 = vunpack.c.l.b16 %v177
  %v806 = vunpack.c.l.b16 %v178
  %v807 = vunpack.c.l.b16 %v179
  %v808 = vunpack.c.l.b16 %v180
  %v809 = vunpack.c.l.b16 %v181
  %v810 = vunpack.c.l.b16 %v182
  %v811 = vunpack.c.l.b16 %v183
  %v812 = vunpack.c.l.b16 %v184
  %v813 = vunpack.c.l.b16 %v185
  %v814 = vunpack.c.l.b16 %v186
  %v815 = vunpack.c.l.b16 %v187
  %v816 = vunpack.c.l.b16 %v188
  %v817 = vunpack.c.l.b16 %v189
  %v818 = vunpack.c.l.b16 %v190
  %v819 = vunpack.c.l.b16 %v191
  %v820 = vunpack.c.l.b16 %v192
  %v821 = vunpack.c.l.b16 %v193
  %v822 = vunpack.c.l.b16 %v194
  %v823 = vunpack.c.l.b16 %v195
  %v824 = vunpack.c.l.b16 %v196
  %v825 = vunpack.c.l.b16 %v197
  %v826 = vunpack.c.l.b16 %v198
  %v827 = vunpack.c.l.b16 %v199
  %v828 = vunpack.c.l.b16 %v200
  %v829 = vunpack.c.l.b16 %v201
  %v830 = vunpack.c.l.b16 %v202
  %v831 = vunpack.c.l.b16 %v203
  %v832 = vunpack.c.l.b16 %v204
  %v833 = vunpack.c.l.b16 %v205
  %v834 = vunpack.c.l.b16 %v206
  %v835 = vunpack.c.l.b16 %v207
  %v836 = vunpack.c.l.b16 %v208
  %v837 = vunpack.c.l.b16 %v209
  %v838 = vunpack.c.l.b16 %v210
  %v839 = vunpack.c.l.b16 %v211
  %v840 = vunpack.c.l.b16 %v212
  %v841 = vunpack.c.l.b16 %v213
  %v842 = vunpack.c.l.b16 %v214
  %v843 = vunpack.c.l.b16 %v215
  %v844 = vunpack.c.l.b16 %v216
  %v845 = vunpack.c.l.b16 %v217
  %v846 = vunpack.c.l.b16 %v218
  %v847 = vunpack.c.l.b16 %v219
  %v848 = vunpack.c.l.b16 %v220
  %v849 = vunpack.c.l.b16 %v221
  %v850 = vunpack.c.l.b16 %v222
  %v851 = vunpack.c.l.b16 %v223
  %v852 = vunpack.c.l.b16 %v224
  %v853 = vunpack.c.l.b16 %v225
  %v854 = vunpack.c.l.b16 %v226
  %v855 = vunpack.c.l.b16 %v227
  %v856 = vunpack.c.l.b16 %v228
  %v857 = vunpack.c.l.b16 %v229
  %v858 = vunpack.c.l.b16 %v230
  %v859 = vunpack.c.l.b16 %v231
  %v860 = vunpack.c.l.b16 %v232
  %v861 = vunpack.c.l.b16 %v233
  %v862 = vunpack.c.l.b16 %v234
  %v863 = vunpack.c.l.b16 %v235
  %v864 = vunpack.c.l.b16 %v236
  %v865 = vunpack.c.l.b16 %v237
  %v866 = vunpack.c.l.b16 %v238
  %v867 = vunpack.c.l.b16 %v239
  %v868 = vunpack.c.l.b16 %v240
  %v869 = vunpack.c.l.b16 %v241
  %v870 = vunpack.c.l.b16 %v242
  %v871 = vunpack.c.l.b16 %v243
  %v872 = vunpack.c.l.b16 %v244
  %v873 = vunpack.c.l.b16 %v245
  %v874 = vunpack.c.l.b16 %v246
  %v875 = vunpack.c.l.b16 %v247
  %v876 = vunpack.c.l.b16 %v248
  %v877 = vunpack.c.l.b16 %v249
  %v878 = vunpack.c.l.b16 %v250
  %v879 = vunpack.c.l.b16 %v251
  %v880 = vunpack.c.l.b16 %v252
  %v881 = vunpack.c.l.b16 %v253
  %v882 = vunpack.c.l.b16 %v254
  %v883 = vunpack.c.l.b16 %v255
  %v884 = vunpack.c.l.b16 %v256
  %v885 = vunpack.c.l.b16 %v257
  %v886 = vunpack.c.l.b16 %v258
  %v887 = vunpack.c.l.b16 %v259
  %v888 = vunpack.c.l.b16 %v260
  %v889 = vunpack.c.l.b16 %v261
  %v890 = vunpack.c.l.b16 %v262
  %v891 = vunpack.c.l.b16 %v263
  %v892 = vunpack.c.l.b16 %v264
  %v893 = vunpack.c.l.b16 %v265
  %v894 = vunpack.c.l.b16 %v266
  %v895 = vunpack.c.l.b16 %v267
  %v896 = vunpack.c.l.b16 %v268
  %v897 = vunpack.c.l.b16 %v269
  %v898 = vpack.c.b16 %v643, %v642
  %v899 = vpack.c.b16 %v645, %v644
  %v900 = vpack.c.b16 %v647, %v646
  %v901 = vpack.c.b16 %v649, %v648
  %v902 = vpack.c.b16 %v651, %v650
  %v903 = vpack.c.b16 %v653, %v652
  %v904 = vpack.c.b16 %v655, %v654
  %v905 = vpack.c.b16 %v657, %v656
  %v906 = vpack.c.b16 %v659, %v658
  %v907 = vpack.c.b16 %v661, %v660
  %v908 = vpack.c.b16 %v663, %v662
  %v909 = vpack.c.b16 %v665, %v664
  %v910 = vpack.c.b16 %v667, %v666
  %v911 = vpack.c.b16 %v669, %v668
  %v912 = vpack.c.b16 %v671, %v670
  %v913 = vpack.c.b16 %v673, %v672
  %v914 = vpack.c.b16 %v675, %v674
  %v915 = vpack.c.b16 %v677, %v676
  %v916 = vpack.c.b16 %v679, %v678
  %v917 = vpack.c.b16 %v681, %v680
  %v918 = vpack.c.b16 %v683, %v682
  %v919 = vpack.c.b16 %v685, %v684
  %v920 = vpack.c.b16 %v687, %v686
  %v921 = vpack.c.b16 %v689, %v688
  %v922 = vpack.c.b16 %v691, %v690
  %v923 = vpack.c.b16 %v693, %v692
  %v924 = vpack.c.b16 %v695, %v694
  %v925 = vpack.c.b16 %v697, %v696
  %v926 = vpack.c.b16 %v699, %v698
  %v927 = vpack.c.b16 %v701, %v700
  %v928 = vpack.c.b16 %v703, %v702
  %v929 = vpack.c.b16 %v705, %v704
  %v930 = vpack.c.b16 %v707, %v706
  %v931 = vpack.c.b16 %v709, %v708
  %v932 = vpack.c.b16 %v711, %v710
  %v933 = vpack.c.b16 %v713, %v712
  %v934 = vpack.c.b16 %v715, %v714
  %v935 = vpack.c.b16 %v717, %v716
  %v936 = vpack.c.b16 %v719, %v718
  %v937 = vpack.c.b16 %v721, %v720
  %v938 = vpack.c.b16 %v723, %v722
  %v939 = vpack.c.b16 %v725, %v724
  %v940 = vpack.c.b16 %v727, %v726
  %v941 = vpack.c.b16 %v729, %v728
  %v942 = vpack.c.b16 %v731, %v730
  %v943 = vpack.c.b16 %v733, %v732
  %v944 = vpack.c.b16 %v735, %v734
  %v945 = vpack.c.b16 %v737, %v736
  %v946 = vpack.c.b16 %v739, %v738
  %v947 = vpack.c.b16 %v741, %v740
  %v948 = vpack.c.b16 %v743, %v742
  %v949 = vpack.c.b16 %v745, %v744
  %v950 = vpack.c.b16 %v747, %v746
  %v951 = vpack.c.b16 %v749, %v748
  %v952 = vpack.c.b16 %v751, %v750
  %v953 = vpack.c.b16 %v753, %v752
  %v954 = vpack.c.b16 %v755, %v754
  %v955 = vpack.c.b16 %v757, %v756
  %v956 = vpack.c.b16 %v759, %v758
  %v957 = vpack.c.b16 %v761, %v760
  %v958 = vpack.c.b16 %v763, %v762
  %v959 = vpack.c.b16 %v765, %v764
  %v960 = vpack.c.b16 %v767, %v766
  %v961 = vpack.c.b16 %v769, %v768
  %v962 = vpack.c.b16 %v771, %v770
  %v963 = vpack.c.b16 %v773, %v772
  %v964 = vpack.c.b16 %v775, %v774
  %v965 = vpack.c.b16 %v777, %v776
  %v966 = vpack.c.b16 %v779, %v778
  %v967 = vpack.c.b16 %v781, %v780
  %v968 = vpack.c.b16 %v783, %v782
  %v969 = vpack.c.b16 %v785, %v784
  %v970 = vpack.c.b16 %v787, %v786
  %v971 = vpack.c.b16 %v789, %v788
  %v972 = vpack.c.b16 %v791, %v790
  %v973 = vpack.c.b16 %v793, %v792
  %v974 = vpack.c.b16 %v795, %v794
  %v975 = vpack.c.b16 %v797, %v796
  %v976 = vpack.c.b16 %v799, %v798
  %v977 = vpack.c.b16 %v801, %v800
  %v978 = vpack.c.b16 %v803, %v802
  %v979 = vpack.c.b16 %v805, %v804
  %v980 = vpack.c.b16 %v807, %v806
  %v981 = vpack.c.b16 %v809, %v808
  %v982 = vpack.c.b16 %v811, %v810
  %v983 = vpack.c.b16 %v813, %v812
  %v984 = vpack.c.b16 %v815, %v814
  %v985 = vpack.c.b16 %v817, %v816
  %v986 = vpack.c.b16 %v819, %v818
  %v987 = vpack.c.b16 %v821, %v820
  %v988 = vpack.c.b16 %v823, %v822
  %v989 = vpack.c.b16 %v825, %v824
  %v990 = vpack.c.b16 %v827, %v826
  %v991 = vpack.c.b16 %v829, %v828
  %v992 = vpack.c.b16 %v831, %v830
  %v993 = vpack.c.b16 %v833, %v832
  %v994 = vpack.c.b16 %v835, %v834
  %v995 = vpack.c.b16 %v837, %v836
  %v996 = vpack.c.b16 %v839, %v838
  %v997 = vpack.c.b16 %v841, %v840
  %v998 = vpack.c.b16 %v843, %v842
  %v999 = vpack.c.b16 %v845, %v844
  %v1000 = vpack.c.b16 %v847, %v846
  %v1001 = vpack.c.b16 %v849, %v848
  %v1002 = vpack.c.b16 %v851, %v850
  %v1003 = vpack.c.b16 %v853, %v852
  %v1004 = vpack.c.b16 %v855, %v854
  %v1005 = vpack.c.b16 %v857, %v856
  %v1006 = vpack.c.b16 %v859, %v858
  %v1007 = vpack.c.b16 %v861, %v860
  %v1008 = vpack.c.b16 %v863, %v862
  %v1009 = vpack.c.b16 %v865, %v864
  %v1010 = vpack.c.b16 %v867, %v866
  %v1011 = vpack.c.b16 %v869, %v868
  %v1012 = vpack.c.b16 %v871, %v870
  %v1013 = vpack.c.b16 %v873, %v872
  %v1014 = vpack.c.b16 %v875, %v874
  %v1015 = vpack.c.b16 %v877, %v876
  %v1016 = vpack.c.b16 %v879, %v878
  %v1017 = vpack.c.b16 %v881, %v880
  %v1018 = vpack.c.b16 %v883, %v882
  %v1019 = vpack.c.b16 %v885, %v884
  %v1020 = vpack.c.b16 %v887, %v886
  %v1021 = vpack.c.b16 %v889, %v888
  %v1022 = vpack.c.b16 %v891, %v890
  %v1023 = vpack.c.b16 %v893, %v892
  %v1024 = vpack.c.b16 %v895, %v894
  %v1025 = vpack.c.b16 %v897, %v896
  %1154 = vmatprep.subr.bf16.mxu0 0
  %1155 = vmatpush1.bf16.msra.mxu0 %v905
  %1156 = vmatprep.subr.bf16.mxu0 0
  %1157 = vmatpush1.bf16.msra.mxu0 %v904
  %1158 = vmatprep.subr.bf16.mxu0 0
  %1159 = vmatpush1.bf16.msra.mxu0 %v903
  %1160 = vmatprep.subr.bf16.mxu0 0
  %1161 = vmatpush1.bf16.msra.mxu0 %v902
  %1162 = vmatprep.subr.bf16.mxu0 0
  %1163 = vmatpush1.bf16.msra.mxu0 %v901
  %1164 = vmatprep.subr.bf16.mxu0 0
  %1165 = vmatpush1.bf16.msra.mxu0 %v900
  %1166 = vmatprep.subr.bf16.mxu0 0
  %1167 = vmatpush1.bf16.msra.mxu0 %v899
  %1168 = vmatprep.subr.bf16.mxu0 0
  %1169 = vmatpush1.bf16.msra.mxu0 %v898
  %1170 = vmatprep.subr.bf16.mxu0 0
  %1171 = vmatpush2.bf16.msra.mxu0 %v913
  %1172 = vmatprep.subr.bf16.mxu0 0
  %1173 = vmatpush2.bf16.msra.mxu0 %v912
  %1174 = vmatprep.subr.bf16.mxu0 0
  %1175 = vmatpush2.bf16.msra.mxu0 %v911
  %1176 = vmatprep.subr.bf16.mxu0 0
  %1177 = vmatpush2.bf16.msra.mxu0 %v910
  %1178 = vmatprep.subr.bf16.mxu0 0
  %1179 = vmatpush2.bf16.msra.mxu0 %v909
  %1180 = vmatprep.subr.bf16.mxu0 0
  %1181 = vmatpush2.bf16.msra.mxu0 %v908
  %1182 = vmatprep.subr.bf16.mxu0 0
  %1183 = vmatpush2.bf16.msra.mxu0 %v907
  %1184 = vmatprep.subr.bf16.mxu0 0
  %1185 = vmatpush2.bf16.msra.mxu0 %v906
  %1186 = vmatprep.mubr.bf16.mxu0 %v309
  %1187 = vmatmul.mubr.bf16.gmra.mxu0 %v295
  %v1188 = vpop.f32.mrf.mxu0
  %v1189 = vadd.f32 0.0, %v1188
  %v1190 = vpop.f32.mrf.mxu0
  %v1191 = vpop.f32.mrf.mxu0
  %v1192 = vpop.f32.mrf.mxu0
  %1193 = vdwg.mxu0
  %1194 = vmatprep.subr.bf16.mxu0 0
  %1195 = vmatpush1.bf16.msra.mxu0 %v921
  %1196 = vmatprep.subr.bf16.mxu0 0
  %1197 = vmatpush1.bf16.msra.mxu0 %v920
  %1198 = vmatprep.subr.bf16.mxu0 0
  %1199 = vmatpush1.bf16.msra.mxu0 %v919
  %1200 = vmatprep.subr.bf16.mxu0 0
  %1201 = vmatpush1.bf16.msra.mxu0 %v918
  %1202 = vmatprep.subr.bf16.mxu0 0
  %1203 = vmatpush1.bf16.msra.mxu0 %v917
  %1204 = vmatprep.subr.bf16.mxu0 0
  %1205 = vmatpush1.bf16.msra.mxu0 %v916
  %1206 = vmatprep.subr.bf16.mxu0 0
  %1207 = vmatpush1.bf16.msra.mxu0 %v915
  %1208 = vmatprep.subr.bf16.mxu0 0
  %1209 = vmatpush1.bf16.msra.mxu0 %v914
  %1210 = vmatprep.subr.bf16.mxu0 0
  %1211 = vmatpush2.bf16.msra.mxu0 %v929
  %1212 = vmatprep.subr.bf16.mxu0 0
  %1213 = vmatpush2.bf16.msra.mxu0 %v928
  %1214 = vmatprep.subr.bf16.mxu0 0
  %1215 = vmatpush2.bf16.msra.mxu0 %v927
  %1216 = vmatprep.subr.bf16.mxu0 0
  %1217 = vmatpush2.bf16.msra.mxu0 %v926
  %1218 = vmatprep.subr.bf16.mxu0 0
  %1219 = vmatpush2.bf16.msra.mxu0 %v925
  %1220 = vmatprep.subr.bf16.mxu0 0
  %1221 = vmatpush2.bf16.msra.mxu0 %v924
  %1222 = vmatprep.subr.bf16.mxu0 0
  %1223 = vmatpush2.bf16.msra.mxu0 %v923
  %1224 = vmatprep.subr.bf16.mxu0 0
  %1225 = vmatpush2.bf16.msra.mxu0 %v922
  %1226 = vmatprep.mubr.bf16.mxu0 %v319
  %1227 = vmatmul.mubr.bf16.gmra.mxu0 %v317
  %v1228 = vpop.f32.mrf.mxu0
  %v1229 = vadd.f32 %v1189, %v1228
  %v1230 = vpop.f32.mrf.mxu0
  %v1231 = vpop.f32.mrf.mxu0
  %v1232 = vpop.f32.mrf.mxu0
  %1233 = vdwg.mxu0
  %1234 = vmatprep.subr.bf16.mxu0 0
  %1235 = vmatpush1.bf16.msra.mxu0 %v937
  %1236 = vmatprep.subr.bf16.mxu0 0
  %1237 = vmatpush1.bf16.msra.mxu0 %v936
  %1238 = vmatprep.subr.bf16.mxu0 0
  %1239 = vmatpush1.bf16.msra.mxu0 %v935
  %1240 = vmatprep.subr.bf16.mxu0 0
  %1241 = vmatpush1.bf16.msra.mxu0 %v934
  %1242 = vmatprep.subr.bf16.mxu0 0
  %1243 = vmatpush1.bf16.msra.mxu0 %v933
  %1244 = vmatprep.subr.bf16.mxu0 0
  %1245 = vmatpush1.bf16.msra.mxu0 %v932
  %1246 = vmatprep.subr.bf16.mxu0 0
  %1247 = vmatpush1.bf16.msra.mxu0 %v931
  %1248 = vmatprep.subr.bf16.mxu0 0
  %1249 = vmatpush1.bf16.msra.mxu0 %v930
  %1250 = vmatprep.subr.bf16.mxu0 0
  %1251 = vmatpush2.bf16.msra.mxu0 %v945
  %1252 = vmatprep.subr.bf16.mxu0 0
  %1253 = vmatpush2.bf16.msra.mxu0 %v944
  %1254 = vmatprep.subr.bf16.mxu0 0
  %1255 = vmatpush2.bf16.msra.mxu0 %v943
  %1256 = vmatprep.subr.bf16.mxu0 0
  %1257 = vmatpush2.bf16.msra.mxu0 %v942
  %1258 = vmatprep.subr.bf16.mxu0 0
  %1259 = vmatpush2.bf16.msra.mxu0 %v941
  %1260 = vmatprep.subr.bf16.mxu0 0
  %1261 = vmatpush2.bf16.msra.mxu0 %v940
  %1262 = vmatprep.subr.bf16.mxu0 0
  %1263 = vmatpush2.bf16.msra.mxu0 %v939
  %1264 = vmatprep.subr.bf16.mxu0 0
  %1265 = vmatpush2.bf16.msra.mxu0 %v938
  %1266 = vmatprep.mubr.bf16.mxu0 %v316
  %1267 = vmatmul.mubr.bf16.gmra.mxu0 %v302
  %v1268 = vpop.f32.mrf.mxu0
  %v1269 = vadd.f32 %v1229, %v1268
  %v1270 = vpop.f32.mrf.mxu0
  %v1271 = vpop.f32.mrf.mxu0
  %v1272 = vpop.f32.mrf.mxu0
  %1273 = vdwg.mxu0
  %1274 = vmatprep.subr.bf16.mxu0 0
  %1275 = vmatpush1.bf16.msra.mxu0 %v953
  %1276 = vmatprep.subr.bf16.mxu0 0
  %1277 = vmatpush1.bf16.msra.mxu0 %v952
  %1278 = vmatprep.subr.bf16.mxu0 0
  %1279 = vmatpush1.bf16.msra.mxu0 %v951
  %1280 = vmatprep.subr.bf16.mxu0 0
  %1281 = vmatpush1.bf16.msra.mxu0 %v950
  %1282 = vmatprep.subr.bf16.mxu0 0
  %1283 = vmatpush1.bf16.msra.mxu0 %v949
  %1284 = vmatprep.subr.bf16.mxu0 0
  %1285 = vmatpush1.bf16.msra.mxu0 %v948
  %1286 = vmatprep.subr.bf16.mxu0 0
  %1287 = vmatpush1.bf16.msra.mxu0 %v947
  %1288 = vmatprep.subr.bf16.mxu0 0
  %1289 = vmatpush1.bf16.msra.mxu0 %v946
  %1290 = vmatprep.subr.bf16.mxu0 0
  %1291 = vmatpush2.bf16.msra.mxu0 %v961
  %1292 = vmatprep.subr.bf16.mxu0 0
  %1293 = vmatpush2.bf16.msra.mxu0 %v960
  %1294 = vmatprep.subr.bf16.mxu0 0
  %1295 = vmatpush2.bf16.msra.mxu0 %v959
  %1296 = vmatprep.subr.bf16.mxu0 0
  %1297 = vmatpush2.bf16.msra.mxu0 %v958
  %1298 = vmatprep.subr.bf16.mxu0 0
  %1299 = vmatpush2.bf16.msra.mxu0 %v957
  %1300 = vmatprep.subr.bf16.mxu0 0
  %1301 = vmatpush2.bf16.msra.mxu0 %v956
  %1302 = vmatprep.subr.bf16.mxu0 0
  %1303 = vmatpush2.bf16.msra.mxu0 %v955
  %1304 = vmatprep.subr.bf16.mxu0 0
  %1305 = vmatpush2.bf16.msra.mxu0 %v954
  %1306 = vmatprep.mubr.bf16.mxu0 %v320
  %1307 = vmatmul.mubr.bf16.gmra.mxu0 %v318
  %v1308 = vpop.f32.mrf.mxu0
  %v1309 = vadd.f32 %v1269, %v1308
  %v1310 = vpop.f32.mrf.mxu0
  %v1311 = vpop.f32.mrf.mxu0
  %v1312 = vpop.f32.mrf.mxu0
  %1313 = vdwg.mxu0
  %1314 = vmatprep.subr.bf16.mxu0 0
  %1315 = vmatpush1.bf16.msra.mxu0 %v969
  %1316 = vmatprep.subr.bf16.mxu0 0
  %1317 = vmatpush1.bf16.msra.mxu0 %v968
  %1318 = vmatprep.subr.bf16.mxu0 0
  %1319 = vmatpush1.bf16.msra.mxu0 %v967
  %1320 = vmatprep.subr.bf16.mxu0 0
  %1321 = vmatpush1.bf16.msra.mxu0 %v966
  %1322 = vmatprep.subr.bf16.mxu0 0
  %1323 = vmatpush1.bf16.msra.mxu0 %v965
  %1324 = vmatprep.subr.bf16.mxu0 0
  %1325 = vmatpush1.bf16.msra.mxu0 %v964
  %1326 = vmatprep.subr.bf16.mxu0 0
  %1327 = vmatpush1.bf16.msra.mxu0 %v963
  %1328 = vmatprep.subr.bf16.mxu0 0
  %1329 = vmatpush1.bf16.msra.mxu0 %v962
  %1330 = vmatprep.subr.bf16.mxu0 0
  %1331 = vmatpush2.bf16.msra.mxu0 %v977
  %1332 = vmatprep.subr.bf16.mxu0 0
  %1333 = vmatpush2.bf16.msra.mxu0 %v976
  %1334 = vmatprep.subr.bf16.mxu0 0
  %1335 = vmatpush2.bf16.msra.mxu0 %v975
  %1336 = vmatprep.subr.bf16.mxu0 0
  %1337 = vmatpush2.bf16.msra.mxu0 %v974
  %1338 = vmatprep.subr.bf16.mxu0 0
  %1339 = vmatpush2.bf16.msra.mxu0 %v973
  %1340 = vmatprep.subr.bf16.mxu0 0
  %1341 = vmatpush2.bf16.msra.mxu0 %v972
  %1342 = vmatprep.subr.bf16.mxu0 0
  %1343 = vmatpush2.bf16.msra.mxu0 %v971
  %1344 = vmatprep.subr.bf16.mxu0 0
  %1345 = vmatpush2.bf16.msra.mxu0 %v970
  %1346 = vmatprep.mubr.bf16.mxu0 %v358
  %1347 = vmatmul.mubr.bf16.gmra.mxu0 %v344
  %v1348 = vpop.f32.mrf.mxu0
  %v1349 = vadd.f32 %v1309, %v1348
  %v1350 = vpop.f32.mrf.mxu0
  %v1351 = vpop.f32.mrf.mxu0
  %v1352 = vpop.f32.mrf.mxu0
  %1353 = vdwg.mxu0
  %1354 = vmatprep.subr.bf16.mxu0 0
  %1355 = vmatpush1.bf16.msra.mxu0 %v985
  %1356 = vmatprep.subr.bf16.mxu0 0
  %1357 = vmatpush1.bf16.msra.mxu0 %v984
  %1358 = vmatprep.subr.bf16.mxu0 0
  %1359 = vmatpush1.bf16.msra.mxu0 %v983
  %1360 = vmatprep.subr.bf16.mxu0 0
  %1361 = vmatpush1.bf16.msra.mxu0 %v982
  %1362 = vmatprep.subr.bf16.mxu0 0
  %1363 = vmatpush1.bf16.msra.mxu0 %v981
  %1364 = vmatprep.subr.bf16.mxu0 0
  %1365 = vmatpush1.bf16.msra.mxu0 %v980
  %1366 = vmatprep.subr.bf16.mxu0 0
  %1367 = vmatpush1.bf16.msra.mxu0 %v979
  %1368 = vmatprep.subr.bf16.mxu0 0
  %1369 = vmatpush1.bf16.msra.mxu0 %v978
  %1370 = vmatprep.subr.bf16.mxu0 0
  %1371 = vmatpush2.bf16.msra.mxu0 %v993
  %1372 = vmatprep.subr.bf16.mxu0 0
  %1373 = vmatpush2.bf16.msra.mxu0 %v992
  %1374 = vmatprep.subr.bf16.mxu0 0
  %1375 = vmatpush2.bf16.msra.mxu0 %v991
  %1376 = vmatprep.subr.bf16.mxu0 0
  %1377 = vmatpush2.bf16.msra.mxu0 %v990
  %1378 = vmatprep.subr.bf16.mxu0 0
  %1379 = vmatpush2.bf16.msra.mxu0 %v989
  %1380 = vmatprep.subr.bf16.mxu0 0
  %1381 = vmatpush2.bf16.msra.mxu0 %v988
  %1382 = vmatprep.subr.bf16.mxu0 0
  %1383 = vmatpush2.bf16.msra.mxu0 %v987
  %1384 = vmatprep.subr.bf16.mxu0 0
  %1385 = vmatpush2.bf16.msra.mxu0 %v986
  %1386 = vmatprep.mubr.bf16.mxu0 %v368
  %1387 = vmatmul.mubr.bf16.gmra.mxu0 %v366
  %v1388 = vpop.f32.mrf.mxu0
  %v1389 = vadd.f32 %v1349, %v1388
  %v1390 = vpop.f32.mrf.mxu0
  %v1391 = vpop.f32.mrf.mxu0
  %v1392 = vpop.f32.mrf.mxu0
  %1393 = vdwg.mxu0
  %1394 = vmatprep.subr.bf16.mxu0 0
  %1395 = vmatpush1.bf16.msra.mxu0 %v1001
  %1396 = vmatprep.subr.bf16.mxu0 0
  %1397 = vmatpush1.bf16.msra.mxu0 %v1000
  %1398 = vmatprep.subr.bf16.mxu0 0
  %1399 = vmatpush1.bf16.msra.mxu0 %v999
  %1400 = vmatprep.subr.bf16.mxu0 0
  %1401 = vmatpush1.bf16.msra.mxu0 %v998
  %1402 = vmatprep.subr.bf16.mxu0 0
  %1403 = vmatpush1.bf16.msra.mxu0 %v997
  %1404 = vmatprep.subr.bf16.mxu0 0
  %1405 = vmatpush1.bf16.msra.mxu0 %v996
  %1406 = vmatprep.subr.bf16.mxu0 0
  %1407 = vmatpush1.bf16.msra.mxu0 %v995
  %1408 = vmatprep.subr.bf16.mxu0 0
  %1409 = vmatpush1.bf16.msra.mxu0 %v994
  %1410 = vmatprep.subr.bf16.mxu0 0
  %1411 = vmatpush2.bf16.msra.mxu0 %v1009
  %1412 = vmatprep.subr.bf16.mxu0 0
  %1413 = vmatpush2.bf16.msra.mxu0 %v1008
  %1414 = vmatprep.subr.bf16.mxu0 0
  %1415 = vmatpush2.bf16.msra.mxu0 %v1007
  %1416 = vmatprep.subr.bf16.mxu0 0
  %1417 = vmatpush2.bf16.msra.mxu0 %v1006
  %1418 = vmatprep.subr.bf16.mxu0 0
  %1419 = vmatpush2.bf16.msra.mxu0 %v1005
  %1420 = vmatprep.subr.bf16.mxu0 0
  %1421 = vmatpush2.bf16.msra.mxu0 %v1004
  %1422 = vmatprep.subr.bf16.mxu0 0
  %1423 = vmatpush2.bf16.msra.mxu0 %v1003
  %1424 = vmatprep.subr.bf16.mxu0 0
  %1425 = vmatpush2.bf16.msra.mxu0 %v1002
  %1426 = vmatprep.mubr.bf16.mxu0 %v365
  %1427 = vmatmul.mubr.bf16.gmra.mxu0 %v351
  %v1428 = vpop.f32.mrf.mxu0
  %v1429 = vadd.f32 %v1389, %v1428
  %v1430 = vpop.f32.mrf.mxu0
  %v1431 = vpop.f32.mrf.mxu0
  %v1432 = vpop.f32.mrf.mxu0
  %1433 = vdwg.mxu0
  %1434 = vmatprep.subr.bf16.mxu0 0
  %1435 = vmatpush1.bf16.msra.mxu0 %v1017
  %1436 = vmatprep.subr.bf16.mxu0 0
  %1437 = vmatpush1.bf16.msra.mxu0 %v1016
  %1438 = vmatprep.subr.bf16.mxu0 0
  %1439 = vmatpush1.bf16.msra.mxu0 %v1015
  %1440 = vmatprep.subr.bf16.mxu0 0
  %1441 = vmatpush1.bf16.msra.mxu0 %v1014
  %1442 = vmatprep.subr.bf16.mxu0 0
  %1443 = vmatpush1.bf16.msra.mxu0 %v1013
  %1444 = vmatprep.subr.bf16.mxu0 0
  %1445 = vmatpush1.bf16.msra.mxu0 %v1012
  %1446 = vmatprep.subr.bf16.mxu0 0
  %1447 = vmatpush1.bf16.msra.mxu0 %v1011
  %1448 = vmatprep.subr.bf16.mxu0 0
  %1449 = vmatpush1.bf16.msra.mxu0 %v1010
  %1450 = vmatprep.subr.bf16.mxu0 0
  %1451 = vmatpush2.bf16.msra.mxu0 %v1025
  %1452 = vmatprep.subr.bf16.mxu0 0
  %1453 = vmatpush2.bf16.msra.mxu0 %v1024
  %1454 = vmatprep.subr.bf16.mxu0 0
  %1455 = vmatpush2.bf16.msra.mxu0 %v1023
  %1456 = vmatprep.subr.bf16.mxu0 0
  %1457 = vmatpush2.bf16.msra.mxu0 %v1022
  %1458 = vmatprep.subr.bf16.mxu0 0
  %1459 = vmatpush2.bf16.msra.mxu0 %v1021
  %1460 = vmatprep.subr.bf16.mxu0 0
  %1461 = vmatpush2.bf16.msra.mxu0 %v1020
  %1462 = vmatprep.subr.bf16.mxu0 0
  %1463 = vmatpush2.bf16.msra.mxu0 %v1019
  %1464 = vmatprep.subr.bf16.mxu0 0
  %1465 = vmatpush2.bf16.msra.mxu0 %v1018
  %1466 = vmatprep.mubr.bf16.mxu0 %v369
  %1467 = vmatmul.mubr.bf16.gmra.mxu0 %v367
  %v1468 = vpop.f32.mrf.mxu0
  %v1469 = vadd.f32 %v1429, %v1468
  %v1470 = vpop.f32.mrf.mxu0
  %v1471 = vpop.f32.mrf.mxu0
  %v1472 = vpop.f32.mrf.mxu0
  %1473 = vdwg.mxu0
  %v1474 = vsub.f32 0.0, %v1469
  %v1475 = vmul.f32 %v1474, 1.442695
  %v1476 = vpow.pop %v1475
  %v1477 = vadd.f32 %v1476, 1.0
  %v1478 = vrcp.pop %v1477
  %v1479 = vmul.f32 1.0, %v1478
  %1480 = vst [vmem:[%s2] sm:$0x3] %v1479
  // Predicated region
  $region10: #{discriminator_forward.15} parent=0 // pred_check
    _
  $region11: #{discriminator_forward.15} parent=0 // pred_check_branch
    %1482 = sbr.rel (0) target = $region13
  $region12: #{discriminator_forward.15} parent=0 // pred_region
    _
  $region13: #{discriminator_forward.15} parent=0 // pred_fallthru
    _
  // Predicated region
  $region14: #{discriminator_forward.15} parent=0 // pred_check
    _
  $region15: #{discriminator_forward.15} parent=0 // pred_check_branch
    %1484 = sbr.rel (0) target = $region17
  $region16: #{discriminator_forward.15} parent=0 // pred_region
    _
  $region17: #{discriminator_forward.15} parent=0 // pred_fallthru
    _

</llo_original>
